<compile_context>
chip_gen: v6e
topology: v6e:2x2x1
jax: 0.10.0
libtpu: 0.0.40
codegen_flags: <defaults>
</compile_context>

<pallas_src>
import jax
import jax.numpy as jnp
from jax.experimental import pallas as pl
from jax.experimental.pallas import tpu as pltpu

IN_CHANNELS = 64
FEAT_CHANNELS = 64
OUT_CHANNELS = 64       # out_channels=None -> in_channels
LN_EPS = 1e-5
MAX_TILE_ROWS = 1024


def _layer_norm(x, gamma, beta):
    mu = jnp.mean(x, axis=-1, keepdims=True)
    xc = x - mu
    var = jnp.mean(xc * xc, axis=-1, keepdims=True)
    return xc * jax.lax.rsqrt(var + LN_EPS) * gamma + beta


def kernel_updator_kernel(
    up_ref, inp_ref,
    w_dyn_in_ref, b_dyn_in_ref, w_dyn_out_ref, b_dyn_out_ref,
    w_inp_in_ref, b_inp_in_ref, w_inp_out_ref, b_inp_out_ref,
    w_gates_ref, b_gates_ref,
    ln_input_norm_in_ref, ln_norm_in_ref, ln_norm_out_ref, ln_input_norm_out_ref,
    w_fc_ref, b_fc_ref, ln_fc_ref,
    out_ref,
):
    F = FEAT_CHANNELS
    # bf16 operands -> MXU fast path; accumulation stays f32.
    up = up_ref[...].astype(jnp.bfloat16)
    inp = inp_ref[...].astype(jnp.bfloat16)

    # dynamic_layer / input_layer, weights pre-split into in/out halves so no
    # sub-128-lane slicing of matmul results is needed.
    param_in = jnp.dot(up, w_dyn_in_ref[...],
                       preferred_element_type=jnp.float32) + b_dyn_in_ref[...]
    param_out = jnp.dot(up, w_dyn_out_ref[...],
                        preferred_element_type=jnp.float32) + b_dyn_out_ref[...]
    input_in = jnp.dot(inp, w_inp_in_ref[...],
                       preferred_element_type=jnp.float32) + b_inp_in_ref[...]
    input_out = jnp.dot(inp, w_inp_out_ref[...],
                        preferred_element_type=jnp.float32) + b_inp_out_ref[...]

    gate_feats = input_in * param_in          # f32 elementwise
    # gate_norm_act=False (default): no gate_norm / activation here

    # input_gate / update_gate share the same LHS -> one fused [64,128] matmul.
    gates = jnp.dot(gate_feats.astype(jnp.bfloat16), w_gates_ref[...],
                    preferred_element_type=jnp.float32) + b_gates_ref[...]
    input_gate = _layer_norm(gates[:, :F],
                             ln_input_norm_in_ref[0:1, :], ln_input_norm_in_ref[1:2, :])
    update_gate = _layer_norm(gates[:, F:],
                              ln_norm_in_ref[0:1, :], ln_norm_in_ref[1:2, :])
    # gate_sigmoid=True
    input_gate = jax.nn.sigmoid(input_gate)
    update_gate = jax.nn.sigmoid(update_gate)

    param_out = _layer_norm(param_out, ln_norm_out_ref[0:1, :], ln_norm_out_ref[1:2, :])
    input_out = _layer_norm(input_out, ln_input_norm_out_ref[0:1, :], ln_input_norm_out_ref[1:2, :])
    # activate_out=False (default)

    features = update_gate * param_out + input_gate * input_out
    features = jnp.dot(features.astype(jnp.bfloat16), w_fc_ref[...],
                       preferred_element_type=jnp.float32) + b_fc_ref[...]
    features = _layer_norm(features, ln_fc_ref[0:1, :], ln_fc_ref[1:2, :])
    out_ref[...] = jnp.maximum(features, 0.0)     # ReLU


def _round_up(x, k):
    return ((x + k - 1) // k) * k


def _choose_tm(m, max_tile=MAX_TILE_ROWS):
    """Largest practical row tile; keep >=2 grid steps when possible (v7x 2 TCs)."""
    if m >= 2 * max_tile:
        return max_tile
    if m >= 16:
        return _round_up((m + 1) // 2, 8)
    return _round_up(max(m, 1), 8)


def pack_params(p):
    """Kernel-ready weights: bf16 matmul weights, pre-split dyn/input halves,
    fused gate weights.  Biases / LN params stay f32."""
    F = FEAT_CHANNELS
    bf = lambda w: w.astype(jnp.bfloat16)
    w_gates = jnp.concatenate([p["w_ig"], p["w_ug"]], axis=1)   # [64, 128]
    b_gates = jnp.concatenate([p["b_ig"], p["b_ug"]], axis=1)   # [1, 128]
    return (
        bf(p["w_dyn"][:, :F]), p["b_dyn"][:, :F],
        bf(p["w_dyn"][:, F:]), p["b_dyn"][:, F:],
        bf(p["w_inp"][:, :F]), p["b_inp"][:, :F],
        bf(p["w_inp"][:, F:]), p["b_inp"][:, F:],
        bf(w_gates), b_gates,
        p["ln_input_norm_in"], p["ln_norm_in"],
        p["ln_norm_out"], p["ln_input_norm_out"],
        bf(p["w_fc"]), p["b_fc"], p["ln_fc"],
    )


def kernel_updator(update_feature, input_feature, p):
    bs, n, c = update_feature.shape
    assert c == IN_CHANNELS
    m = bs * n
    up2 = update_feature.reshape(m, c).astype(jnp.float32)
    inp2 = input_feature.reshape(m, c).astype(jnp.float32)

    tm = _choose_tm(m)
    m_pad = _round_up(m, tm)
    if m_pad != m:
        pad = m_pad - m
        up2 = jnp.pad(up2, ((0, pad), (0, 0)))
        inp2 = jnp.pad(inp2, ((0, pad), (0, 0)))

    weight_args = pack_params(p)

    row_spec = pl.BlockSpec((tm, c), lambda i: (i, 0))
    const_specs = [pl.BlockSpec(a.shape, lambda i: (0, 0)) for a in weight_args]

    out2 = pl.pallas_call(
        kernel_updator_kernel,
        out_shape=jax.ShapeDtypeStruct((m_pad, OUT_CHANNELS), jnp.float32),
        grid=(m_pad // tm,),
        in_specs=[row_spec, row_spec] + const_specs,
        out_specs=pl.BlockSpec((tm, OUT_CHANNELS), lambda i: (i, 0)),
        compiler_params=pltpu.CompilerParams(dimension_semantics=("parallel",)),
    )(up2, inp2, *weight_args)
    return out2[:m].reshape(bs, n, OUT_CHANNELS)


def init_params(key):
    C, F, O = IN_CHANNELS, FEAT_CHANNELS, OUT_CHANNELS
    ks = jax.random.split(key, 12)

    def lin(k, fan_in, fan_out):
        bound = 1.0 / (fan_in ** 0.5)
        kw, kb = jax.random.split(k)
        w = jax.random.uniform(kw, (fan_in, fan_out), jnp.float32, -bound, bound)
        b = jax.random.uniform(kb, (1, fan_out), jnp.float32, -bound, bound)
        return w, b

    def ln(k, dim):
        kg, kb = jax.random.split(k)
        gamma = 1.0 + 0.05 * jax.random.normal(kg, (1, dim), jnp.float32)
        beta = 0.05 * jax.random.normal(kb, (1, dim), jnp.float32)
        return jnp.concatenate([gamma, beta], axis=0)   # [2, dim]: row0=gamma, row1=beta

    w_dyn, b_dyn = lin(ks[0], C, 2 * F)
    w_inp, b_inp = lin(ks[1], C, 2 * F)
    w_ig, b_ig = lin(ks[2], F, F)   # Linear(in_channels, feat_channels); consistent since C==F
    w_ug, b_ug = lin(ks[3], F, F)
    w_fc, b_fc = lin(ks[4], F, O)

    return dict(
        w_dyn=w_dyn, b_dyn=b_dyn, w_inp=w_inp, b_inp=b_inp,
        w_ig=w_ig, b_ig=b_ig, w_ug=w_ug, b_ug=b_ug,
        ln_norm_in=ln(ks[5], F), ln_norm_out=ln(ks[6], F),
        ln_input_norm_in=ln(ks[7], F), ln_input_norm_out=ln(ks[8], F),
        w_fc=w_fc, b_fc=b_fc, ln_fc=ln(ks[9], O),
    )


def reference(update_feature, input_feature, p, *, mxu_bf16=True):
    """Pure-JAX mirror of the PyTorch forward (default flags).

    With mxu_bf16=True the matmul operands are cast to bf16 (f32 accumulation),
    mirroring the kernel's MXU precision; with False it is the plain f32 model.
    """
    F = FEAT_CHANNELS

    def mm(x, w):
        if mxu_bf16:
            return jnp.dot(x.astype(jnp.bfloat16), w.astype(jnp.bfloat16),
                           preferred_element_type=jnp.float32)
        return jnp.dot(x, w, preferred_element_type=jnp.float32)

    def ln(x, lnp):
        return _layer_norm(x, lnp[0], lnp[1])

    params = mm(update_feature, p["w_dyn"]) + p["b_dyn"][0]
    param_in = params[..., :F]
    param_out = params[..., -F:]
    input_feats = mm(input_feature, p["w_inp"]) + p["b_inp"][0]
    input_in = input_feats[..., :F]
    input_out = input_feats[..., -F:]
    gate_feats = input_in * param_in
    input_gate = jax.nn.sigmoid(ln(mm(gate_feats, p["w_ig"]) + p["b_ig"][0], p["ln_input_norm_in"]))
    update_gate = jax.nn.sigmoid(ln(mm(gate_feats, p["w_ug"]) + p["b_ug"][0], p["ln_norm_in"]))
    param_out = ln(param_out, p["ln_norm_out"])
    input_out = ln(input_out, p["ln_input_norm_out"])
    features = update_gate * param_out + input_gate * input_out
    features = mm(features, p["w_fc"]) + p["b_fc"][0]
    features = ln(features, p["ln_fc"])
    return jnp.maximum(features, 0.0)


if __name__ == "__main__":
    key = jax.random.PRNGKey(0)
    kp, k1, k2 = jax.random.split(key, 3)
    params = init_params(kp)

    # Small but non-trivial shapes: exercises the padding path (200 -> 208 rows)
    # and a 2-step parallel grid.
    bs, num_proposals = 2, 100
    update_feature = jax.random.normal(k1, (bs, num_proposals, IN_CHANNELS), jnp.float32)
    input_feature = jax.random.normal(k2, (bs, num_proposals, IN_CHANNELS), jnp.float32)

    out = kernel_updator(update_feature, input_feature, params)
    out = jax.block_until_ready(out)

    ref_mixed = reference(update_feature, input_feature, params, mxu_bf16=True)
    ref_f32 = reference(update_feature, input_feature, params, mxu_bf16=False)

    assert out.shape == (bs, num_proposals, OUT_CHANNELS), out.shape
    # Tight check vs. a reference using the same bf16-operand / f32-accumulate matmuls.
    assert jnp.allclose(out, ref_mixed, atol=2e-3, rtol=2e-3), \
        float(jnp.max(jnp.abs(out - ref_mixed)))
    # Loose semantic check vs. the pure-f32 model (bf16 operand rounding only).
    assert jnp.allclose(out, ref_f32, atol=1e-1, rtol=1e-1), \
        float(jnp.max(jnp.abs(out - ref_f32)))
    print("KERNEL_OK")
</pallas_src>

<mosaic_0001>
module attributes {stable_mosaic.version = 11 : i64} {
  func.func @kernel_updator_kernel(%arg0: i32, %arg1: memref<104x64xf32, #tpu.memory_space<vmem>>, %arg2: memref<104x64xf32, #tpu.memory_space<vmem>>, %arg3: memref<64x64xbf16, #tpu.memory_space<vmem>>, %arg4: memref<1x64xf32, #tpu.memory_space<vmem>>, %arg5: memref<64x64xbf16, #tpu.memory_space<vmem>>, %arg6: memref<1x64xf32, #tpu.memory_space<vmem>>, %arg7: memref<64x64xbf16, #tpu.memory_space<vmem>>, %arg8: memref<1x64xf32, #tpu.memory_space<vmem>>, %arg9: memref<64x64xbf16, #tpu.memory_space<vmem>>, %arg10: memref<1x64xf32, #tpu.memory_space<vmem>>, %arg11: memref<64x128xbf16, #tpu.memory_space<vmem>>, %arg12: memref<1x128xf32, #tpu.memory_space<vmem>>, %arg13: memref<2x64xf32, #tpu.memory_space<vmem>>, %arg14: memref<2x64xf32, #tpu.memory_space<vmem>>, %arg15: memref<2x64xf32, #tpu.memory_space<vmem>>, %arg16: memref<2x64xf32, #tpu.memory_space<vmem>>, %arg17: memref<64x64xbf16, #tpu.memory_space<vmem>>, %arg18: memref<1x64xf32, #tpu.memory_space<vmem>>, %arg19: memref<2x64xf32, #tpu.memory_space<vmem>>, %arg20: memref<104x64xf32, #tpu.memory_space<vmem>>) attributes {dimension_semantics = [#tpu.dimension_semantics<parallel>], iteration_bounds = array<i64: 2>, scalar_prefetch = 0 : i64, scratch_operands = 0 : i64, tpu.core_type = #tpu.core_type<tc>, window_params = [{transform_indices = @transform_0, window_bounds = array<i64: 104, 64>}, {transform_indices = @transform_1, window_bounds = array<i64: 104, 64>}, {pipeline_mode = #tpu.pipeline_mode<synchronous>, transform_indices = @transform_2, window_bounds = array<i64: 64, 64>}, {pipeline_mode = #tpu.pipeline_mode<synchronous>, transform_indices = @transform_3, window_bounds = array<i64: 1, 64>}, {pipeline_mode = #tpu.pipeline_mode<synchronous>, transform_indices = @transform_4, window_bounds = array<i64: 64, 64>}, {pipeline_mode = #tpu.pipeline_mode<synchronous>, transform_indices = @transform_5, window_bounds = array<i64: 1, 64>}, {pipeline_mode = #tpu.pipeline_mode<synchronous>, transform_indices = @transform_6, window_bounds = array<i64: 64, 64>}, {pipeline_mode = #tpu.pipeline_mode<synchronous>, transform_indices = @transform_7, window_bounds = array<i64: 1, 64>}, {pipeline_mode = #tpu.pipeline_mode<synchronous>, transform_indices = @transform_8, window_bounds = array<i64: 64, 64>}, {pipeline_mode = #tpu.pipeline_mode<synchronous>, transform_indices = @transform_9, window_bounds = array<i64: 1, 64>}, {pipeline_mode = #tpu.pipeline_mode<synchronous>, transform_indices = @transform_10, window_bounds = array<i64: 64, 128>}, {pipeline_mode = #tpu.pipeline_mode<synchronous>, transform_indices = @transform_11, window_bounds = array<i64: 1, 128>}, {pipeline_mode = #tpu.pipeline_mode<synchronous>, transform_indices = @transform_12, window_bounds = array<i64: 2, 64>}, {pipeline_mode = #tpu.pipeline_mode<synchronous>, transform_indices = @transform_13, window_bounds = array<i64: 2, 64>}, {pipeline_mode = #tpu.pipeline_mode<synchronous>, transform_indices = @transform_14, window_bounds = array<i64: 2, 64>}, {pipeline_mode = #tpu.pipeline_mode<synchronous>, transform_indices = @transform_15, window_bounds = array<i64: 2, 64>}, {pipeline_mode = #tpu.pipeline_mode<synchronous>, transform_indices = @transform_16, window_bounds = array<i64: 64, 64>}, {pipeline_mode = #tpu.pipeline_mode<synchronous>, transform_indices = @transform_17, window_bounds = array<i64: 1, 64>}, {pipeline_mode = #tpu.pipeline_mode<synchronous>, transform_indices = @transform_18, window_bounds = array<i64: 2, 64>}, {transform_indices = @transform_19, window_bounds = array<i64: 104, 64>}]} {
    %c0 = arith.constant 0 : index
    %c0_0 = arith.constant 0 : index
    %0 = vector.load %arg1[%c0, %c0_0] : memref<104x64xf32, #tpu.memory_space<vmem>>, vector<104x64xf32>
    %1 = arith.truncf %0 : vector<104x64xf32> to vector<104x64xbf16>
    %c0_1 = arith.constant 0 : index
    %c0_2 = arith.constant 0 : index
    %2 = vector.load %arg2[%c0_1, %c0_2] : memref<104x64xf32, #tpu.memory_space<vmem>>, vector<104x64xf32>
    %3 = arith.truncf %2 : vector<104x64xf32> to vector<104x64xbf16>
    %c0_3 = arith.constant 0 : index
    %c0_4 = arith.constant 0 : index
    %4 = vector.load %arg3[%c0_3, %c0_4] : memref<64x64xbf16, #tpu.memory_space<vmem>>, vector<64x64xbf16>
    %cst = arith.constant dense<0.000000e+00> : vector<104x64xf32>
    %5 = tpu.matmul %1, %4, %cst {dimension_numbers = #tpu.dot_dimension_numbers<[1], [0], [0], [1], [0, 0, 1, 1], [], []>} : vector<104x64xbf16>, vector<64x64xbf16>, vector<104x64xf32> -> vector<104x64xf32>
    %c0_5 = arith.constant 0 : index
    %c0_6 = arith.constant 0 : index
    %6 = vector.load %arg4[%c0_5, %c0_6] : memref<1x64xf32, #tpu.memory_space<vmem>>, vector<1x64xf32>
    %7 = vector.broadcast %6 : vector<1x64xf32> to vector<104x64xf32>
    %8 = arith.addf %5, %7 : vector<104x64xf32>
    %c0_7 = arith.constant 0 : index
    %c0_8 = arith.constant 0 : index
    %9 = vector.load %arg5[%c0_7, %c0_8] : memref<64x64xbf16, #tpu.memory_space<vmem>>, vector<64x64xbf16>
    %cst_9 = arith.constant dense<0.000000e+00> : vector<104x64xf32>
    %10 = tpu.matmul %1, %9, %cst_9 {dimension_numbers = #tpu.dot_dimension_numbers<[1], [0], [0], [1], [0, 0, 1, 1], [], []>} : vector<104x64xbf16>, vector<64x64xbf16>, vector<104x64xf32> -> vector<104x64xf32>
    %c0_10 = arith.constant 0 : index
    %c0_11 = arith.constant 0 : index
    %11 = vector.load %arg6[%c0_10, %c0_11] : memref<1x64xf32, #tpu.memory_space<vmem>>, vector<1x64xf32>
    %12 = vector.broadcast %11 : vector<1x64xf32> to vector<104x64xf32>
    %13 = arith.addf %10, %12 : vector<104x64xf32>
    %c0_12 = arith.constant 0 : index
    %c0_13 = arith.constant 0 : index
    %14 = vector.load %arg7[%c0_12, %c0_13] : memref<64x64xbf16, #tpu.memory_space<vmem>>, vector<64x64xbf16>
    %cst_14 = arith.constant dense<0.000000e+00> : vector<104x64xf32>
    %15 = tpu.matmul %3, %14, %cst_14 {dimension_numbers = #tpu.dot_dimension_numbers<[1], [0], [0], [1], [0, 0, 1, 1], [], []>} : vector<104x64xbf16>, vector<64x64xbf16>, vector<104x64xf32> -> vector<104x64xf32>
    %c0_15 = arith.constant 0 : index
    %c0_16 = arith.constant 0 : index
    %16 = vector.load %arg8[%c0_15, %c0_16] : memref<1x64xf32, #tpu.memory_space<vmem>>, vector<1x64xf32>
    %17 = vector.broadcast %16 : vector<1x64xf32> to vector<104x64xf32>
    %18 = arith.addf %15, %17 : vector<104x64xf32>
    %c0_17 = arith.constant 0 : index
    %c0_18 = arith.constant 0 : index
    %19 = vector.load %arg9[%c0_17, %c0_18] : memref<64x64xbf16, #tpu.memory_space<vmem>>, vector<64x64xbf16>
    %cst_19 = arith.constant dense<0.000000e+00> : vector<104x64xf32>
    %20 = tpu.matmul %3, %19, %cst_19 {dimension_numbers = #tpu.dot_dimension_numbers<[1], [0], [0], [1], [0, 0, 1, 1], [], []>} : vector<104x64xbf16>, vector<64x64xbf16>, vector<104x64xf32> -> vector<104x64xf32>
    %c0_20 = arith.constant 0 : index
    %c0_21 = arith.constant 0 : index
    %21 = vector.load %arg10[%c0_20, %c0_21] : memref<1x64xf32, #tpu.memory_space<vmem>>, vector<1x64xf32>
    %22 = vector.broadcast %21 : vector<1x64xf32> to vector<104x64xf32>
    %23 = arith.addf %20, %22 : vector<104x64xf32>
    %24 = arith.mulf %18, %8 : vector<104x64xf32>
    %25 = arith.truncf %24 : vector<104x64xf32> to vector<104x64xbf16>
    %c0_22 = arith.constant 0 : index
    %c0_23 = arith.constant 0 : index
    %26 = vector.load %arg11[%c0_22, %c0_23] : memref<64x128xbf16, #tpu.memory_space<vmem>>, vector<64x128xbf16>
    %cst_24 = arith.constant dense<0.000000e+00> : vector<104x128xf32>
    %27 = tpu.matmul %25, %26, %cst_24 {dimension_numbers = #tpu.dot_dimension_numbers<[1], [0], [0], [1], [0, 0, 1, 1], [], []>} : vector<104x64xbf16>, vector<64x128xbf16>, vector<104x128xf32> -> vector<104x128xf32>
    %c0_25 = arith.constant 0 : index
    %c0_26 = arith.constant 0 : index
    %28 = vector.load %arg12[%c0_25, %c0_26] : memref<1x128xf32, #tpu.memory_space<vmem>>, vector<1x128xf32>
    %29 = vector.broadcast %28 : vector<1x128xf32> to vector<104x128xf32>
    %30 = arith.addf %27, %29 : vector<104x128xf32>
    %31 = vector.extract_strided_slice %30 {offsets = [0, 0], sizes = [104, 64], strides = [1, 1]} : vector<104x128xf32> to vector<104x64xf32>
    %c0_27 = arith.constant 0 : index
    %c0_28 = arith.constant 0 : index
    %32 = vector.load %arg13[%c0_27, %c0_28] : memref<2x64xf32, #tpu.memory_space<vmem>>, vector<1x64xf32>
    %c1 = arith.constant 1 : index
    %c0_29 = arith.constant 0 : index
    %33 = vector.load %arg13[%c1, %c0_29] : memref<2x64xf32, #tpu.memory_space<vmem>>, vector<1x64xf32>
    %cst_30 = arith.constant dense<0.000000e+00> : vector<104xf32>
    %34 = vector.multi_reduction <add>, %31, %cst_30 [1] : vector<104x64xf32> to vector<104xf32>
    %35 = vector.shape_cast %34 : vector<104xf32> to vector<104x1xf32>
    %cst_31 = arith.constant 6.400000e+01 : f32
    %36 = vector.broadcast %cst_31 : f32 to vector<104x1xf32>
    %37 = arith.divf %35, %36 : vector<104x1xf32>
    %38 = vector.broadcast %37 : vector<104x1xf32> to vector<104x64xf32>
    %39 = arith.subf %31, %38 : vector<104x64xf32>
    %40 = arith.mulf %39, %39 : vector<104x64xf32>
    %cst_32 = arith.constant dense<0.000000e+00> : vector<104xf32>
    %41 = vector.multi_reduction <add>, %40, %cst_32 [1] : vector<104x64xf32> to vector<104xf32>
    %42 = vector.shape_cast %41 : vector<104xf32> to vector<104x1xf32>
    %cst_33 = arith.constant 6.400000e+01 : f32
    %43 = vector.broadcast %cst_33 : f32 to vector<104x1xf32>
    %44 = arith.divf %42, %43 : vector<104x1xf32>
    %cst_34 = arith.constant 9.99999974E-6 : f32
    %45 = vector.broadcast %cst_34 : f32 to vector<104x1xf32>
    %46 = arith.addf %44, %45 : vector<104x1xf32>
    %47 = math.rsqrt %46 : vector<104x1xf32>
    %48 = vector.broadcast %47 : vector<104x1xf32> to vector<104x64xf32>
    %49 = arith.mulf %39, %48 : vector<104x64xf32>
    %50 = vector.broadcast %32 : vector<1x64xf32> to vector<104x64xf32>
    %51 = arith.mulf %49, %50 : vector<104x64xf32>
    %52 = vector.broadcast %33 : vector<1x64xf32> to vector<104x64xf32>
    %53 = arith.addf %51, %52 : vector<104x64xf32>
    %54 = vector.extract_strided_slice %30 {offsets = [0, 64], sizes = [104, 64], strides = [1, 1]} : vector<104x128xf32> to vector<104x64xf32>
    %c0_35 = arith.constant 0 : index
    %c0_36 = arith.constant 0 : index
    %55 = vector.load %arg14[%c0_35, %c0_36] : memref<2x64xf32, #tpu.memory_space<vmem>>, vector<1x64xf32>
    %c1_37 = arith.constant 1 : index
    %c0_38 = arith.constant 0 : index
    %56 = vector.load %arg14[%c1_37, %c0_38] : memref<2x64xf32, #tpu.memory_space<vmem>>, vector<1x64xf32>
    %cst_39 = arith.constant dense<0.000000e+00> : vector<104xf32>
    %57 = vector.multi_reduction <add>, %54, %cst_39 [1] : vector<104x64xf32> to vector<104xf32>
    %58 = vector.shape_cast %57 : vector<104xf32> to vector<104x1xf32>
    %cst_40 = arith.constant 6.400000e+01 : f32
    %59 = vector.broadcast %cst_40 : f32 to vector<104x1xf32>
    %60 = arith.divf %58, %59 : vector<104x1xf32>
    %61 = vector.broadcast %60 : vector<104x1xf32> to vector<104x64xf32>
    %62 = arith.subf %54, %61 : vector<104x64xf32>
    %63 = arith.mulf %62, %62 : vector<104x64xf32>
    %cst_41 = arith.constant dense<0.000000e+00> : vector<104xf32>
    %64 = vector.multi_reduction <add>, %63, %cst_41 [1] : vector<104x64xf32> to vector<104xf32>
    %65 = vector.shape_cast %64 : vector<104xf32> to vector<104x1xf32>
    %cst_42 = arith.constant 6.400000e+01 : f32
    %66 = vector.broadcast %cst_42 : f32 to vector<104x1xf32>
    %67 = arith.divf %65, %66 : vector<104x1xf32>
    %cst_43 = arith.constant 9.99999974E-6 : f32
    %68 = vector.broadcast %cst_43 : f32 to vector<104x1xf32>
    %69 = arith.addf %67, %68 : vector<104x1xf32>
    %70 = math.rsqrt %69 : vector<104x1xf32>
    %71 = vector.broadcast %70 : vector<104x1xf32> to vector<104x64xf32>
    %72 = arith.mulf %62, %71 : vector<104x64xf32>
    %73 = vector.broadcast %55 : vector<1x64xf32> to vector<104x64xf32>
    %74 = arith.mulf %72, %73 : vector<104x64xf32>
    %75 = vector.broadcast %56 : vector<1x64xf32> to vector<104x64xf32>
    %76 = arith.addf %74, %75 : vector<104x64xf32>
    %77 = arith.negf %53 : vector<104x64xf32>
    %78 = math.exp %77 : vector<104x64xf32>
    %cst_44 = arith.constant 1.000000e+00 : f32
    %79 = vector.broadcast %cst_44 : f32 to vector<104x64xf32>
    %80 = arith.addf %79, %78 : vector<104x64xf32>
    %81 = arith.divf %79, %80 : vector<104x64xf32>
    %82 = arith.negf %76 : vector<104x64xf32>
    %83 = math.exp %82 : vector<104x64xf32>
    %cst_45 = arith.constant 1.000000e+00 : f32
    %84 = vector.broadcast %cst_45 : f32 to vector<104x64xf32>
    %85 = arith.addf %84, %83 : vector<104x64xf32>
    %86 = arith.divf %84, %85 : vector<104x64xf32>
    %c0_46 = arith.constant 0 : index
    %c0_47 = arith.constant 0 : index
    %87 = vector.load %arg15[%c0_46, %c0_47] : memref<2x64xf32, #tpu.memory_space<vmem>>, vector<1x64xf32>
    %c1_48 = arith.constant 1 : index
    %c0_49 = arith.constant 0 : index
    %88 = vector.load %arg15[%c1_48, %c0_49] : memref<2x64xf32, #tpu.memory_space<vmem>>, vector<1x64xf32>
    %cst_50 = arith.constant dense<0.000000e+00> : vector<104xf32>
    %89 = vector.multi_reduction <add>, %13, %cst_50 [1] : vector<104x64xf32> to vector<104xf32>
    %90 = vector.shape_cast %89 : vector<104xf32> to vector<104x1xf32>
    %cst_51 = arith.constant 6.400000e+01 : f32
    %91 = vector.broadcast %cst_51 : f32 to vector<104x1xf32>
    %92 = arith.divf %90, %91 : vector<104x1xf32>
    %93 = vector.broadcast %92 : vector<104x1xf32> to vector<104x64xf32>
    %94 = arith.subf %13, %93 : vector<104x64xf32>
    %95 = arith.mulf %94, %94 : vector<104x64xf32>
    %cst_52 = arith.constant dense<0.000000e+00> : vector<104xf32>
    %96 = vector.multi_reduction <add>, %95, %cst_52 [1] : vector<104x64xf32> to vector<104xf32>
    %97 = vector.shape_cast %96 : vector<104xf32> to vector<104x1xf32>
    %cst_53 = arith.constant 6.400000e+01 : f32
    %98 = vector.broadcast %cst_53 : f32 to vector<104x1xf32>
    %99 = arith.divf %97, %98 : vector<104x1xf32>
    %cst_54 = arith.constant 9.99999974E-6 : f32
    %100 = vector.broadcast %cst_54 : f32 to vector<104x1xf32>
    %101 = arith.addf %99, %100 : vector<104x1xf32>
    %102 = math.rsqrt %101 : vector<104x1xf32>
    %103 = vector.broadcast %102 : vector<104x1xf32> to vector<104x64xf32>
    %104 = arith.mulf %94, %103 : vector<104x64xf32>
    %105 = vector.broadcast %87 : vector<1x64xf32> to vector<104x64xf32>
    %106 = arith.mulf %104, %105 : vector<104x64xf32>
    %107 = vector.broadcast %88 : vector<1x64xf32> to vector<104x64xf32>
    %108 = arith.addf %106, %107 : vector<104x64xf32>
    %c0_55 = arith.constant 0 : index
    %c0_56 = arith.constant 0 : index
    %109 = vector.load %arg16[%c0_55, %c0_56] : memref<2x64xf32, #tpu.memory_space<vmem>>, vector<1x64xf32>
    %c1_57 = arith.constant 1 : index
    %c0_58 = arith.constant 0 : index
    %110 = vector.load %arg16[%c1_57, %c0_58] : memref<2x64xf32, #tpu.memory_space<vmem>>, vector<1x64xf32>
    %cst_59 = arith.constant dense<0.000000e+00> : vector<104xf32>
    %111 = vector.multi_reduction <add>, %23, %cst_59 [1] : vector<104x64xf32> to vector<104xf32>
    %112 = vector.shape_cast %111 : vector<104xf32> to vector<104x1xf32>
    %cst_60 = arith.constant 6.400000e+01 : f32
    %113 = vector.broadcast %cst_60 : f32 to vector<104x1xf32>
    %114 = arith.divf %112, %113 : vector<104x1xf32>
    %115 = vector.broadcast %114 : vector<104x1xf32> to vector<104x64xf32>
    %116 = arith.subf %23, %115 : vector<104x64xf32>
    %117 = arith.mulf %116, %116 : vector<104x64xf32>
    %cst_61 = arith.constant dense<0.000000e+00> : vector<104xf32>
    %118 = vector.multi_reduction <add>, %117, %cst_61 [1] : vector<104x64xf32> to vector<104xf32>
    %119 = vector.shape_cast %118 : vector<104xf32> to vector<104x1xf32>
    %cst_62 = arith.constant 6.400000e+01 : f32
    %120 = vector.broadcast %cst_62 : f32 to vector<104x1xf32>
    %121 = arith.divf %119, %120 : vector<104x1xf32>
    %cst_63 = arith.constant 9.99999974E-6 : f32
    %122 = vector.broadcast %cst_63 : f32 to vector<104x1xf32>
    %123 = arith.addf %121, %122 : vector<104x1xf32>
    %124 = math.rsqrt %123 : vector<104x1xf32>
    %125 = vector.broadcast %124 : vector<104x1xf32> to vector<104x64xf32>
    %126 = arith.mulf %116, %125 : vector<104x64xf32>
    %127 = vector.broadcast %109 : vector<1x64xf32> to vector<104x64xf32>
    %128 = arith.mulf %126, %127 : vector<104x64xf32>
    %129 = vector.broadcast %110 : vector<1x64xf32> to vector<104x64xf32>
    %130 = arith.addf %128, %129 : vector<104x64xf32>
    %131 = arith.mulf %86, %108 : vector<104x64xf32>
    %132 = arith.mulf %81, %130 : vector<104x64xf32>
    %133 = arith.addf %131, %132 : vector<104x64xf32>
    %134 = arith.truncf %133 : vector<104x64xf32> to vector<104x64xbf16>
    %c0_64 = arith.constant 0 : index
    %c0_65 = arith.constant 0 : index
    %135 = vector.load %arg17[%c0_64, %c0_65] : memref<64x64xbf16, #tpu.memory_space<vmem>>, vector<64x64xbf16>
    %cst_66 = arith.constant dense<0.000000e+00> : vector<104x64xf32>
    %136 = tpu.matmul %134, %135, %cst_66 {dimension_numbers = #tpu.dot_dimension_numbers<[1], [0], [0], [1], [0, 0, 1, 1], [], []>} : vector<104x64xbf16>, vector<64x64xbf16>, vector<104x64xf32> -> vector<104x64xf32>
    %c0_67 = arith.constant 0 : index
    %c0_68 = arith.constant 0 : index
    %137 = vector.load %arg18[%c0_67, %c0_68] : memref<1x64xf32, #tpu.memory_space<vmem>>, vector<1x64xf32>
    %138 = vector.broadcast %137 : vector<1x64xf32> to vector<104x64xf32>
    %139 = arith.addf %136, %138 : vector<104x64xf32>
    %c0_69 = arith.constant 0 : index
    %c0_70 = arith.constant 0 : index
    %140 = vector.load %arg19[%c0_69, %c0_70] : memref<2x64xf32, #tpu.memory_space<vmem>>, vector<1x64xf32>
    %c1_71 = arith.constant 1 : index
    %c0_72 = arith.constant 0 : index
    %141 = vector.load %arg19[%c1_71, %c0_72] : memref<2x64xf32, #tpu.memory_space<vmem>>, vector<1x64xf32>
    %cst_73 = arith.constant dense<0.000000e+00> : vector<104xf32>
    %142 = vector.multi_reduction <add>, %139, %cst_73 [1] : vector<104x64xf32> to vector<104xf32>
    %143 = vector.shape_cast %142 : vector<104xf32> to vector<104x1xf32>
    %cst_74 = arith.constant 6.400000e+01 : f32
    %144 = vector.broadcast %cst_74 : f32 to vector<104x1xf32>
    %145 = arith.divf %143, %144 : vector<104x1xf32>
    %146 = vector.broadcast %145 : vector<104x1xf32> to vector<104x64xf32>
    %147 = arith.subf %139, %146 : vector<104x64xf32>
    %148 = arith.mulf %147, %147 : vector<104x64xf32>
    %cst_75 = arith.constant dense<0.000000e+00> : vector<104xf32>
    %149 = vector.multi_reduction <add>, %148, %cst_75 [1] : vector<104x64xf32> to vector<104xf32>
    %150 = vector.shape_cast %149 : vector<104xf32> to vector<104x1xf32>
    %cst_76 = arith.constant 6.400000e+01 : f32
    %151 = vector.broadcast %cst_76 : f32 to vector<104x1xf32>
    %152 = arith.divf %150, %151 : vector<104x1xf32>
    %cst_77 = arith.constant 9.99999974E-6 : f32
    %153 = vector.broadcast %cst_77 : f32 to vector<104x1xf32>
    %154 = arith.addf %152, %153 : vector<104x1xf32>
    %155 = math.rsqrt %154 : vector<104x1xf32>
    %156 = vector.broadcast %155 : vector<104x1xf32> to vector<104x64xf32>
    %157 = arith.mulf %147, %156 : vector<104x64xf32>
    %158 = vector.broadcast %140 : vector<1x64xf32> to vector<104x64xf32>
    %159 = arith.mulf %157, %158 : vector<104x64xf32>
    %160 = vector.broadcast %141 : vector<1x64xf32> to vector<104x64xf32>
    %161 = arith.addf %159, %160 : vector<104x64xf32>
    %cst_78 = arith.constant 0.000000e+00 : f32
    %162 = vector.broadcast %cst_78 : f32 to vector<104x64xf32>
    %163 = arith.maximumf %161, %162 : vector<104x64xf32>
    %c0_79 = arith.constant 0 : index
    %c0_80 = arith.constant 0 : index
    %164 = vector.load %arg20[%c0_79, %c0_80] : memref<104x64xf32, #tpu.memory_space<vmem>>, vector<104x64xf32>
    tpu.vector_store %arg20[%c0_79, %c0_80], %163 {strides = array<i32>} : memref<104x64xf32, #tpu.memory_space<vmem>>, vector<104x64xf32>,
    return
  }
  func.func @transform_0(%arg0: i32) -> (i32, i32) {
    %c0_i32 = arith.constant 0 : i32
    %c0_i32_0 = arith.constant 0 : i32
    return %arg0, %c0_i32 : i32, i32
  }
  func.func @transform_1(%arg0: i32) -> (i32, i32) {
    %c0_i32 = arith.constant 0 : i32
    %c0_i32_0 = arith.constant 0 : i32
    return %arg0, %c0_i32 : i32, i32
  }
  func.func @transform_2(%arg0: i32) -> (i32, i32) {
    %c0_i32 = arith.constant 0 : i32
    %c0_i32_0 = arith.constant 0 : i32
    %c0_i32_1 = arith.constant 0 : i32
    return %c0_i32, %c0_i32_0 : i32, i32
  }
  func.func @transform_3(%arg0: i32) -> (i32, i32) {
    %c0_i32 = arith.constant 0 : i32
    %c0_i32_0 = arith.constant 0 : i32
    %c0_i32_1 = arith.constant 0 : i32
    return %c0_i32, %c0_i32_0 : i32, i32
  }
  func.func @transform_4(%arg0: i32) -> (i32, i32) {
    %c0_i32 = arith.constant 0 : i32
    %c0_i32_0 = arith.constant 0 : i32
    %c0_i32_1 = arith.constant 0 : i32
    return %c0_i32, %c0_i32_0 : i32, i32
  }
  func.func @transform_5(%arg0: i32) -> (i32, i32) {
    %c0_i32 = arith.constant 0 : i32
    %c0_i32_0 = arith.constant 0 : i32
    %c0_i32_1 = arith.constant 0 : i32
    return %c0_i32, %c0_i32_0 : i32, i32
  }
  func.func @transform_6(%arg0: i32) -> (i32, i32) {
    %c0_i32 = arith.constant 0 : i32
    %c0_i32_0 = arith.constant 0 : i32
    %c0_i32_1 = arith.constant 0 : i32
    return %c0_i32, %c0_i32_0 : i32, i32
  }
  func.func @transform_7(%arg0: i32) -> (i32, i32) {
    %c0_i32 = arith.constant 0 : i32
    %c0_i32_0 = arith.constant 0 : i32
    %c0_i32_1 = arith.constant 0 : i32
    return %c0_i32, %c0_i32_0 : i32, i32
  }
  func.func @transform_8(%arg0: i32) -> (i32, i32) {
    %c0_i32 = arith.constant 0 : i32
    %c0_i32_0 = arith.constant 0 : i32
    %c0_i32_1 = arith.constant 0 : i32
    return %c0_i32, %c0_i32_0 : i32, i32
  }
  func.func @transform_9(%arg0: i32) -> (i32, i32) {
    %c0_i32 = arith.constant 0 : i32
    %c0_i32_0 = arith.constant 0 : i32
    %c0_i32_1 = arith.constant 0 : i32
    return %c0_i32, %c0_i32_0 : i32, i32
  }
  func.func @transform_10(%arg0: i32) -> (i32, i32) {
    %c0_i32 = arith.constant 0 : i32
    %c0_i32_0 = arith.constant 0 : i32
    %c0_i32_1 = arith.constant 0 : i32
    return %c0_i32, %c0_i32_0 : i32, i32
  }
  func.func @transform_11(%arg0: i32) -> (i32, i32) {
    %c0_i32 = arith.constant 0 : i32
    %c0_i32_0 = arith.constant 0 : i32
    %c0_i32_1 = arith.constant 0 : i32
    return %c0_i32, %c0_i32_0 : i32, i32
  }
  func.func @transform_12(%arg0: i32) -> (i32, i32) {
    %c0_i32 = arith.constant 0 : i32
    %c0_i32_0 = arith.constant 0 : i32
    %c0_i32_1 = arith.constant 0 : i32
    return %c0_i32, %c0_i32_0 : i32, i32
  }
  func.func @transform_13(%arg0: i32) -> (i32, i32) {
    %c0_i32 = arith.constant 0 : i32
    %c0_i32_0 = arith.constant 0 : i32
    %c0_i32_1 = arith.constant 0 : i32
    return %c0_i32, %c0_i32_0 : i32, i32
  }
  func.func @transform_14(%arg0: i32) -> (i32, i32) {
    %c0_i32 = arith.constant 0 : i32
    %c0_i32_0 = arith.constant 0 : i32
    %c0_i32_1 = arith.constant 0 : i32
    return %c0_i32, %c0_i32_0 : i32, i32
  }
  func.func @transform_15(%arg0: i32) -> (i32, i32) {
    %c0_i32 = arith.constant 0 : i32
    %c0_i32_0 = arith.constant 0 : i32
    %c0_i32_1 = arith.constant 0 : i32
    return %c0_i32, %c0_i32_0 : i32, i32
  }
  func.func @transform_16(%arg0: i32) -> (i32, i32) {
    %c0_i32 = arith.constant 0 : i32
    %c0_i32_0 = arith.constant 0 : i32
    %c0_i32_1 = arith.constant 0 : i32
    return %c0_i32, %c0_i32_0 : i32, i32
  }
  func.func @transform_17(%arg0: i32) -> (i32, i32) {
    %c0_i32 = arith.constant 0 : i32
    %c0_i32_0 = arith.constant 0 : i32
    %c0_i32_1 = arith.constant 0 : i32
    return %c0_i32, %c0_i32_0 : i32, i32
  }
  func.func @transform_18(%arg0: i32) -> (i32, i32) {
    %c0_i32 = arith.constant 0 : i32
    %c0_i32_0 = arith.constant 0 : i32
    %c0_i32_1 = arith.constant 0 : i32
    return %c0_i32, %c0_i32_0 : i32, i32
  }
  func.func @transform_19(%arg0: i32) -> (i32, i32) {
    %c0_i32 = arith.constant 0 : i32
    %c0_i32_0 = arith.constant 0 : i32
    return %arg0, %c0_i32 : i32, i32
  }
}

</mosaic_0001>

<llo_original>
// kernel: tpu_custom_call.1
$region0: #{tpu_custom_call.1}
  #allocation0 [shape = 'u32[]', space=smem, size = 0x4, offset = 0x4, fixed_abs, tag = 'smem constant byte address 0x4 - core index']
  #allocation1 [shape = 'u32[144,128]{1,0:T(1,128)}', space=vmem, size = 0x12000, scoped, tag = 'internal scratch']
  %s0 = inlined_call_operand.vmem [shape: f32[208,64], index: 0, kind: input, shape index: {}]
  %s1 = inlined_call_operand.vmem [shape: f32[208,64], index: 1, kind: input, shape index: {}]
  %s2 = inlined_call_operand.vmem [shape: bf16[64,64], index: 2, kind: input, shape index: {}]
  %s3 = inlined_call_operand.vmem [shape: f32[1,64], index: 3, kind: input, shape index: {}]
  %s4 = inlined_call_operand.vmem [shape: bf16[64,64], index: 4, kind: input, shape index: {}]
  %s5 = inlined_call_operand.vmem [shape: f32[1,64], index: 5, kind: input, shape index: {}]
  %s6 = inlined_call_operand.vmem [shape: bf16[64,64], index: 6, kind: input, shape index: {}]
  %s7 = inlined_call_operand.vmem [shape: f32[1,64], index: 7, kind: input, shape index: {}]
  %s8 = inlined_call_operand.vmem [shape: bf16[64,64], index: 8, kind: input, shape index: {}]
  %s9 = inlined_call_operand.vmem [shape: f32[1,64], index: 9, kind: input, shape index: {}]
  %s10 = inlined_call_operand.vmem [shape: bf16[64,128], index: 10, kind: input, shape index: {}]
  %s11 = inlined_call_operand.vmem [shape: f32[1,128], index: 11, kind: input, shape index: {}]
  %s12 = inlined_call_operand.vmem [shape: f32[2,64], index: 12, kind: input, shape index: {}]
  %s13 = inlined_call_operand.vmem [shape: f32[2,64], index: 13, kind: input, shape index: {}]
  %s14 = inlined_call_operand.vmem [shape: f32[2,64], index: 14, kind: input, shape index: {}]
  %s15 = inlined_call_operand.vmem [shape: f32[2,64], index: 15, kind: input, shape index: {}]
  %s16 = inlined_call_operand.vmem [shape: bf16[64,64], index: 16, kind: input, shape index: {}]
  %s17 = inlined_call_operand.vmem [shape: f32[1,64], index: 17, kind: input, shape index: {}]
  %s18 = inlined_call_operand.vmem [shape: f32[2,64], index: 18, kind: input, shape index: {}]
  %s19 = inlined_call_operand.vmem [shape: f32[208,64], index: 19, kind: output, shape index: {}]
  %s20 = sld [smem:[#allocation0]]
  $region109: #{tpu_custom_call.1} parent=0
    _
  %s22 = ssub.s32 1, %s20
  %s23 = scalar_select 0, %s22, %s20
  loop: start=0, step=1, limit=4
  $region2: #{tpu_custom_call.1} parent=0 // loop_pre_header
    _
  $region3: #{tpu_custom_call.1} parent=0 // loop_header
    %s25 = sphi 0, %s29
    %p26 = scmp.ge.s32.totalorder %s25, 4
    %s35 = sphi 0, %s37
    %s38 = sphi 0, %s35
    %s39 = sphi 0, %s38
    %s55 = sphi 0, %s39
    %s61 = sphi 0, %s63
    %s64 = sphi 0, %s61
    %s65 = sphi 0, %s64
    %s81 = sphi 0, %s65
    %s85 = sphi 0, %s85
    %s87 = sphi 0, %s85
    %s88 = sphi 0, %s87
    %s102 = sphi 0, %s88
    %s106 = sphi 0, %s106
    %s108 = sphi 0, %s106
    %s109 = sphi 0, %s108
    %s123 = sphi 0, %s109
    %s127 = sphi 0, %s127
    %s129 = sphi 0, %s127
    %s130 = sphi 0, %s129
    %s144 = sphi 0, %s130
    %s148 = sphi 0, %s148
    %s150 = sphi 0, %s148
    %s151 = sphi 0, %s150
    %s165 = sphi 0, %s151
    %s169 = sphi 0, %s169
    %s171 = sphi 0, %s169
    %s172 = sphi 0, %s171
    %s186 = sphi 0, %s172
    %s190 = sphi 0, %s190
    %s192 = sphi 0, %s190
    %s193 = sphi 0, %s192
    %s207 = sphi 0, %s193
    %s211 = sphi 0, %s211
    %s213 = sphi 0, %s211
    %s214 = sphi 0, %s213
    %s228 = sphi 0, %s214
    %s232 = sphi 0, %s232
    %s234 = sphi 0, %s232
    %s235 = sphi 0, %s234
    %s249 = sphi 0, %s235
    %s253 = sphi 0, %s253
    %s255 = sphi 0, %s253
    %s256 = sphi 0, %s255
    %s270 = sphi 0, %s256
    %s274 = sphi 0, %s274
    %s276 = sphi 0, %s274
    %s277 = sphi 0, %s276
    %s291 = sphi 0, %s277
    %s295 = sphi 0, %s295
    %s297 = sphi 0, %s295
    %s298 = sphi 0, %s297
    %s312 = sphi 0, %s298
    %s316 = sphi 0, %s316
    %s318 = sphi 0, %s316
    %s319 = sphi 0, %s318
    %s333 = sphi 0, %s319
    %s337 = sphi 0, %s337
    %s339 = sphi 0, %s337
    %s340 = sphi 0, %s339
    %s354 = sphi 0, %s340
    %s358 = sphi 0, %s358
    %s360 = sphi 0, %s358
    %s361 = sphi 0, %s360
    %s375 = sphi 0, %s361
    %s379 = sphi 0, %s379
    %s381 = sphi 0, %s379
    %s382 = sphi 0, %s381
    %s396 = sphi 0, %s382
    %s400 = sphi 0, %s400
    %s402 = sphi 0, %s400
    %s403 = sphi 0, %s402
    %s417 = sphi 0, %s403
    %s421 = sphi 0, %s421
    %s423 = sphi 0, %s421
    %s424 = sphi 0, %s423
    %s438 = sphi 0, %s424
    %s444 = sphi 0, %s446
    %s447 = sphi 0, %s444
    %s448 = sphi 0, %s447
    %s464 = sphi 0, %s448
  $region4: #{tpu_custom_call.1} parent=0 // loop_header_branch
    %28 = sbr.rel (%p26) target = $region8
  $region5: #{tpu_custom_call.1} parent=0 // loop_body
    %s30 = ssub.s32 %s25, 1
    %s31 = ssub.s32 %s25, 2
    %s32 = sadd.s32 %s25, 1
    %s33 = ssub.s32 %s25, %s32
    %p34 = scmp.eq.s32.totalorder %s33, 0
    %s36 = sadd.s32 %s35, 1
    %s37 = scalar_select %p34, %s35, %s36
    %p40 = pneg %p34
    %p41 = scmp.eq.s32.totalorder %s25, 1
    %p42 = por %p40, %p41
    %p43 = scmp.ne.s32.totalorder %s35, %s38
    %p44 = scmp.eq.s32.totalorder %s25, 0
    %p45 = por %p43, %p44
    %p46 = scmp.ne.s32.totalorder %s35, %s38
    %p47 = scmp.eq.s32.totalorder %s30, 1
    %p48 = por %p46, %p47
    %p49 = scmp.ne.s32.totalorder %s38, %s39
    %p50 = scmp.eq.s32.totalorder %s30, 0
    %p51 = por %p49, %p50
    %p52 = scmp.ne.s32.totalorder %s38, %s39
    %p53 = scmp.eq.s32.totalorder %s31, 1
    %p54 = por %p52, %p53
    %p56 = scmp.ne.s32.totalorder %s39, %s55
    %p57 = scmp.eq.s32.totalorder %s31, 0
    %p58 = por %p56, %p57
    %s59 = ssub.s32 %s25, %s32
    %p60 = scmp.eq.s32.totalorder %s59, 0
    %s62 = sadd.s32 %s61, 1
    %s63 = scalar_select %p60, %s61, %s62
    %p66 = pneg %p60
    %p67 = scmp.eq.s32.totalorder %s25, 1
    %p68 = por %p66, %p67
    %p69 = scmp.ne.s32.totalorder %s61, %s64
    %p70 = scmp.eq.s32.totalorder %s25, 0
    %p71 = por %p69, %p70
    %p72 = scmp.ne.s32.totalorder %s61, %s64
    %p73 = scmp.eq.s32.totalorder %s30, 1
    %p74 = por %p72, %p73
    %p75 = scmp.ne.s32.totalorder %s64, %s65
    %p76 = scmp.eq.s32.totalorder %s30, 0
    %p77 = por %p75, %p76
    %p78 = scmp.ne.s32.totalorder %s64, %s65
    %p79 = scmp.eq.s32.totalorder %s31, 1
    %p80 = por %p78, %p79
    %p82 = scmp.ne.s32.totalorder %s65, %s81
    %p83 = scmp.eq.s32.totalorder %s31, 0
    %p84 = por %p82, %p83
    %s86 = sadd.s32 %s85, 1
    %p89 = scmp.eq.s32.totalorder %s25, 1
    %p90 = scmp.ne.s32.totalorder %s85, %s87
    %p91 = scmp.eq.s32.totalorder %s25, 0
    %p92 = por %p90, %p91
    %p93 = scmp.ne.s32.totalorder %s85, %s87
    %p94 = scmp.eq.s32.totalorder %s30, 1
    %p95 = por %p93, %p94
    %p96 = scmp.ne.s32.totalorder %s87, %s88
    %p97 = scmp.eq.s32.totalorder %s30, 0
    %p98 = por %p96, %p97
    %p99 = scmp.ne.s32.totalorder %s87, %s88
    %p100 = scmp.eq.s32.totalorder %s31, 1
    %p101 = por %p99, %p100
    %p103 = scmp.ne.s32.totalorder %s88, %s102
    %p104 = scmp.eq.s32.totalorder %s31, 0
    %p105 = por %p103, %p104
    %s107 = sadd.s32 %s106, 1
    %p110 = scmp.eq.s32.totalorder %s25, 1
    %p111 = scmp.ne.s32.totalorder %s106, %s108
    %p112 = scmp.eq.s32.totalorder %s25, 0
    %p113 = por %p111, %p112
    %p114 = scmp.ne.s32.totalorder %s106, %s108
    %p115 = scmp.eq.s32.totalorder %s30, 1
    %p116 = por %p114, %p115
    %p117 = scmp.ne.s32.totalorder %s108, %s109
    %p118 = scmp.eq.s32.totalorder %s30, 0
    %p119 = por %p117, %p118
    %p120 = scmp.ne.s32.totalorder %s108, %s109
    %p121 = scmp.eq.s32.totalorder %s31, 1
    %p122 = por %p120, %p121
    %p124 = scmp.ne.s32.totalorder %s109, %s123
    %p125 = scmp.eq.s32.totalorder %s31, 0
    %p126 = por %p124, %p125
    %s128 = sadd.s32 %s127, 1
    %p131 = scmp.eq.s32.totalorder %s25, 1
    %p132 = scmp.ne.s32.totalorder %s127, %s129
    %p133 = scmp.eq.s32.totalorder %s25, 0
    %p134 = por %p132, %p133
    %p135 = scmp.ne.s32.totalorder %s127, %s129
    %p136 = scmp.eq.s32.totalorder %s30, 1
    %p137 = por %p135, %p136
    %p138 = scmp.ne.s32.totalorder %s129, %s130
    %p139 = scmp.eq.s32.totalorder %s30, 0
    %p140 = por %p138, %p139
    %p141 = scmp.ne.s32.totalorder %s129, %s130
    %p142 = scmp.eq.s32.totalorder %s31, 1
    %p143 = por %p141, %p142
    %p145 = scmp.ne.s32.totalorder %s130, %s144
    %p146 = scmp.eq.s32.totalorder %s31, 0
    %p147 = por %p145, %p146
    %s149 = sadd.s32 %s148, 1
    %p152 = scmp.eq.s32.totalorder %s25, 1
    %p153 = scmp.ne.s32.totalorder %s148, %s150
    %p154 = scmp.eq.s32.totalorder %s25, 0
    %p155 = por %p153, %p154
    %p156 = scmp.ne.s32.totalorder %s148, %s150
    %p157 = scmp.eq.s32.totalorder %s30, 1
    %p158 = por %p156, %p157
    %p159 = scmp.ne.s32.totalorder %s150, %s151
    %p160 = scmp.eq.s32.totalorder %s30, 0
    %p161 = por %p159, %p160
    %p162 = scmp.ne.s32.totalorder %s150, %s151
    %p163 = scmp.eq.s32.totalorder %s31, 1
    %p164 = por %p162, %p163
    %p166 = scmp.ne.s32.totalorder %s151, %s165
    %p167 = scmp.eq.s32.totalorder %s31, 0
    %p168 = por %p166, %p167
    %s170 = sadd.s32 %s169, 1
    %p173 = scmp.eq.s32.totalorder %s25, 1
    %p174 = scmp.ne.s32.totalorder %s169, %s171
    %p175 = scmp.eq.s32.totalorder %s25, 0
    %p176 = por %p174, %p175
    %p177 = scmp.ne.s32.totalorder %s169, %s171
    %p178 = scmp.eq.s32.totalorder %s30, 1
    %p179 = por %p177, %p178
    %p180 = scmp.ne.s32.totalorder %s171, %s172
    %p181 = scmp.eq.s32.totalorder %s30, 0
    %p182 = por %p180, %p181
    %p183 = scmp.ne.s32.totalorder %s171, %s172
    %p184 = scmp.eq.s32.totalorder %s31, 1
    %p185 = por %p183, %p184
    %p187 = scmp.ne.s32.totalorder %s172, %s186
    %p188 = scmp.eq.s32.totalorder %s31, 0
    %p189 = por %p187, %p188
    %s191 = sadd.s32 %s190, 1
    %p194 = scmp.eq.s32.totalorder %s25, 1
    %p195 = scmp.ne.s32.totalorder %s190, %s192
    %p196 = scmp.eq.s32.totalorder %s25, 0
    %p197 = por %p195, %p196
    %p198 = scmp.ne.s32.totalorder %s190, %s192
    %p199 = scmp.eq.s32.totalorder %s30, 1
    %p200 = por %p198, %p199
    %p201 = scmp.ne.s32.totalorder %s192, %s193
    %p202 = scmp.eq.s32.totalorder %s30, 0
    %p203 = por %p201, %p202
    %p204 = scmp.ne.s32.totalorder %s192, %s193
    %p205 = scmp.eq.s32.totalorder %s31, 1
    %p206 = por %p204, %p205
    %p208 = scmp.ne.s32.totalorder %s193, %s207
    %p209 = scmp.eq.s32.totalorder %s31, 0
    %p210 = por %p208, %p209
    %s212 = sadd.s32 %s211, 1
    %p215 = scmp.eq.s32.totalorder %s25, 1
    %p216 = scmp.ne.s32.totalorder %s211, %s213
    %p217 = scmp.eq.s32.totalorder %s25, 0
    %p218 = por %p216, %p217
    %p219 = scmp.ne.s32.totalorder %s211, %s213
    %p220 = scmp.eq.s32.totalorder %s30, 1
    %p221 = por %p219, %p220
    %p222 = scmp.ne.s32.totalorder %s213, %s214
    %p223 = scmp.eq.s32.totalorder %s30, 0
    %p224 = por %p222, %p223
    %p225 = scmp.ne.s32.totalorder %s213, %s214
    %p226 = scmp.eq.s32.totalorder %s31, 1
    %p227 = por %p225, %p226
    %p229 = scmp.ne.s32.totalorder %s214, %s228
    %p230 = scmp.eq.s32.totalorder %s31, 0
    %p231 = por %p229, %p230
    %s233 = sadd.s32 %s232, 1
    %p236 = scmp.eq.s32.totalorder %s25, 1
    %p237 = scmp.ne.s32.totalorder %s232, %s234
    %p238 = scmp.eq.s32.totalorder %s25, 0
    %p239 = por %p237, %p238
    %p240 = scmp.ne.s32.totalorder %s232, %s234
    %p241 = scmp.eq.s32.totalorder %s30, 1
    %p242 = por %p240, %p241
    %p243 = scmp.ne.s32.totalorder %s234, %s235
    %p244 = scmp.eq.s32.totalorder %s30, 0
    %p245 = por %p243, %p244
    %p246 = scmp.ne.s32.totalorder %s234, %s235
    %p247 = scmp.eq.s32.totalorder %s31, 1
    %p248 = por %p246, %p247
    %p250 = scmp.ne.s32.totalorder %s235, %s249
    %p251 = scmp.eq.s32.totalorder %s31, 0
    %p252 = por %p250, %p251
    %s254 = sadd.s32 %s253, 1
    %p257 = scmp.eq.s32.totalorder %s25, 1
    %p258 = scmp.ne.s32.totalorder %s253, %s255
    %p259 = scmp.eq.s32.totalorder %s25, 0
    %p260 = por %p258, %p259
    %p261 = scmp.ne.s32.totalorder %s253, %s255
    %p262 = scmp.eq.s32.totalorder %s30, 1
    %p263 = por %p261, %p262
    %p264 = scmp.ne.s32.totalorder %s255, %s256
    %p265 = scmp.eq.s32.totalorder %s30, 0
    %p266 = por %p264, %p265
    %p267 = scmp.ne.s32.totalorder %s255, %s256
    %p268 = scmp.eq.s32.totalorder %s31, 1
    %p269 = por %p267, %p268
    %p271 = scmp.ne.s32.totalorder %s256, %s270
    %p272 = scmp.eq.s32.totalorder %s31, 0
    %p273 = por %p271, %p272
    %s275 = sadd.s32 %s274, 1
    %p278 = scmp.eq.s32.totalorder %s25, 1
    %p279 = scmp.ne.s32.totalorder %s274, %s276
    %p280 = scmp.eq.s32.totalorder %s25, 0
    %p281 = por %p279, %p280
    %p282 = scmp.ne.s32.totalorder %s274, %s276
    %p283 = scmp.eq.s32.totalorder %s30, 1
    %p284 = por %p282, %p283
    %p285 = scmp.ne.s32.totalorder %s276, %s277
    %p286 = scmp.eq.s32.totalorder %s30, 0
    %p287 = por %p285, %p286
    %p288 = scmp.ne.s32.totalorder %s276, %s277
    %p289 = scmp.eq.s32.totalorder %s31, 1
    %p290 = por %p288, %p289
    %p292 = scmp.ne.s32.totalorder %s277, %s291
    %p293 = scmp.eq.s32.totalorder %s31, 0
    %p294 = por %p292, %p293
    %s296 = sadd.s32 %s295, 1
    %p299 = scmp.eq.s32.totalorder %s25, 1
    %p300 = scmp.ne.s32.totalorder %s295, %s297
    %p301 = scmp.eq.s32.totalorder %s25, 0
    %p302 = por %p300, %p301
    %p303 = scmp.ne.s32.totalorder %s295, %s297
    %p304 = scmp.eq.s32.totalorder %s30, 1
    %p305 = por %p303, %p304
    %p306 = scmp.ne.s32.totalorder %s297, %s298
    %p307 = scmp.eq.s32.totalorder %s30, 0
    %p308 = por %p306, %p307
    %p309 = scmp.ne.s32.totalorder %s297, %s298
    %p310 = scmp.eq.s32.totalorder %s31, 1
    %p311 = por %p309, %p310
    %p313 = scmp.ne.s32.totalorder %s298, %s312
    %p314 = scmp.eq.s32.totalorder %s31, 0
    %p315 = por %p313, %p314
    %s317 = sadd.s32 %s316, 1
    %p320 = scmp.eq.s32.totalorder %s25, 1
    %p321 = scmp.ne.s32.totalorder %s316, %s318
    %p322 = scmp.eq.s32.totalorder %s25, 0
    %p323 = por %p321, %p322
    %p324 = scmp.ne.s32.totalorder %s316, %s318
    %p325 = scmp.eq.s32.totalorder %s30, 1
    %p326 = por %p324, %p325
    %p327 = scmp.ne.s32.totalorder %s318, %s319
    %p328 = scmp.eq.s32.totalorder %s30, 0
    %p329 = por %p327, %p328
    %p330 = scmp.ne.s32.totalorder %s318, %s319
    %p331 = scmp.eq.s32.totalorder %s31, 1
    %p332 = por %p330, %p331
    %p334 = scmp.ne.s32.totalorder %s319, %s333
    %p335 = scmp.eq.s32.totalorder %s31, 0
    %p336 = por %p334, %p335
    %s338 = sadd.s32 %s337, 1
    %p341 = scmp.eq.s32.totalorder %s25, 1
    %p342 = scmp.ne.s32.totalorder %s337, %s339
    %p343 = scmp.eq.s32.totalorder %s25, 0
    %p344 = por %p342, %p343
    %p345 = scmp.ne.s32.totalorder %s337, %s339
    %p346 = scmp.eq.s32.totalorder %s30, 1
    %p347 = por %p345, %p346
    %p348 = scmp.ne.s32.totalorder %s339, %s340
    %p349 = scmp.eq.s32.totalorder %s30, 0
    %p350 = por %p348, %p349
    %p351 = scmp.ne.s32.totalorder %s339, %s340
    %p352 = scmp.eq.s32.totalorder %s31, 1
    %p353 = por %p351, %p352
    %p355 = scmp.ne.s32.totalorder %s340, %s354
    %p356 = scmp.eq.s32.totalorder %s31, 0
    %p357 = por %p355, %p356
    %s359 = sadd.s32 %s358, 1
    %p362 = scmp.eq.s32.totalorder %s25, 1
    %p363 = scmp.ne.s32.totalorder %s358, %s360
    %p364 = scmp.eq.s32.totalorder %s25, 0
    %p365 = por %p363, %p364
    %p366 = scmp.ne.s32.totalorder %s358, %s360
    %p367 = scmp.eq.s32.totalorder %s30, 1
    %p368 = por %p366, %p367
    %p369 = scmp.ne.s32.totalorder %s360, %s361
    %p370 = scmp.eq.s32.totalorder %s30, 0
    %p371 = por %p369, %p370
    %p372 = scmp.ne.s32.totalorder %s360, %s361
    %p373 = scmp.eq.s32.totalorder %s31, 1
    %p374 = por %p372, %p373
    %p376 = scmp.ne.s32.totalorder %s361, %s375
    %p377 = scmp.eq.s32.totalorder %s31, 0
    %p378 = por %p376, %p377
    %s380 = sadd.s32 %s379, 1
    %p383 = scmp.eq.s32.totalorder %s25, 1
    %p384 = scmp.ne.s32.totalorder %s379, %s381
    %p385 = scmp.eq.s32.totalorder %s25, 0
    %p386 = por %p384, %p385
    %p387 = scmp.ne.s32.totalorder %s379, %s381
    %p388 = scmp.eq.s32.totalorder %s30, 1
    %p389 = por %p387, %p388
    %p390 = scmp.ne.s32.totalorder %s381, %s382
    %p391 = scmp.eq.s32.totalorder %s30, 0
    %p392 = por %p390, %p391
    %p393 = scmp.ne.s32.totalorder %s381, %s382
    %p394 = scmp.eq.s32.totalorder %s31, 1
    %p395 = por %p393, %p394
    %p397 = scmp.ne.s32.totalorder %s382, %s396
    %p398 = scmp.eq.s32.totalorder %s31, 0
    %p399 = por %p397, %p398
    %s401 = sadd.s32 %s400, 1
    %p404 = scmp.eq.s32.totalorder %s25, 1
    %p405 = scmp.ne.s32.totalorder %s400, %s402
    %p406 = scmp.eq.s32.totalorder %s25, 0
    %p407 = por %p405, %p406
    %p408 = scmp.ne.s32.totalorder %s400, %s402
    %p409 = scmp.eq.s32.totalorder %s30, 1
    %p410 = por %p408, %p409
    %p411 = scmp.ne.s32.totalorder %s402, %s403
    %p412 = scmp.eq.s32.totalorder %s30, 0
    %p413 = por %p411, %p412
    %p414 = scmp.ne.s32.totalorder %s402, %s403
    %p415 = scmp.eq.s32.totalorder %s31, 1
    %p416 = por %p414, %p415
    %p418 = scmp.ne.s32.totalorder %s403, %s417
    %p419 = scmp.eq.s32.totalorder %s31, 0
    %p420 = por %p418, %p419
    %s422 = sadd.s32 %s421, 1
    %p425 = scmp.eq.s32.totalorder %s25, 1
    %p426 = scmp.ne.s32.totalorder %s421, %s423
    %p427 = scmp.eq.s32.totalorder %s25, 0
    %p428 = por %p426, %p427
    %p429 = scmp.ne.s32.totalorder %s421, %s423
    %p430 = scmp.eq.s32.totalorder %s30, 1
    %p431 = por %p429, %p430
    %p432 = scmp.ne.s32.totalorder %s423, %s424
    %p433 = scmp.eq.s32.totalorder %s30, 0
    %p434 = por %p432, %p433
    %p435 = scmp.ne.s32.totalorder %s423, %s424
    %p436 = scmp.eq.s32.totalorder %s31, 1
    %p437 = por %p435, %p436
    %p439 = scmp.ne.s32.totalorder %s424, %s438
    %p440 = scmp.eq.s32.totalorder %s31, 0
    %p441 = por %p439, %p440
    %s442 = ssub.s32 %s25, %s32
    %p443 = scmp.eq.s32.totalorder %s442, 0
    %s445 = sadd.s32 %s444, 1
    %s446 = scalar_select %p443, %s444, %s445
    %p449 = pneg %p443
    %p450 = scmp.eq.s32.totalorder %s25, 1
    %p451 = por %p449, %p450
    %p452 = scmp.ne.s32.totalorder %s444, %s447
    %p453 = scmp.eq.s32.totalorder %s25, 0
    %p454 = por %p452, %p453
    %p455 = scmp.ne.s32.totalorder %s444, %s447
    %p456 = scmp.eq.s32.totalorder %s30, 1
    %p457 = por %p455, %p456
    %p458 = scmp.ne.s32.totalorder %s447, %s448
    %p459 = scmp.eq.s32.totalorder %s30, 0
    %p460 = por %p458, %p459
    %p461 = scmp.ne.s32.totalorder %s447, %s448
    %p462 = scmp.eq.s32.totalorder %s31, 1
    %p463 = por %p461, %p462
    %p465 = scmp.ne.s32.totalorder %s448, %s464
    %p466 = scmp.eq.s32.totalorder %s31, 0
    %p467 = por %p465, %p466
    %p468 = scmp.le.s32.totalorder 1, %s25
    %p469 = scmp.lt.s32.totalorder %s25, 3
    %p470 = pnand %p468, %p469
    %p471 = pneg %p470
    // Predicated region
    $region9: #{tpu_custom_call.1} parent=5 // pred_check
      _
    $region10: #{tpu_custom_call.1} parent=5 // pred_check_branch
      %473 = sbr.rel (%p470) target = $region12
    $region11: #{tpu_custom_call.1} parent=5 // pred_region
      %s474 = ssub.s32 %s25, 1
      // Predicated region
      $region13: #{tpu_custom_call.1} parent=11 // pred_check
        %p475 = pneg %p98
      $region14: #{tpu_custom_call.1} parent=11 // pred_check_branch
        %477 = sbr.rel (%p475) target = $region16
      $region15: #{tpu_custom_call.1} parent=11 // pred_region
        _
      $region16: #{tpu_custom_call.1} parent=11 // pred_fallthru
        _
      // Predicated region
      $region17: #{tpu_custom_call.1} parent=11 // pred_check
        %p478 = pneg %p119
      $region18: #{tpu_custom_call.1} parent=11 // pred_check_branch
        %480 = sbr.rel (%p478) target = $region20
      $region19: #{tpu_custom_call.1} parent=11 // pred_region
        _
      $region20: #{tpu_custom_call.1} parent=11 // pred_fallthru
        _
      // Predicated region
      $region21: #{tpu_custom_call.1} parent=11 // pred_check
        %p481 = pneg %p140
      $region22: #{tpu_custom_call.1} parent=11 // pred_check_branch
        %483 = sbr.rel (%p481) target = $region24
      $region23: #{tpu_custom_call.1} parent=11 // pred_region
        _
      $region24: #{tpu_custom_call.1} parent=11 // pred_fallthru
        _
      // Predicated region
      $region25: #{tpu_custom_call.1} parent=11 // pred_check
        %p484 = pneg %p161
      $region26: #{tpu_custom_call.1} parent=11 // pred_check_branch
        %486 = sbr.rel (%p484) target = $region28
      $region27: #{tpu_custom_call.1} parent=11 // pred_region
        _
      $region28: #{tpu_custom_call.1} parent=11 // pred_fallthru
        _
      // Predicated region
      $region29: #{tpu_custom_call.1} parent=11 // pred_check
        %p487 = pneg %p182
      $region30: #{tpu_custom_call.1} parent=11 // pred_check_branch
        %489 = sbr.rel (%p487) target = $region32
      $region31: #{tpu_custom_call.1} parent=11 // pred_region
        _
      $region32: #{tpu_custom_call.1} parent=11 // pred_fallthru
        _
      // Predicated region
      $region33: #{tpu_custom_call.1} parent=11 // pred_check
        %p490 = pneg %p203
      $region34: #{tpu_custom_call.1} parent=11 // pred_check_branch
        %492 = sbr.rel (%p490) target = $region36
      $region35: #{tpu_custom_call.1} parent=11 // pred_region
        _
      $region36: #{tpu_custom_call.1} parent=11 // pred_fallthru
        _
      // Predicated region
      $region37: #{tpu_custom_call.1} parent=11 // pred_check
        %p493 = pneg %p224
      $region38: #{tpu_custom_call.1} parent=11 // pred_check_branch
        %495 = sbr.rel (%p493) target = $region40
      $region39: #{tpu_custom_call.1} parent=11 // pred_region
        _
      $region40: #{tpu_custom_call.1} parent=11 // pred_fallthru
        _
      // Predicated region
      $region41: #{tpu_custom_call.1} parent=11 // pred_check
        %p496 = pneg %p245
      $region42: #{tpu_custom_call.1} parent=11 // pred_check_branch
        %498 = sbr.rel (%p496) target = $region44
      $region43: #{tpu_custom_call.1} parent=11 // pred_region
        _
      $region44: #{tpu_custom_call.1} parent=11 // pred_fallthru
        _
      // Predicated region
      $region45: #{tpu_custom_call.1} parent=11 // pred_check
        %p499 = pneg %p266
      $region46: #{tpu_custom_call.1} parent=11 // pred_check_branch
        %501 = sbr.rel (%p499) target = $region48
      $region47: #{tpu_custom_call.1} parent=11 // pred_region
        _
      $region48: #{tpu_custom_call.1} parent=11 // pred_fallthru
        _
      // Predicated region
      $region49: #{tpu_custom_call.1} parent=11 // pred_check
        %p502 = pneg %p287
      $region50: #{tpu_custom_call.1} parent=11 // pred_check_branch
        %504 = sbr.rel (%p502) target = $region52
      $region51: #{tpu_custom_call.1} parent=11 // pred_region
        _
      $region52: #{tpu_custom_call.1} parent=11 // pred_fallthru
        _
      // Predicated region
      $region53: #{tpu_custom_call.1} parent=11 // pred_check
        %p505 = pneg %p308
      $region54: #{tpu_custom_call.1} parent=11 // pred_check_branch
        %507 = sbr.rel (%p505) target = $region56
      $region55: #{tpu_custom_call.1} parent=11 // pred_region
        _
      $region56: #{tpu_custom_call.1} parent=11 // pred_fallthru
        _
      // Predicated region
      $region57: #{tpu_custom_call.1} parent=11 // pred_check
        %p508 = pneg %p329
      $region58: #{tpu_custom_call.1} parent=11 // pred_check_branch
        %510 = sbr.rel (%p508) target = $region60
      $region59: #{tpu_custom_call.1} parent=11 // pred_region
        _
      $region60: #{tpu_custom_call.1} parent=11 // pred_fallthru
        _
      // Predicated region
      $region61: #{tpu_custom_call.1} parent=11 // pred_check
        %p511 = pneg %p350
      $region62: #{tpu_custom_call.1} parent=11 // pred_check_branch
        %513 = sbr.rel (%p511) target = $region64
      $region63: #{tpu_custom_call.1} parent=11 // pred_region
        _
      $region64: #{tpu_custom_call.1} parent=11 // pred_fallthru
        _
      // Predicated region
      $region65: #{tpu_custom_call.1} parent=11 // pred_check
        %p514 = pneg %p371
      $region66: #{tpu_custom_call.1} parent=11 // pred_check_branch
        %516 = sbr.rel (%p514) target = $region68
      $region67: #{tpu_custom_call.1} parent=11 // pred_region
        _
      $region68: #{tpu_custom_call.1} parent=11 // pred_fallthru
        _
      // Predicated region
      $region69: #{tpu_custom_call.1} parent=11 // pred_check
        %p517 = pneg %p392
      $region70: #{tpu_custom_call.1} parent=11 // pred_check_branch
        %519 = sbr.rel (%p517) target = $region72
      $region71: #{tpu_custom_call.1} parent=11 // pred_region
        _
      $region72: #{tpu_custom_call.1} parent=11 // pred_fallthru
        _
      // Predicated region
      $region73: #{tpu_custom_call.1} parent=11 // pred_check
        %p520 = pneg %p413
      $region74: #{tpu_custom_call.1} parent=11 // pred_check_branch
        %522 = sbr.rel (%p520) target = $region76
      $region75: #{tpu_custom_call.1} parent=11 // pred_region
        _
      $region76: #{tpu_custom_call.1} parent=11 // pred_fallthru
        _
      // Predicated region
      $region77: #{tpu_custom_call.1} parent=11 // pred_check
        %p523 = pneg %p434
      $region78: #{tpu_custom_call.1} parent=11 // pred_check_branch
        %525 = sbr.rel (%p523) target = $region80
      $region79: #{tpu_custom_call.1} parent=11 // pred_region
        _
      $region80: #{tpu_custom_call.1} parent=11 // pred_fallthru
        _
    $region12: #{tpu_custom_call.1} parent=5 // pred_fallthru
      _
    %p526 = scmp.lt.s32.totalorder %s25, 2
    // Predicated region
    $region81: #{tpu_custom_call.1} parent=5 // pred_check
      %p527 = pneg %p526
    $region82: #{tpu_custom_call.1} parent=5 // pred_check_branch
      %529 = sbr.rel (%p527) target = $region84
    $region83: #{tpu_custom_call.1} parent=5 // pred_region
      // Predicated region
      $region85: #{tpu_custom_call.1} parent=83 // pred_check
        %p530 = pneg %p45
      $region86: #{tpu_custom_call.1} parent=83 // pred_check_branch
        %532 = sbr.rel (%p530) target = $region88
      $region87: #{tpu_custom_call.1} parent=83 // pred_region
        %s533 = smul.u32 13, %s25
        %p534 = scmp.lt.s32.totalorder %s533, 25
        %s535 = scalar_select %p534, %s533, 25
        %s536 = smul.addr %s535, 8
        %s537 = scalar_lea.vmem %s0, %s536
        %s538 = smul.u32 13, %s25
      $region88: #{tpu_custom_call.1} parent=83 // pred_fallthru
        _
      // Predicated region
      $region89: #{tpu_custom_call.1} parent=83 // pred_check
        %p539 = pneg %p71
      $region90: #{tpu_custom_call.1} parent=83 // pred_check_branch
        %541 = sbr.rel (%p539) target = $region92
      $region91: #{tpu_custom_call.1} parent=83 // pred_region
        %s542 = smul.u32 13, %s25
        %p543 = scmp.lt.s32.totalorder %s542, 25
        %s544 = scalar_select %p543, %s542, 25
        %s545 = smul.addr %s544, 8
        %s546 = scalar_lea.vmem %s1, %s545
        %s547 = smul.u32 13, %s25
      $region92: #{tpu_custom_call.1} parent=83 // pred_fallthru
        _
    $region84: #{tpu_custom_call.1} parent=5 // pred_fallthru
      _
    %p548 = scmp.le.s32.totalorder 1, %s25
    %p549 = scmp.lt.s32.totalorder %s25, 3
    %p550 = pnand %p548, %p549
    %p551 = pneg %p550
    // Predicated region
    $region93: #{tpu_custom_call.1} parent=5 // pred_check
      _
    $region94: #{tpu_custom_call.1} parent=5 // pred_check_branch
      %553 = sbr.rel (%p550) target = $region96
    $region95: #{tpu_custom_call.1} parent=5 // pred_region
      %s554 = ssub.s32 %s25, 1
      %s555 = smul.u32 13, %s30
      %p556 = scmp.lt.s32.totalorder %s555, 25
      %s557 = scalar_select %p556, %s555, 25
      %s558 = smul.addr %s557, 8
      %s559 = scalar_lea.vmem %s0, %s558
      %p560 = pneg %p51
      %p561 = pneg %p48
      %s562 = smul.u32 13, %s30
      %p563 = scmp.lt.s32.totalorder %s562, 25
      %s564 = scalar_select %p563, %s562, 25
      %s565 = smul.addr %s564, 8
      %s566 = scalar_lea.vmem %s1, %s565
      %p567 = pneg %p77
      %p568 = pneg %p74
      %p569 = pneg %p98
      %p570 = pneg %p95
      %p571 = pneg %p119
      %p572 = pneg %p116
      %p573 = pneg %p140
      %p574 = pneg %p137
      %p575 = pneg %p161
      %p576 = pneg %p158
      %p577 = pneg %p182
      %p578 = pneg %p179
      %p579 = pneg %p203
      %p580 = pneg %p200
      %p581 = pneg %p224
      %p582 = pneg %p221
      %p583 = pneg %p245
      %p584 = pneg %p242
      %p585 = pneg %p266
      %p586 = pneg %p263
      %p587 = pneg %p287
      %p588 = pneg %p284
      %p589 = pneg %p308
      %p590 = pneg %p305
      %p591 = pneg %p329
      %p592 = pneg %p326
      %p593 = pneg %p350
      %p594 = pneg %p347
      %p595 = pneg %p371
      %p596 = pneg %p368
      %p597 = pneg %p392
      %p598 = pneg %p389
      %p599 = pneg %p413
      %p600 = pneg %p410
      %p601 = pneg %p434
      %p602 = pneg %p431
      %p603 = pneg %p460
      %p604 = pneg %p457
      %s605 = smul.u32 13, %s30
      %p606 = scmp.lt.s32.totalorder %s605, 25
      %s607 = scalar_select %p606, %s605, 25
      %s608 = smul.addr %s607, 8
      %s609 = scalar_lea.vmem %s19, %s608
      %s610 = smul.u32 13, %s30
      %p611 = scmp.lt.s32.totalorder %s610, 25
      %s612 = scalar_select %p611, %s610, 25
      %s613 = smul.addr %s612, 8
      %s614 = scalar_lea.vmem %s0, %s613
      %s615 = smul.u32 13, %s30
      %s616 = smul.u32 13, %s30
      %p617 = scmp.lt.s32.totalorder %s616, 25
      %s618 = scalar_select %p617, %s616, 25
      %s619 = smul.addr %s618, 8
      %s620 = scalar_lea.vmem %s1, %s619
      %s621 = smul.u32 13, %s30
      %s622 = smul.u32 13, %s30
      %p623 = scmp.lt.s32.totalorder %s622, 25
      %s624 = scalar_select %p623, %s622, 25
      %s625 = smul.addr %s624, 8
      %s626 = scalar_lea.vmem %s19, %s625
      %s627 = smul.u32 13, %s30
      %v629 = vld [vmem:[%s614] sm:$0xff]
      %v630 = vld [vmem:[%s614 + $0x8] sm:$0xff]
      %v631 = vld [vmem:[%s614 + $0x10] sm:$0xff]
      %v632 = vld [vmem:[%s614 + $0x18] sm:$0xff]
      %v633 = vld [vmem:[%s614 + $0x20] sm:$0xff]
      %v634 = vld [vmem:[%s614 + $0x28] sm:$0xff]
      %v635 = vld [vmem:[%s614 + $0x30] sm:$0xff]
      %v636 = vld [vmem:[%s614 + $0x38] sm:$0xff]
      %v637 = vld [vmem:[%s614 + $0x40] sm:$0xff]
      %v638 = vld [vmem:[%s614 + $0x48] sm:$0xff]
      %v639 = vld [vmem:[%s614 + $0x50] sm:$0xff]
      %v640 = vld [vmem:[%s614 + $0x58] sm:$0xff]
      %v641 = vld [vmem:[%s614 + $0x60] sm:$0xff]
      %v642 = vpack.c.bf16 %v630, %v629
      %v643 = vpack.c.bf16 %v632, %v631
      %v644 = vpack.c.bf16 %v634, %v633
      %v645 = vpack.c.bf16 %v636, %v635
      %v646 = vpack.c.bf16 %v638, %v637
      %v647 = vpack.c.bf16 %v640, %v639
      %v648 = vpack.c.bf16 %v641, %v641
      %v649 = vld [vmem:[%s620] sm:$0xff]
      %v650 = vld [vmem:[%s620 + $0x8] sm:$0xff]
      %v651 = vld [vmem:[%s620 + $0x10] sm:$0xff]
      %v652 = vld [vmem:[%s620 + $0x18] sm:$0xff]
      %v653 = vld [vmem:[%s620 + $0x20] sm:$0xff]
      %v654 = vld [vmem:[%s620 + $0x28] sm:$0xff]
      %v655 = vld [vmem:[%s620 + $0x30] sm:$0xff]
      %v656 = vld [vmem:[%s620 + $0x38] sm:$0xff]
      %v657 = vld [vmem:[%s620 + $0x40] sm:$0xff]
      %v658 = vld [vmem:[%s620 + $0x48] sm:$0xff]
      %v659 = vld [vmem:[%s620 + $0x50] sm:$0xff]
      %v660 = vld [vmem:[%s620 + $0x58] sm:$0xff]
      %v661 = vld [vmem:[%s620 + $0x60] sm:$0xff]
      %v662 = vpack.c.bf16 %v650, %v649
      %v663 = vpack.c.bf16 %v652, %v651
      %v664 = vpack.c.bf16 %v654, %v653
      %v665 = vpack.c.bf16 %v656, %v655
      %v666 = vpack.c.bf16 %v658, %v657
      %v667 = vpack.c.bf16 %v660, %v659
      %v668 = vpack.c.bf16 %v661, %v661
      %v669 = vld [vmem:[%s2] sm:$0xf]
      %v670 = vld [vmem:[%s2 + $0x4] sm:$0xf]
      %v671 = vld [vmem:[%s2 + $0x8] sm:$0xf]
      %v672 = vld [vmem:[%s2 + $0xc] sm:$0xf]
      %v673 = vld [vmem:[%s2 + $0x10] sm:$0xf]
      %v674 = vld [vmem:[%s2 + $0x14] sm:$0xf]
      %v675 = vld [vmem:[%s2 + $0x18] sm:$0xf]
      %v676 = vld [vmem:[%s2 + $0x1c] sm:$0xf]
      %v677 = vld [vmem:[%s3] sm:$0x1]
      %v679 = vlaneseq
      %v680 = vshrl.u32 %v679, 7
      %v681 = vsub.s32 0, %v680
      %v682 = vrot.slane %v677, %v681
      %v692 = vunpack.c.l.b16 %v669
      %v693 = vunpack.c.l.b16 %v670
      %v694 = vunpack.c.l.b16 %v671
      %v695 = vunpack.c.l.b16 %v672
      %v696 = vunpack.c.l.b16 %v673
      %v697 = vunpack.c.l.b16 %v674
      %v698 = vunpack.c.l.b16 %v675
      %v699 = vunpack.c.l.b16 %v676
      %v700 = vpack.c.b16 %v693, %v692
      %v701 = vpack.c.b16 %v695, %v694
      %v702 = vpack.c.b16 %v697, %v696
      %v703 = vpack.c.b16 %v699, %v698
      %vm708 = vcmask 523264
      %v710 = vsel %vm708, %v642, 0
      %v713 = vsel %vm708, %v643, 0
      %v716 = vsel %vm708, %v644, 0
      %v719 = vsel %vm708, %v645, 0
      %v722 = vsel %vm708, %v646, 0
      %v725 = vsel %vm708, %v647, 0
      %v728 = vsel %vm708, %v648, 0
      %730 = vmatprep.subr.bf16.mxu0 0
      %731 = vmatpush1.bf16.msra.mxu0 0
      %732 = vmatprep.subr.bf16.mxu0 0
      %733 = vmatpush1.bf16.msra.mxu0 0
      %734 = vmatprep.subr.bf16.mxu0 0
      %735 = vmatpush1.bf16.msra.mxu0 0
      %736 = vmatprep.subr.bf16.mxu0 0
      %737 = vmatpush1.bf16.msra.mxu0 0
      %738 = vmatprep.subr.bf16.mxu0 0
      %739 = vmatpush1.bf16.msra.mxu0 %v703
      %740 = vmatprep.subr.bf16.mxu0 0
      %741 = vmatpush1.bf16.msra.mxu0 %v702
      %742 = vmatprep.subr.bf16.mxu0 0
      %743 = vmatpush1.bf16.msra.mxu0 %v701
      %744 = vmatprep.subr.bf16.mxu0 0
      %745 = vmatpush1.bf16.msra.mxu0 %v700
      %746 = vmatprep.subr.bf16.mxu0 0
      %747 = vmatpush2.bf16.msra.mxu0 0
      %748 = vmatprep.subr.bf16.mxu0 0
      %749 = vmatpush2.bf16.msra.mxu0 0
      %750 = vmatprep.subr.bf16.mxu0 0
      %751 = vmatpush2.bf16.msra.mxu0 0
      %752 = vmatprep.subr.bf16.mxu0 0
      %753 = vmatpush2.bf16.msra.mxu0 0
      %754 = vmatprep.subr.bf16.mxu0 0
      %755 = vmatpush2.bf16.msra.mxu0 0
      %756 = vmatprep.subr.bf16.mxu0 0
      %757 = vmatpush2.bf16.msra.mxu0 0
      %758 = vmatprep.subr.bf16.mxu0 0
      %759 = vmatpush2.bf16.msra.mxu0 0
      %760 = vmatprep.subr.bf16.mxu0 0
      %761 = vmatpush2.bf16.msra.mxu0 0
      %762 = vmatprep.mubr.bf16.mxu0 0
      %763 = vmatmul.mubr.bf16.gmra.mxu0 %v710
      %v764 = vpop.f32.mrf.mxu0
      %v765 = vadd.f32 %v682, %v764
      %v766 = vpop.f32.mrf.mxu0
      %v767 = vpop.f32.mrf.mxu0
      %v768 = vadd.f32 %v682, %v767
      %v769 = vpop.f32.mrf.mxu0
      %770 = vmatprep.mubr.bf16.mxu0 0
      %771 = vmatmul.mubr.bf16.gmra.mxu0 %v713
      %v772 = vpop.f32.mrf.mxu0
      %v773 = vadd.f32 %v682, %v772
      %v774 = vpop.f32.mrf.mxu0
      %v775 = vpop.f32.mrf.mxu0
      %v776 = vadd.f32 %v682, %v775
      %v777 = vpop.f32.mrf.mxu0
      %778 = vmatprep.mubr.bf16.mxu0 0
      %779 = vmatmul.mubr.bf16.gmra.mxu0 %v716
      %v780 = vpop.f32.mrf.mxu0
      %v781 = vadd.f32 %v682, %v780
      %v782 = vpop.f32.mrf.mxu0
      %v783 = vpop.f32.mrf.mxu0
      %v784 = vadd.f32 %v682, %v783
      %v785 = vpop.f32.mrf.mxu0
      %786 = vmatprep.mubr.bf16.mxu0 0
      %787 = vmatmul.mubr.bf16.gmra.mxu0 %v719
      %v788 = vpop.f32.mrf.mxu0
      %v789 = vadd.f32 %v682, %v788
      %v790 = vpop.f32.mrf.mxu0
      %v791 = vpop.f32.mrf.mxu0
      %v792 = vadd.f32 %v682, %v791
      %v793 = vpop.f32.mrf.mxu0
      %794 = vmatprep.mubr.bf16.mxu0 0
      %795 = vmatmul.mubr.bf16.gmra.mxu0 %v722
      %v796 = vpop.f32.mrf.mxu0
      %v797 = vadd.f32 %v682, %v796
      %v798 = vpop.f32.mrf.mxu0
      %v799 = vpop.f32.mrf.mxu0
      %v800 = vadd.f32 %v682, %v799
      %v801 = vpop.f32.mrf.mxu0
      %802 = vmatprep.mubr.bf16.mxu0 0
      %803 = vmatmul.mubr.bf16.gmra.mxu0 %v725
      %v804 = vpop.f32.mrf.mxu0
      %v805 = vadd.f32 %v682, %v804
      %v806 = vpop.f32.mrf.mxu0
      %v807 = vpop.f32.mrf.mxu0
      %v808 = vadd.f32 %v682, %v807
      %v809 = vpop.f32.mrf.mxu0
      %810 = vmatprep.mubr.bf16.mxu0 0
      %811 = vmatmul.mubr.bf16.gmra.mxu0 %v728
      %v812 = vpop.f32.mrf.mxu0
      %v813 = vadd.f32 %v682, %v812
      %v814 = vpop.f32.mrf.mxu0
      %v815 = vpop.f32.mrf.mxu0
      %v816 = vpop.f32.mrf.mxu0
      %817 = vdwg.mxu0
      %v818 = vld [vmem:[%s4] sm:$0xf]
      %v819 = vld [vmem:[%s4 + $0x4] sm:$0xf]
      %v820 = vld [vmem:[%s4 + $0x8] sm:$0xf]
      %v821 = vld [vmem:[%s4 + $0xc] sm:$0xf]
      %v822 = vld [vmem:[%s4 + $0x10] sm:$0xf]
      %v823 = vld [vmem:[%s4 + $0x14] sm:$0xf]
      %v824 = vld [vmem:[%s4 + $0x18] sm:$0xf]
      %v825 = vld [vmem:[%s4 + $0x1c] sm:$0xf]
      %v826 = vld [vmem:[%s5] sm:$0x1]
      %v828 = vlaneseq
      %v829 = vshrl.u32 %v828, 7
      %v830 = vsub.s32 0, %v829
      %v831 = vrot.slane %v826, %v830
      %v841 = vunpack.c.l.b16 %v818
      %v842 = vunpack.c.l.b16 %v819
      %v843 = vunpack.c.l.b16 %v820
      %v844 = vunpack.c.l.b16 %v821
      %v845 = vunpack.c.l.b16 %v822
      %v846 = vunpack.c.l.b16 %v823
      %v847 = vunpack.c.l.b16 %v824
      %v848 = vunpack.c.l.b16 %v825
      %v849 = vpack.c.b16 %v842, %v841
      %v850 = vpack.c.b16 %v844, %v843
      %v851 = vpack.c.b16 %v846, %v845
      %v852 = vpack.c.b16 %v848, %v847
      %857 = vmatprep.subr.bf16.mxu0 0
      %858 = vmatpush1.bf16.msra.mxu0 0
      %859 = vmatprep.subr.bf16.mxu0 0
      %860 = vmatpush1.bf16.msra.mxu0 0
      %861 = vmatprep.subr.bf16.mxu0 0
      %862 = vmatpush1.bf16.msra.mxu0 0
      %863 = vmatprep.subr.bf16.mxu0 0
      %864 = vmatpush1.bf16.msra.mxu0 0
      %865 = vmatprep.subr.bf16.mxu0 0
      %866 = vmatpush1.bf16.msra.mxu0 %v852
      %867 = vmatprep.subr.bf16.mxu0 0
      %868 = vmatpush1.bf16.msra.mxu0 %v851
      %869 = vmatprep.subr.bf16.mxu0 0
      %870 = vmatpush1.bf16.msra.mxu0 %v850
      %871 = vmatprep.subr.bf16.mxu0 0
      %872 = vmatpush1.bf16.msra.mxu0 %v849
      %873 = vmatprep.subr.bf16.mxu0 0
      %874 = vmatpush2.bf16.msra.mxu0 0
      %875 = vmatprep.subr.bf16.mxu0 0
      %876 = vmatpush2.bf16.msra.mxu0 0
      %877 = vmatprep.subr.bf16.mxu0 0
      %878 = vmatpush2.bf16.msra.mxu0 0
      %879 = vmatprep.subr.bf16.mxu0 0
      %880 = vmatpush2.bf16.msra.mxu0 0
      %881 = vmatprep.subr.bf16.mxu0 0
      %882 = vmatpush2.bf16.msra.mxu0 0
      %883 = vmatprep.subr.bf16.mxu0 0
      %884 = vmatpush2.bf16.msra.mxu0 0
      %885 = vmatprep.subr.bf16.mxu0 0
      %886 = vmatpush2.bf16.msra.mxu0 0
      %887 = vmatprep.subr.bf16.mxu0 0
      %888 = vmatpush2.bf16.msra.mxu0 0
      %889 = vmatprep.mubr.bf16.mxu0 0
      %890 = vmatmul.mubr.bf16.gmra.mxu0 %v710
      %v891 = vpop.f32.mrf.mxu0
      %v892 = vadd.f32 %v831, %v891
      %v893 = vpop.f32.mrf.mxu0
      %v894 = vpop.f32.mrf.mxu0
      %v895 = vadd.f32 %v831, %v894
      %v896 = vpop.f32.mrf.mxu0
      %897 = vmatprep.mubr.bf16.mxu0 0
      %898 = vmatmul.mubr.bf16.gmra.mxu0 %v713
      %v899 = vpop.f32.mrf.mxu0
      %v900 = vadd.f32 %v831, %v899
      %v901 = vpop.f32.mrf.mxu0
      %v902 = vpop.f32.mrf.mxu0
      %v903 = vadd.f32 %v831, %v902
      %v904 = vpop.f32.mrf.mxu0
      %905 = vmatprep.mubr.bf16.mxu0 0
      %906 = vmatmul.mubr.bf16.gmra.mxu0 %v716
      %v907 = vpop.f32.mrf.mxu0
      %v908 = vadd.f32 %v831, %v907
      %v909 = vpop.f32.mrf.mxu0
      %v910 = vpop.f32.mrf.mxu0
      %v911 = vadd.f32 %v831, %v910
      %v912 = vpop.f32.mrf.mxu0
      %913 = vmatprep.mubr.bf16.mxu0 0
      %914 = vmatmul.mubr.bf16.gmra.mxu0 %v719
      %v915 = vpop.f32.mrf.mxu0
      %v916 = vadd.f32 %v831, %v915
      %v917 = vpop.f32.mrf.mxu0
      %v918 = vpop.f32.mrf.mxu0
      %v919 = vadd.f32 %v831, %v918
      %v920 = vpop.f32.mrf.mxu0
      %921 = vmatprep.mubr.bf16.mxu0 0
      %922 = vmatmul.mubr.bf16.gmra.mxu0 %v722
      %v923 = vpop.f32.mrf.mxu0
      %v924 = vadd.f32 %v831, %v923
      %v925 = vpop.f32.mrf.mxu0
      %v926 = vpop.f32.mrf.mxu0
      %v927 = vadd.f32 %v831, %v926
      %v928 = vpop.f32.mrf.mxu0
      %929 = vmatprep.mubr.bf16.mxu0 0
      %930 = vmatmul.mubr.bf16.gmra.mxu0 %v725
      %v931 = vpop.f32.mrf.mxu0
      %v932 = vadd.f32 %v831, %v931
      %v933 = vpop.f32.mrf.mxu0
      %v934 = vpop.f32.mrf.mxu0
      %v935 = vadd.f32 %v831, %v934
      %v936 = vpop.f32.mrf.mxu0
      %937 = vmatprep.mubr.bf16.mxu0 0
      %938 = vmatmul.mubr.bf16.gmra.mxu0 %v728
      %v939 = vpop.f32.mrf.mxu0
      %v940 = vadd.f32 %v831, %v939
      %v941 = vpop.f32.mrf.mxu0
      %v942 = vpop.f32.mrf.mxu0
      %v943 = vpop.f32.mrf.mxu0
      %944 = vdwg.mxu0
      %v945 = vld [vmem:[%s6] sm:$0xf]
      %v946 = vld [vmem:[%s6 + $0x4] sm:$0xf]
      %v947 = vld [vmem:[%s6 + $0x8] sm:$0xf]
      %v948 = vld [vmem:[%s6 + $0xc] sm:$0xf]
      %v949 = vld [vmem:[%s6 + $0x10] sm:$0xf]
      %v950 = vld [vmem:[%s6 + $0x14] sm:$0xf]
      %v951 = vld [vmem:[%s6 + $0x18] sm:$0xf]
      %v952 = vld [vmem:[%s6 + $0x1c] sm:$0xf]
      %v953 = vld [vmem:[%s7] sm:$0x1]
      %v955 = vlaneseq
      %v956 = vshrl.u32 %v955, 7
      %v957 = vsub.s32 0, %v956
      %v958 = vrot.slane %v953, %v957
      %v968 = vunpack.c.l.b16 %v945
      %v969 = vunpack.c.l.b16 %v946
      %v970 = vunpack.c.l.b16 %v947
      %v971 = vunpack.c.l.b16 %v948
      %v972 = vunpack.c.l.b16 %v949
      %v973 = vunpack.c.l.b16 %v950
      %v974 = vunpack.c.l.b16 %v951
      %v975 = vunpack.c.l.b16 %v952
      %v976 = vpack.c.b16 %v969, %v968
      %v977 = vpack.c.b16 %v971, %v970
      %v978 = vpack.c.b16 %v973, %v972
      %v979 = vpack.c.b16 %v975, %v974
      %v985 = vsel %vm708, %v662, 0
      %v988 = vsel %vm708, %v663, 0
      %v991 = vsel %vm708, %v664, 0
      %v994 = vsel %vm708, %v665, 0
      %v997 = vsel %vm708, %v666, 0
      %v1000 = vsel %vm708, %v667, 0
      %v1003 = vsel %vm708, %v668, 0
      %1005 = vmatprep.subr.bf16.mxu0 0
      %1006 = vmatpush1.bf16.msra.mxu0 0
      %1007 = vmatprep.subr.bf16.mxu0 0
      %1008 = vmatpush1.bf16.msra.mxu0 0
      %1009 = vmatprep.subr.bf16.mxu0 0
      %1010 = vmatpush1.bf16.msra.mxu0 0
      %1011 = vmatprep.subr.bf16.mxu0 0
      %1012 = vmatpush1.bf16.msra.mxu0 0
      %1013 = vmatprep.subr.bf16.mxu0 0
      %1014 = vmatpush1.bf16.msra.mxu0 %v979
      %1015 = vmatprep.subr.bf16.mxu0 0
      %1016 = vmatpush1.bf16.msra.mxu0 %v978
      %1017 = vmatprep.subr.bf16.mxu0 0
      %1018 = vmatpush1.bf16.msra.mxu0 %v977
      %1019 = vmatprep.subr.bf16.mxu0 0
      %1020 = vmatpush1.bf16.msra.mxu0 %v976
      %1021 = vmatprep.subr.bf16.mxu0 0
      %1022 = vmatpush2.bf16.msra.mxu0 0
      %1023 = vmatprep.subr.bf16.mxu0 0
      %1024 = vmatpush2.bf16.msra.mxu0 0
      %1025 = vmatprep.subr.bf16.mxu0 0
      %1026 = vmatpush2.bf16.msra.mxu0 0
      %1027 = vmatprep.subr.bf16.mxu0 0
      %1028 = vmatpush2.bf16.msra.mxu0 0
      %1029 = vmatprep.subr.bf16.mxu0 0
      %1030 = vmatpush2.bf16.msra.mxu0 0
      %1031 = vmatprep.subr.bf16.mxu0 0
      %1032 = vmatpush2.bf16.msra.mxu0 0
      %1033 = vmatprep.subr.bf16.mxu0 0
      %1034 = vmatpush2.bf16.msra.mxu0 0
      %1035 = vmatprep.subr.bf16.mxu0 0
      %1036 = vmatpush2.bf16.msra.mxu0 0
      %1037 = vmatprep.mubr.bf16.mxu0 0
      %1038 = vmatmul.mubr.bf16.gmra.mxu0 %v985
      %v1039 = vpop.f32.mrf.mxu0
      %v1040 = vadd.f32 %v958, %v1039
      %v1041 = vpop.f32.mrf.mxu0
      %v1042 = vpop.f32.mrf.mxu0
      %v1043 = vadd.f32 %v958, %v1042
      %v1044 = vpop.f32.mrf.mxu0
      %1045 = vmatprep.mubr.bf16.mxu0 0
      %1046 = vmatmul.mubr.bf16.gmra.mxu0 %v988
      %v1047 = vpop.f32.mrf.mxu0
      %v1048 = vadd.f32 %v958, %v1047
      %v1049 = vpop.f32.mrf.mxu0
      %v1050 = vpop.f32.mrf.mxu0
      %v1051 = vadd.f32 %v958, %v1050
      %v1052 = vpop.f32.mrf.mxu0
      %1053 = vmatprep.mubr.bf16.mxu0 0
      %1054 = vmatmul.mubr.bf16.gmra.mxu0 %v991
      %v1055 = vpop.f32.mrf.mxu0
      %v1056 = vadd.f32 %v958, %v1055
      %v1057 = vpop.f32.mrf.mxu0
      %v1058 = vpop.f32.mrf.mxu0
      %v1059 = vadd.f32 %v958, %v1058
      %v1060 = vpop.f32.mrf.mxu0
      %1061 = vmatprep.mubr.bf16.mxu0 0
      %1062 = vmatmul.mubr.bf16.gmra.mxu0 %v994
      %v1063 = vpop.f32.mrf.mxu0
      %v1064 = vadd.f32 %v958, %v1063
      %v1065 = vpop.f32.mrf.mxu0
      %v1066 = vpop.f32.mrf.mxu0
      %v1067 = vadd.f32 %v958, %v1066
      %v1068 = vpop.f32.mrf.mxu0
      %1069 = vmatprep.mubr.bf16.mxu0 0
      %1070 = vmatmul.mubr.bf16.gmra.mxu0 %v997
      %v1071 = vpop.f32.mrf.mxu0
      %v1072 = vadd.f32 %v958, %v1071
      %v1073 = vpop.f32.mrf.mxu0
      %v1074 = vpop.f32.mrf.mxu0
      %v1075 = vadd.f32 %v958, %v1074
      %v1076 = vpop.f32.mrf.mxu0
      %1077 = vmatprep.mubr.bf16.mxu0 0
      %1078 = vmatmul.mubr.bf16.gmra.mxu0 %v1000
      %v1079 = vpop.f32.mrf.mxu0
      %v1080 = vadd.f32 %v958, %v1079
      %v1081 = vpop.f32.mrf.mxu0
      %v1082 = vpop.f32.mrf.mxu0
      %v1083 = vadd.f32 %v958, %v1082
      %v1084 = vpop.f32.mrf.mxu0
      %1085 = vmatprep.mubr.bf16.mxu0 0
      %1086 = vmatmul.mubr.bf16.gmra.mxu0 %v1003
      %v1087 = vpop.f32.mrf.mxu0
      %v1088 = vadd.f32 %v958, %v1087
      %v1089 = vpop.f32.mrf.mxu0
      %v1090 = vpop.f32.mrf.mxu0
      %v1091 = vpop.f32.mrf.mxu0
      %1092 = vdwg.mxu0
      %v1093 = vld [vmem:[%s8] sm:$0xf]
      %v1094 = vld [vmem:[%s8 + $0x4] sm:$0xf]
      %v1095 = vld [vmem:[%s8 + $0x8] sm:$0xf]
      %v1096 = vld [vmem:[%s8 + $0xc] sm:$0xf]
      %v1097 = vld [vmem:[%s8 + $0x10] sm:$0xf]
      %v1098 = vld [vmem:[%s8 + $0x14] sm:$0xf]
      %v1099 = vld [vmem:[%s8 + $0x18] sm:$0xf]
      %v1100 = vld [vmem:[%s8 + $0x1c] sm:$0xf]
      %v1101 = vld [vmem:[%s9] sm:$0x1]
      %v1103 = vlaneseq
      %v1104 = vshrl.u32 %v1103, 7
      %v1105 = vsub.s32 0, %v1104
      %v1106 = vrot.slane %v1101, %v1105
      %v1116 = vunpack.c.l.b16 %v1093
      %v1117 = vunpack.c.l.b16 %v1094
      %v1118 = vunpack.c.l.b16 %v1095
      %v1119 = vunpack.c.l.b16 %v1096
      %v1120 = vunpack.c.l.b16 %v1097
      %v1121 = vunpack.c.l.b16 %v1098
      %v1122 = vunpack.c.l.b16 %v1099
      %v1123 = vunpack.c.l.b16 %v1100
      %v1124 = vpack.c.b16 %v1117, %v1116
      %v1125 = vpack.c.b16 %v1119, %v1118
      %v1126 = vpack.c.b16 %v1121, %v1120
      %v1127 = vpack.c.b16 %v1123, %v1122
      %1132 = vmatprep.subr.bf16.mxu0 0
      %1133 = vmatpush1.bf16.msra.mxu0 0
      %1134 = vmatprep.subr.bf16.mxu0 0
      %1135 = vmatpush1.bf16.msra.mxu0 0
      %1136 = vmatprep.subr.bf16.mxu0 0
      %1137 = vmatpush1.bf16.msra.mxu0 0
      %1138 = vmatprep.subr.bf16.mxu0 0
      %1139 = vmatpush1.bf16.msra.mxu0 0
      %1140 = vmatprep.subr.bf16.mxu0 0
      %1141 = vmatpush1.bf16.msra.mxu0 %v1127
      %1142 = vmatprep.subr.bf16.mxu0 0
      %1143 = vmatpush1.bf16.msra.mxu0 %v1126
      %1144 = vmatprep.subr.bf16.mxu0 0
      %1145 = vmatpush1.bf16.msra.mxu0 %v1125
      %1146 = vmatprep.subr.bf16.mxu0 0
      %1147 = vmatpush1.bf16.msra.mxu0 %v1124
      %1148 = vmatprep.subr.bf16.mxu0 0
      %1149 = vmatpush2.bf16.msra.mxu0 0
      %1150 = vmatprep.subr.bf16.mxu0 0
      %1151 = vmatpush2.bf16.msra.mxu0 0
      %1152 = vmatprep.subr.bf16.mxu0 0
      %1153 = vmatpush2.bf16.msra.mxu0 0
      %1154 = vmatprep.subr.bf16.mxu0 0
      %1155 = vmatpush2.bf16.msra.mxu0 0
      %1156 = vmatprep.subr.bf16.mxu0 0
      %1157 = vmatpush2.bf16.msra.mxu0 0
      %1158 = vmatprep.subr.bf16.mxu0 0
      %1159 = vmatpush2.bf16.msra.mxu0 0
      %1160 = vmatprep.subr.bf16.mxu0 0
      %1161 = vmatpush2.bf16.msra.mxu0 0
      %1162 = vmatprep.subr.bf16.mxu0 0
      %1163 = vmatpush2.bf16.msra.mxu0 0
      %1164 = vmatprep.mubr.bf16.mxu0 0
      %1165 = vmatmul.mubr.bf16.gmra.mxu0 %v985
      %v1166 = vpop.f32.mrf.mxu0
      %v1167 = vadd.f32 %v1106, %v1166
      %v1168 = vpop.f32.mrf.mxu0
      %v1169 = vpop.f32.mrf.mxu0
      %v1170 = vadd.f32 %v1106, %v1169
      %v1171 = vpop.f32.mrf.mxu0
      %1172 = vmatprep.mubr.bf16.mxu0 0
      %1173 = vmatmul.mubr.bf16.gmra.mxu0 %v988
      %v1174 = vpop.f32.mrf.mxu0
      %v1175 = vadd.f32 %v1106, %v1174
      %v1176 = vpop.f32.mrf.mxu0
      %v1177 = vpop.f32.mrf.mxu0
      %v1178 = vadd.f32 %v1106, %v1177
      %v1179 = vpop.f32.mrf.mxu0
      %1180 = vmatprep.mubr.bf16.mxu0 0
      %1181 = vmatmul.mubr.bf16.gmra.mxu0 %v991
      %v1182 = vpop.f32.mrf.mxu0
      %v1183 = vadd.f32 %v1106, %v1182
      %v1184 = vpop.f32.mrf.mxu0
      %v1185 = vpop.f32.mrf.mxu0
      %v1186 = vadd.f32 %v1106, %v1185
      %v1187 = vpop.f32.mrf.mxu0
      %1188 = vmatprep.mubr.bf16.mxu0 0
      %1189 = vmatmul.mubr.bf16.gmra.mxu0 %v994
      %v1190 = vpop.f32.mrf.mxu0
      %v1191 = vadd.f32 %v1106, %v1190
      %v1192 = vpop.f32.mrf.mxu0
      %v1193 = vpop.f32.mrf.mxu0
      %v1194 = vadd.f32 %v1106, %v1193
      %v1195 = vpop.f32.mrf.mxu0
      %1196 = vmatprep.mubr.bf16.mxu0 0
      %1197 = vmatmul.mubr.bf16.gmra.mxu0 %v997
      %v1198 = vpop.f32.mrf.mxu0
      %v1199 = vadd.f32 %v1106, %v1198
      %v1200 = vpop.f32.mrf.mxu0
      %v1201 = vpop.f32.mrf.mxu0
      %v1202 = vadd.f32 %v1106, %v1201
      %v1203 = vpop.f32.mrf.mxu0
      %1204 = vmatprep.mubr.bf16.mxu0 0
      %1205 = vmatmul.mubr.bf16.gmra.mxu0 %v1000
      %v1206 = vpop.f32.mrf.mxu0
      %v1207 = vadd.f32 %v1106, %v1206
      %v1208 = vpop.f32.mrf.mxu0
      %v1209 = vpop.f32.mrf.mxu0
      %v1210 = vadd.f32 %v1106, %v1209
      %v1211 = vpop.f32.mrf.mxu0
      %1212 = vmatprep.mubr.bf16.mxu0 0
      %1213 = vmatmul.mubr.bf16.gmra.mxu0 %v1003
      %v1214 = vpop.f32.mrf.mxu0
      %v1215 = vadd.f32 %v1106, %v1214
      %v1216 = vpop.f32.mrf.mxu0
      %v1217 = vpop.f32.mrf.mxu0
      %v1218 = vpop.f32.mrf.mxu0
      %1219 = vdwg.mxu0
      %v1220 = vmul.f32 %v1040, %v765
      %v1221 = vmul.f32 %v1043, %v768
      %v1222 = vmul.f32 %v1048, %v773
      %v1223 = vmul.f32 %v1051, %v776
      %v1224 = vmul.f32 %v1056, %v781
      %v1225 = vmul.f32 %v1059, %v784
      %v1226 = vmul.f32 %v1064, %v789
      %v1227 = vmul.f32 %v1067, %v792
      %v1228 = vmul.f32 %v1072, %v797
      %v1229 = vmul.f32 %v1075, %v800
      %v1230 = vmul.f32 %v1080, %v805
      %v1231 = vmul.f32 %v1083, %v808
      %v1232 = vmul.f32 %v1088, %v813
      %v1233 = vpack.c.bf16 %v1221, %v1220
      %v1234 = vpack.c.bf16 %v1223, %v1222
      %v1235 = vpack.c.bf16 %v1225, %v1224
      %v1236 = vpack.c.bf16 %v1227, %v1226
      %v1237 = vpack.c.bf16 %v1229, %v1228
      %v1238 = vpack.c.bf16 %v1231, %v1230
      %v1239 = vpack.c.bf16 %v1232, %v1232
      %v1240 = vld [vmem:[%s10] sm:$0xf]
      %v1241 = vld [vmem:[%s10 + $0x4] sm:$0xf]
      %v1242 = vld [vmem:[%s10 + $0x8] sm:$0xf]
      %v1243 = vld [vmem:[%s10 + $0xc] sm:$0xf]
      %v1244 = vld [vmem:[%s10 + $0x10] sm:$0xf]
      %v1245 = vld [vmem:[%s10 + $0x14] sm:$0xf]
      %v1246 = vld [vmem:[%s10 + $0x18] sm:$0xf]
      %v1247 = vld [vmem:[%s10 + $0x1c] sm:$0xf]
      %v1248 = vld [vmem:[%s11] sm:$0x1]
      %v1250 = vlaneseq
      %v1251 = vshrl.u32 %v1250, 7
      %v1252 = vsub.s32 0, %v1251
      %v1253 = vrot.slane %v1248, %v1252
      %v1263 = vunpack.c.l.b16 %v1240
      %v1264 = vunpack.c.l.b16 %v1241
      %v1265 = vunpack.c.l.b16 %v1242
      %v1266 = vunpack.c.l.b16 %v1243
      %v1267 = vunpack.c.l.b16 %v1244
      %v1268 = vunpack.c.l.b16 %v1245
      %v1269 = vunpack.c.l.b16 %v1246
      %v1270 = vunpack.c.l.b16 %v1247
      %v1271 = vpack.c.b16 %v1264, %v1263
      %v1272 = vpack.c.b16 %v1266, %v1265
      %v1273 = vpack.c.b16 %v1268, %v1267
      %v1274 = vpack.c.b16 %v1270, %v1269
      %v1280 = vsel %vm708, %v1233, 0
      %v1283 = vsel %vm708, %v1234, 0
      %v1286 = vsel %vm708, %v1235, 0
      %v1289 = vsel %vm708, %v1236, 0
      %v1292 = vsel %vm708, %v1237, 0
      %v1295 = vsel %vm708, %v1238, 0
      %v1298 = vsel %vm708, %v1239, 0
      %1300 = vmatprep.subr.bf16.mxu0 0
      %1301 = vmatpush1.bf16.msra.mxu0 0
      %1302 = vmatprep.subr.bf16.mxu0 0
      %1303 = vmatpush1.bf16.msra.mxu0 0
      %1304 = vmatprep.subr.bf16.mxu0 0
      %1305 = vmatpush1.bf16.msra.mxu0 0
      %1306 = vmatprep.subr.bf16.mxu0 0
      %1307 = vmatpush1.bf16.msra.mxu0 0
      %1308 = vmatprep.subr.bf16.mxu0 0
      %1309 = vmatpush1.bf16.msra.mxu0 %v1274
      %1310 = vmatprep.subr.bf16.mxu0 0
      %1311 = vmatpush1.bf16.msra.mxu0 %v1273
      %1312 = vmatprep.subr.bf16.mxu0 0
      %1313 = vmatpush1.bf16.msra.mxu0 %v1272
      %1314 = vmatprep.subr.bf16.mxu0 0
      %1315 = vmatpush1.bf16.msra.mxu0 %v1271
      %1316 = vmatprep.subr.bf16.mxu0 0
      %1317 = vmatpush2.bf16.msra.mxu0 0
      %1318 = vmatprep.subr.bf16.mxu0 0
      %1319 = vmatpush2.bf16.msra.mxu0 0
      %1320 = vmatprep.subr.bf16.mxu0 0
      %1321 = vmatpush2.bf16.msra.mxu0 0
      %1322 = vmatprep.subr.bf16.mxu0 0
      %1323 = vmatpush2.bf16.msra.mxu0 0
      %1324 = vmatprep.subr.bf16.mxu0 0
      %1325 = vmatpush2.bf16.msra.mxu0 0
      %1326 = vmatprep.subr.bf16.mxu0 0
      %1327 = vmatpush2.bf16.msra.mxu0 0
      %1328 = vmatprep.subr.bf16.mxu0 0
      %1329 = vmatpush2.bf16.msra.mxu0 0
      %1330 = vmatprep.subr.bf16.mxu0 0
      %1331 = vmatpush2.bf16.msra.mxu0 0
      %1332 = vmatprep.mubr.bf16.mxu0 0
      %1333 = vmatmul.mubr.bf16.gmra.mxu0 %v1280
      %v1334 = vpop.f32.mrf.mxu0
      %v1335 = vadd.f32 %v1253, %v1334
      %v1336 = vpop.f32.mrf.mxu0
      %v1337 = vpop.f32.mrf.mxu0
      %v1338 = vadd.f32 %v1253, %v1337
      %v1339 = vpop.f32.mrf.mxu0
      %1340 = vmatprep.mubr.bf16.mxu0 0
      %1341 = vmatmul.mubr.bf16.gmra.mxu0 %v1283
      %v1342 = vpop.f32.mrf.mxu0
      %v1343 = vadd.f32 %v1253, %v1342
      %v1344 = vpop.f32.mrf.mxu0
      %v1345 = vpop.f32.mrf.mxu0
      %v1346 = vadd.f32 %v1253, %v1345
      %v1347 = vpop.f32.mrf.mxu0
      %1348 = vmatprep.mubr.bf16.mxu0 0
      %1349 = vmatmul.mubr.bf16.gmra.mxu0 %v1286
      %v1350 = vpop.f32.mrf.mxu0
      %v1351 = vadd.f32 %v1253, %v1350
      %v1352 = vpop.f32.mrf.mxu0
      %v1353 = vpop.f32.mrf.mxu0
      %v1354 = vadd.f32 %v1253, %v1353
      %v1355 = vpop.f32.mrf.mxu0
      %1356 = vmatprep.mubr.bf16.mxu0 0
      %1357 = vmatmul.mubr.bf16.gmra.mxu0 %v1289
      %v1358 = vpop.f32.mrf.mxu0
      %v1359 = vadd.f32 %v1253, %v1358
      %v1360 = vpop.f32.mrf.mxu0
      %v1361 = vpop.f32.mrf.mxu0
      %v1362 = vadd.f32 %v1253, %v1361
      %v1363 = vpop.f32.mrf.mxu0
      %1364 = vmatprep.mubr.bf16.mxu0 0
      %1365 = vmatmul.mubr.bf16.gmra.mxu0 %v1292
      %v1366 = vpop.f32.mrf.mxu0
      %v1367 = vadd.f32 %v1253, %v1366
      %v1368 = vpop.f32.mrf.mxu0
      %v1369 = vpop.f32.mrf.mxu0
      %v1370 = vadd.f32 %v1253, %v1369
      %v1371 = vpop.f32.mrf.mxu0
      %1372 = vmatprep.mubr.bf16.mxu0 0
      %1373 = vmatmul.mubr.bf16.gmra.mxu0 %v1295
      %v1374 = vpop.f32.mrf.mxu0
      %v1375 = vadd.f32 %v1253, %v1374
      %v1376 = vpop.f32.mrf.mxu0
      %v1377 = vpop.f32.mrf.mxu0
      %v1378 = vadd.f32 %v1253, %v1377
      %v1379 = vpop.f32.mrf.mxu0
      %1380 = vmatprep.mubr.bf16.mxu0 0
      %1381 = vmatmul.mubr.bf16.gmra.mxu0 %v1298
      %v1382 = vpop.f32.mrf.mxu0
      %v1383 = vadd.f32 %v1253, %v1382
      %v1384 = vpop.f32.mrf.mxu0
      %v1385 = vpop.f32.mrf.mxu0
      %v1386 = vpop.f32.mrf.mxu0
      %1387 = vdwg.mxu0
      %v1388 = vld [vmem:[%s12] sm:$0x1]
      %v1389 = vld [vmem:[%s12 + $0x1] sm:$0x1]
      %v1390 = vsel %vm708, %v1335, 0.0
      %1391 = vadd.xlane.f32.xlu0 %v1390
      %v1392 = vpop.xlane.xlu0 %1391
      %v1393 = vsel %vm708, %v1338, 0.0
      %1394 = vadd.xlane.f32.xlu0 %v1393
      %v1395 = vpop.xlane.xlu0 %1394
      %v1396 = vsel %vm708, %v1343, 0.0
      %1397 = vadd.xlane.f32.xlu0 %v1396
      %v1398 = vpop.xlane.xlu0 %1397
      %v1399 = vsel %vm708, %v1346, 0.0
      %1400 = vadd.xlane.f32.xlu0 %v1399
      %v1401 = vpop.xlane.xlu0 %1400
      %v1402 = vsel %vm708, %v1351, 0.0
      %1403 = vadd.xlane.f32.xlu0 %v1402
      %v1404 = vpop.xlane.xlu0 %1403
      %v1405 = vsel %vm708, %v1354, 0.0
      %1406 = vadd.xlane.f32.xlu0 %v1405
      %v1407 = vpop.xlane.xlu0 %1406
      %v1408 = vsel %vm708, %v1359, 0.0
      %1409 = vadd.xlane.f32.xlu0 %v1408
      %v1410 = vpop.xlane.xlu0 %1409
      %v1411 = vsel %vm708, %v1362, 0.0
      %1412 = vadd.xlane.f32.xlu0 %v1411
      %v1413 = vpop.xlane.xlu0 %1412
      %v1414 = vsel %vm708, %v1367, 0.0
      %1415 = vadd.xlane.f32.xlu0 %v1414
      %v1416 = vpop.xlane.xlu0 %1415
      %v1417 = vsel %vm708, %v1370, 0.0
      %1418 = vadd.xlane.f32.xlu0 %v1417
      %v1419 = vpop.xlane.xlu0 %1418
      %v1420 = vsel %vm708, %v1375, 0.0
      %1421 = vadd.xlane.f32.xlu0 %v1420
      %v1422 = vpop.xlane.xlu0 %1421
      %v1423 = vsel %vm708, %v1378, 0.0
      %1424 = vadd.xlane.f32.xlu0 %v1423
      %v1425 = vpop.xlane.xlu0 %1424
      %v1426 = vsel %vm708, %v1383, 0.0
      %1427 = vadd.xlane.f32.xlu0 %v1426
      %v1428 = vpop.xlane.xlu0 %1427
      %v1429 = vrcp.pop 64.0
      %v1430 = vmul.f32 %v1392, %v1429
      %v1431 = vmul.f32 %v1395, %v1429
      %v1432 = vmul.f32 %v1398, %v1429
      %v1433 = vmul.f32 %v1401, %v1429
      %v1434 = vmul.f32 %v1404, %v1429
      %v1435 = vmul.f32 %v1407, %v1429
      %v1436 = vmul.f32 %v1410, %v1429
      %v1437 = vmul.f32 %v1413, %v1429
      %v1438 = vmul.f32 %v1416, %v1429
      %v1439 = vmul.f32 %v1419, %v1429
      %v1440 = vmul.f32 %v1422, %v1429
      %v1441 = vmul.f32 %v1425, %v1429
      %v1442 = vmul.f32 %v1428, %v1429
      %v1443 = vsub.f32 %v1335, %v1430
      %v1444 = vsub.f32 %v1338, %v1431
      %v1445 = vsub.f32 %v1343, %v1432
      %v1446 = vsub.f32 %v1346, %v1433
      %v1447 = vsub.f32 %v1351, %v1434
      %v1448 = vsub.f32 %v1354, %v1435
      %v1449 = vsub.f32 %v1359, %v1436
      %v1450 = vsub.f32 %v1362, %v1437
      %v1451 = vsub.f32 %v1367, %v1438
      %v1452 = vsub.f32 %v1370, %v1439
      %v1453 = vsub.f32 %v1375, %v1440
      %v1454 = vsub.f32 %v1378, %v1441
      %v1455 = vsub.f32 %v1383, %v1442
      %v1456 = vmul.f32 %v1443, %v1443
      %v1457 = vmul.f32 %v1444, %v1444
      %v1458 = vmul.f32 %v1445, %v1445
      %v1459 = vmul.f32 %v1446, %v1446
      %v1460 = vmul.f32 %v1447, %v1447
      %v1461 = vmul.f32 %v1448, %v1448
      %v1462 = vmul.f32 %v1449, %v1449
      %v1463 = vmul.f32 %v1450, %v1450
      %v1464 = vmul.f32 %v1451, %v1451
      %v1465 = vmul.f32 %v1452, %v1452
      %v1466 = vmul.f32 %v1453, %v1453
      %v1467 = vmul.f32 %v1454, %v1454
      %v1468 = vmul.f32 %v1455, %v1455
      %v1469 = vsel %vm708, %v1456, 0.0
      %1470 = vadd.xlane.f32.xlu0 %v1469
      %v1471 = vpop.xlane.xlu0 %1470
      %v1472 = vsel %vm708, %v1457, 0.0
      %1473 = vadd.xlane.f32.xlu0 %v1472
      %v1474 = vpop.xlane.xlu0 %1473
      %v1475 = vsel %vm708, %v1458, 0.0
      %1476 = vadd.xlane.f32.xlu0 %v1475
      %v1477 = vpop.xlane.xlu0 %1476
      %v1478 = vsel %vm708, %v1459, 0.0
      %1479 = vadd.xlane.f32.xlu0 %v1478
      %v1480 = vpop.xlane.xlu0 %1479
      %v1481 = vsel %vm708, %v1460, 0.0
      %1482 = vadd.xlane.f32.xlu0 %v1481
      %v1483 = vpop.xlane.xlu0 %1482
      %v1484 = vsel %vm708, %v1461, 0.0
      %1485 = vadd.xlane.f32.xlu0 %v1484
      %v1486 = vpop.xlane.xlu0 %1485
      %v1487 = vsel %vm708, %v1462, 0.0
      %1488 = vadd.xlane.f32.xlu0 %v1487
      %v1489 = vpop.xlane.xlu0 %1488
      %v1490 = vsel %vm708, %v1463, 0.0
      %1491 = vadd.xlane.f32.xlu0 %v1490
      %v1492 = vpop.xlane.xlu0 %1491
      %v1493 = vsel %vm708, %v1464, 0.0
      %1494 = vadd.xlane.f32.xlu0 %v1493
      %v1495 = vpop.xlane.xlu0 %1494
      %v1496 = vsel %vm708, %v1465, 0.0
      %1497 = vadd.xlane.f32.xlu0 %v1496
      %v1498 = vpop.xlane.xlu0 %1497
      %v1499 = vsel %vm708, %v1466, 0.0
      %1500 = vadd.xlane.f32.xlu0 %v1499
      %v1501 = vpop.xlane.xlu0 %1500
      %v1502 = vsel %vm708, %v1467, 0.0
      %1503 = vadd.xlane.f32.xlu0 %v1502
      %v1504 = vpop.xlane.xlu0 %1503
      %v1505 = vsel %vm708, %v1468, 0.0
      %1506 = vadd.xlane.f32.xlu0 %v1505
      %v1507 = vpop.xlane.xlu0 %1506
      %v1508 = vmul.f32 %v1471, %v1429
      %v1509 = vmul.f32 %v1474, %v1429
      %v1510 = vmul.f32 %v1477, %v1429
      %v1511 = vmul.f32 %v1480, %v1429
      %v1512 = vmul.f32 %v1483, %v1429
      %v1513 = vmul.f32 %v1486, %v1429
      %v1514 = vmul.f32 %v1489, %v1429
      %v1515 = vmul.f32 %v1492, %v1429
      %v1516 = vmul.f32 %v1495, %v1429
      %v1517 = vmul.f32 %v1498, %v1429
      %v1518 = vmul.f32 %v1501, %v1429
      %v1519 = vmul.f32 %v1504, %v1429
      %v1520 = vmul.f32 %v1507, %v1429
      %v1521 = vadd.f32 %v1508, 1e-05
      %v1522 = vadd.f32 %v1509, 1e-05
      %v1523 = vadd.f32 %v1510, 1e-05
      %v1524 = vadd.f32 %v1511, 1e-05
      %v1525 = vadd.f32 %v1512, 1e-05
      %v1526 = vadd.f32 %v1513, 1e-05
      %v1527 = vadd.f32 %v1514, 1e-05
      %v1528 = vadd.f32 %v1515, 1e-05
      %v1529 = vadd.f32 %v1516, 1e-05
      %v1530 = vadd.f32 %v1517, 1e-05
      %v1531 = vadd.f32 %v1518, 1e-05
      %v1532 = vadd.f32 %v1519, 1e-05
      %v1533 = vadd.f32 %v1520, 1e-05
      %v1534 = vrsqrt.pop %v1521
      %v1535 = vrsqrt.pop %v1522
      %v1536 = vrsqrt.pop %v1523
      %v1537 = vrsqrt.pop %v1524
      %v1538 = vrsqrt.pop %v1525
      %v1539 = vrsqrt.pop %v1526
      %v1540 = vrsqrt.pop %v1527
      %v1541 = vrsqrt.pop %v1528
      %v1542 = vrsqrt.pop %v1529
      %v1543 = vrsqrt.pop %v1530
      %v1544 = vrsqrt.pop %v1531
      %v1545 = vrsqrt.pop %v1532
      %v1546 = vrsqrt.pop %v1533
      %v1547 = vmul.f32 %v1443, %v1534
      %v1548 = vmul.f32 %v1444, %v1535
      %v1549 = vmul.f32 %v1445, %v1536
      %v1550 = vmul.f32 %v1446, %v1537
      %v1551 = vmul.f32 %v1447, %v1538
      %v1552 = vmul.f32 %v1448, %v1539
      %v1553 = vmul.f32 %v1449, %v1540
      %v1554 = vmul.f32 %v1450, %v1541
      %v1555 = vmul.f32 %v1451, %v1542
      %v1556 = vmul.f32 %v1452, %v1543
      %v1557 = vmul.f32 %v1453, %v1544
      %v1558 = vmul.f32 %v1454, %v1545
      %v1559 = vmul.f32 %v1455, %v1546
      %v1560 = vlaneseq
      %v1561 = vshrl.u32 %v1560, 7
      %v1562 = vsub.s32 0, %v1561
      %v1563 = vrot.slane %v1388, %v1562
      %v1564 = vmul.f32 %v1547, %v1563
      %v1565 = vmul.f32 %v1548, %v1563
      %v1566 = vmul.f32 %v1549, %v1563
      %v1567 = vmul.f32 %v1550, %v1563
      %v1568 = vmul.f32 %v1551, %v1563
      %v1569 = vmul.f32 %v1552, %v1563
      %v1570 = vmul.f32 %v1553, %v1563
      %v1571 = vmul.f32 %v1554, %v1563
      %v1572 = vmul.f32 %v1555, %v1563
      %v1573 = vmul.f32 %v1556, %v1563
      %v1574 = vmul.f32 %v1557, %v1563
      %v1575 = vmul.f32 %v1558, %v1563
      %v1576 = vmul.f32 %v1559, %v1563
      %v1577 = vlaneseq
      %v1578 = vshrl.u32 %v1577, 7
      %v1579 = vsub.s32 0, %v1578
      %v1580 = vrot.slane %v1389, %v1579
      %v1581 = vadd.f32 %v1564, %v1580
      %v1582 = vadd.f32 %v1565, %v1580
      %v1583 = vadd.f32 %v1566, %v1580
      %v1584 = vadd.f32 %v1567, %v1580
      %v1585 = vadd.f32 %v1568, %v1580
      %v1586 = vadd.f32 %v1569, %v1580
      %v1587 = vadd.f32 %v1570, %v1580
      %v1588 = vadd.f32 %v1571, %v1580
      %v1589 = vadd.f32 %v1572, %v1580
      %v1590 = vadd.f32 %v1573, %v1580
      %v1591 = vadd.f32 %v1574, %v1580
      %v1592 = vadd.f32 %v1575, %v1580
      %v1593 = vadd.f32 %v1576, %v1580
      %v1594 = vld [vmem:[%s13] sm:$0x1]
      %v1595 = vld [vmem:[%s13 + $0x1] sm:$0x1]
      %1609 = vrot.lane.b32.xlu0 %v1335, 64
      %v1610 = vpop.permute.xlu0 %1609
      %1611 = vrot.lane.b32.xlu0 %v1338, 64
      %v1612 = vpop.permute.xlu0 %1611
      %1613 = vrot.lane.b32.xlu0 %v1343, 64
      %v1614 = vpop.permute.xlu0 %1613
      %1615 = vrot.lane.b32.xlu0 %v1346, 64
      %v1616 = vpop.permute.xlu0 %1615
      %1617 = vrot.lane.b32.xlu0 %v1351, 64
      %v1618 = vpop.permute.xlu0 %1617
      %1619 = vrot.lane.b32.xlu0 %v1354, 64
      %v1620 = vpop.permute.xlu0 %1619
      %1621 = vrot.lane.b32.xlu0 %v1359, 64
      %v1622 = vpop.permute.xlu0 %1621
      %1623 = vrot.lane.b32.xlu0 %v1362, 64
      %v1624 = vpop.permute.xlu0 %1623
      %1625 = vrot.lane.b32.xlu0 %v1367, 64
      %v1626 = vpop.permute.xlu0 %1625
      %1627 = vrot.lane.b32.xlu0 %v1370, 64
      %v1628 = vpop.permute.xlu0 %1627
      %1629 = vrot.lane.b32.xlu0 %v1375, 64
      %v1630 = vpop.permute.xlu0 %1629
      %1631 = vrot.lane.b32.xlu0 %v1378, 64
      %v1632 = vpop.permute.xlu0 %1631
      %1633 = vrot.lane.b32.xlu0 %v1383, 64
      %v1634 = vpop.permute.xlu0 %1633
      %v1648 = vsel %vm708, %v1610, 0.0
      %1649 = vadd.xlane.f32.xlu0 %v1648
      %v1650 = vpop.xlane.xlu0 %1649
      %v1651 = vsel %vm708, %v1612, 0.0
      %1652 = vadd.xlane.f32.xlu0 %v1651
      %v1653 = vpop.xlane.xlu0 %1652
      %v1654 = vsel %vm708, %v1614, 0.0
      %1655 = vadd.xlane.f32.xlu0 %v1654
      %v1656 = vpop.xlane.xlu0 %1655
      %v1657 = vsel %vm708, %v1616, 0.0
      %1658 = vadd.xlane.f32.xlu0 %v1657
      %v1659 = vpop.xlane.xlu0 %1658
      %v1660 = vsel %vm708, %v1618, 0.0
      %1661 = vadd.xlane.f32.xlu0 %v1660
      %v1662 = vpop.xlane.xlu0 %1661
      %v1663 = vsel %vm708, %v1620, 0.0
      %1664 = vadd.xlane.f32.xlu0 %v1663
      %v1665 = vpop.xlane.xlu0 %1664
      %v1666 = vsel %vm708, %v1622, 0.0
      %1667 = vadd.xlane.f32.xlu0 %v1666
      %v1668 = vpop.xlane.xlu0 %1667
      %v1669 = vsel %vm708, %v1624, 0.0
      %1670 = vadd.xlane.f32.xlu0 %v1669
      %v1671 = vpop.xlane.xlu0 %1670
      %v1672 = vsel %vm708, %v1626, 0.0
      %1673 = vadd.xlane.f32.xlu0 %v1672
      %v1674 = vpop.xlane.xlu0 %1673
      %v1675 = vsel %vm708, %v1628, 0.0
      %1676 = vadd.xlane.f32.xlu0 %v1675
      %v1677 = vpop.xlane.xlu0 %1676
      %v1678 = vsel %vm708, %v1630, 0.0
      %1679 = vadd.xlane.f32.xlu0 %v1678
      %v1680 = vpop.xlane.xlu0 %1679
      %v1681 = vsel %vm708, %v1632, 0.0
      %1682 = vadd.xlane.f32.xlu0 %v1681
      %v1683 = vpop.xlane.xlu0 %1682
      %v1684 = vsel %vm708, %v1634, 0.0
      %1685 = vadd.xlane.f32.xlu0 %v1684
      %v1686 = vpop.xlane.xlu0 %1685
      %v1687 = vmul.f32 %v1650, %v1429
      %v1688 = vmul.f32 %v1653, %v1429
      %v1689 = vmul.f32 %v1656, %v1429
      %v1690 = vmul.f32 %v1659, %v1429
      %v1691 = vmul.f32 %v1662, %v1429
      %v1692 = vmul.f32 %v1665, %v1429
      %v1693 = vmul.f32 %v1668, %v1429
      %v1694 = vmul.f32 %v1671, %v1429
      %v1695 = vmul.f32 %v1674, %v1429
      %v1696 = vmul.f32 %v1677, %v1429
      %v1697 = vmul.f32 %v1680, %v1429
      %v1698 = vmul.f32 %v1683, %v1429
      %v1699 = vmul.f32 %v1686, %v1429
      %v1700 = vsub.f32 %v1335, %v1687
      %v1701 = vsub.f32 %v1338, %v1688
      %v1702 = vsub.f32 %v1343, %v1689
      %v1703 = vsub.f32 %v1346, %v1690
      %v1704 = vsub.f32 %v1351, %v1691
      %v1705 = vsub.f32 %v1354, %v1692
      %v1706 = vsub.f32 %v1359, %v1693
      %v1707 = vsub.f32 %v1362, %v1694
      %v1708 = vsub.f32 %v1367, %v1695
      %v1709 = vsub.f32 %v1370, %v1696
      %v1710 = vsub.f32 %v1375, %v1697
      %v1711 = vsub.f32 %v1378, %v1698
      %v1712 = vsub.f32 %v1383, %v1699
      %v1713 = vmul.f32 %v1700, %v1700
      %v1714 = vmul.f32 %v1701, %v1701
      %v1715 = vmul.f32 %v1702, %v1702
      %v1716 = vmul.f32 %v1703, %v1703
      %v1717 = vmul.f32 %v1704, %v1704
      %v1718 = vmul.f32 %v1705, %v1705
      %v1719 = vmul.f32 %v1706, %v1706
      %v1720 = vmul.f32 %v1707, %v1707
      %v1721 = vmul.f32 %v1708, %v1708
      %v1722 = vmul.f32 %v1709, %v1709
      %v1723 = vmul.f32 %v1710, %v1710
      %v1724 = vmul.f32 %v1711, %v1711
      %v1725 = vmul.f32 %v1712, %v1712
      %1739 = vrot.lane.b32.xlu0 %v1713, 64
      %v1740 = vpop.permute.xlu0 %1739
      %1741 = vrot.lane.b32.xlu0 %v1714, 64
      %v1742 = vpop.permute.xlu0 %1741
      %1743 = vrot.lane.b32.xlu0 %v1715, 64
      %v1744 = vpop.permute.xlu0 %1743
      %1745 = vrot.lane.b32.xlu0 %v1716, 64
      %v1746 = vpop.permute.xlu0 %1745
      %1747 = vrot.lane.b32.xlu0 %v1717, 64
      %v1748 = vpop.permute.xlu0 %1747
      %1749 = vrot.lane.b32.xlu0 %v1718, 64
      %v1750 = vpop.permute.xlu0 %1749
      %1751 = vrot.lane.b32.xlu0 %v1719, 64
      %v1752 = vpop.permute.xlu0 %1751
      %1753 = vrot.lane.b32.xlu0 %v1720, 64
      %v1754 = vpop.permute.xlu0 %1753
      %1755 = vrot.lane.b32.xlu0 %v1721, 64
      %v1756 = vpop.permute.xlu0 %1755
      %1757 = vrot.lane.b32.xlu0 %v1722, 64
      %v1758 = vpop.permute.xlu0 %1757
      %1759 = vrot.lane.b32.xlu0 %v1723, 64
      %v1760 = vpop.permute.xlu0 %1759
      %1761 = vrot.lane.b32.xlu0 %v1724, 64
      %v1762 = vpop.permute.xlu0 %1761
      %1763 = vrot.lane.b32.xlu0 %v1725, 64
      %v1764 = vpop.permute.xlu0 %1763
      %v1778 = vsel %vm708, %v1740, 0.0
      %1779 = vadd.xlane.f32.xlu0 %v1778
      %v1780 = vpop.xlane.xlu0 %1779
      %v1781 = vsel %vm708, %v1742, 0.0
      %1782 = vadd.xlane.f32.xlu0 %v1781
      %v1783 = vpop.xlane.xlu0 %1782
      %v1784 = vsel %vm708, %v1744, 0.0
      %1785 = vadd.xlane.f32.xlu0 %v1784
      %v1786 = vpop.xlane.xlu0 %1785
      %v1787 = vsel %vm708, %v1746, 0.0
      %1788 = vadd.xlane.f32.xlu0 %v1787
      %v1789 = vpop.xlane.xlu0 %1788
      %v1790 = vsel %vm708, %v1748, 0.0
      %1791 = vadd.xlane.f32.xlu0 %v1790
      %v1792 = vpop.xlane.xlu0 %1791
      %v1793 = vsel %vm708, %v1750, 0.0
      %1794 = vadd.xlane.f32.xlu0 %v1793
      %v1795 = vpop.xlane.xlu0 %1794
      %v1796 = vsel %vm708, %v1752, 0.0
      %1797 = vadd.xlane.f32.xlu0 %v1796
      %v1798 = vpop.xlane.xlu0 %1797
      %v1799 = vsel %vm708, %v1754, 0.0
      %1800 = vadd.xlane.f32.xlu0 %v1799
      %v1801 = vpop.xlane.xlu0 %1800
      %v1802 = vsel %vm708, %v1756, 0.0
      %1803 = vadd.xlane.f32.xlu0 %v1802
      %v1804 = vpop.xlane.xlu0 %1803
      %v1805 = vsel %vm708, %v1758, 0.0
      %1806 = vadd.xlane.f32.xlu0 %v1805
      %v1807 = vpop.xlane.xlu0 %1806
      %v1808 = vsel %vm708, %v1760, 0.0
      %1809 = vadd.xlane.f32.xlu0 %v1808
      %v1810 = vpop.xlane.xlu0 %1809
      %v1811 = vsel %vm708, %v1762, 0.0
      %1812 = vadd.xlane.f32.xlu0 %v1811
      %v1813 = vpop.xlane.xlu0 %1812
      %v1814 = vsel %vm708, %v1764, 0.0
      %1815 = vadd.xlane.f32.xlu0 %v1814
      %v1816 = vpop.xlane.xlu0 %1815
      %v1817 = vmul.f32 %v1780, %v1429
      %v1818 = vmul.f32 %v1783, %v1429
      %v1819 = vmul.f32 %v1786, %v1429
      %v1820 = vmul.f32 %v1789, %v1429
      %v1821 = vmul.f32 %v1792, %v1429
      %v1822 = vmul.f32 %v1795, %v1429
      %v1823 = vmul.f32 %v1798, %v1429
      %v1824 = vmul.f32 %v1801, %v1429
      %v1825 = vmul.f32 %v1804, %v1429
      %v1826 = vmul.f32 %v1807, %v1429
      %v1827 = vmul.f32 %v1810, %v1429
      %v1828 = vmul.f32 %v1813, %v1429
      %v1829 = vmul.f32 %v1816, %v1429
      %v1830 = vadd.f32 %v1817, 1e-05
      %v1831 = vadd.f32 %v1818, 1e-05
      %v1832 = vadd.f32 %v1819, 1e-05
      %v1833 = vadd.f32 %v1820, 1e-05
      %v1834 = vadd.f32 %v1821, 1e-05
      %v1835 = vadd.f32 %v1822, 1e-05
      %v1836 = vadd.f32 %v1823, 1e-05
      %v1837 = vadd.f32 %v1824, 1e-05
      %v1838 = vadd.f32 %v1825, 1e-05
      %v1839 = vadd.f32 %v1826, 1e-05
      %v1840 = vadd.f32 %v1827, 1e-05
      %v1841 = vadd.f32 %v1828, 1e-05
      %v1842 = vadd.f32 %v1829, 1e-05
      %v1843 = vrsqrt.pop %v1830
      %v1844 = vrsqrt.pop %v1831
      %v1845 = vrsqrt.pop %v1832
      %v1846 = vrsqrt.pop %v1833
      %v1847 = vrsqrt.pop %v1834
      %v1848 = vrsqrt.pop %v1835
      %v1849 = vrsqrt.pop %v1836
      %v1850 = vrsqrt.pop %v1837
      %v1851 = vrsqrt.pop %v1838
      %v1852 = vrsqrt.pop %v1839
      %v1853 = vrsqrt.pop %v1840
      %v1854 = vrsqrt.pop %v1841
      %v1855 = vrsqrt.pop %v1842
      %v1856 = vmul.f32 %v1700, %v1843
      %v1857 = vmul.f32 %v1701, %v1844
      %v1858 = vmul.f32 %v1702, %v1845
      %v1859 = vmul.f32 %v1703, %v1846
      %v1860 = vmul.f32 %v1704, %v1847
      %v1861 = vmul.f32 %v1705, %v1848
      %v1862 = vmul.f32 %v1706, %v1849
      %v1863 = vmul.f32 %v1707, %v1850
      %v1864 = vmul.f32 %v1708, %v1851
      %v1865 = vmul.f32 %v1709, %v1852
      %v1866 = vmul.f32 %v1710, %v1853
      %v1867 = vmul.f32 %v1711, %v1854
      %v1868 = vmul.f32 %v1712, %v1855
      %v1869 = vlaneseq
      %v1870 = vshrl.u32 %v1869, 7
      %v1871 = vsub.s32 0, %v1870
      %v1872 = vrot.slane %v1594, %v1871
      %1874 = vrot.lane.b32.xlu0 %v1872, 64
      %v1875 = vpop.permute.xlu0 %1874
      %v1877 = vmul.f32 %v1856, %v1875
      %v1878 = vmul.f32 %v1857, %v1875
      %v1879 = vmul.f32 %v1858, %v1875
      %v1880 = vmul.f32 %v1859, %v1875
      %v1881 = vmul.f32 %v1860, %v1875
      %v1882 = vmul.f32 %v1861, %v1875
      %v1883 = vmul.f32 %v1862, %v1875
      %v1884 = vmul.f32 %v1863, %v1875
      %v1885 = vmul.f32 %v1864, %v1875
      %v1886 = vmul.f32 %v1865, %v1875
      %v1887 = vmul.f32 %v1866, %v1875
      %v1888 = vmul.f32 %v1867, %v1875
      %v1889 = vmul.f32 %v1868, %v1875
      %v1890 = vlaneseq
      %v1891 = vshrl.u32 %v1890, 7
      %v1892 = vsub.s32 0, %v1891
      %v1893 = vrot.slane %v1595, %v1892
      %1895 = vrot.lane.b32.xlu0 %v1893, 64
      %v1896 = vpop.permute.xlu0 %1895
      %v1898 = vadd.f32 %v1877, %v1896
      %v1899 = vadd.f32 %v1878, %v1896
      %v1900 = vadd.f32 %v1879, %v1896
      %v1901 = vadd.f32 %v1880, %v1896
      %v1902 = vadd.f32 %v1881, %v1896
      %v1903 = vadd.f32 %v1882, %v1896
      %v1904 = vadd.f32 %v1883, %v1896
      %v1905 = vadd.f32 %v1884, %v1896
      %v1906 = vadd.f32 %v1885, %v1896
      %v1907 = vadd.f32 %v1886, %v1896
      %v1908 = vadd.f32 %v1887, %v1896
      %v1909 = vadd.f32 %v1888, %v1896
      %v1910 = vadd.f32 %v1889, %v1896
      %v1911 = vxor.u32 %v1581, 2147483648
      %v1912 = vxor.u32 %v1582, 2147483648
      %v1913 = vxor.u32 %v1583, 2147483648
      %v1914 = vxor.u32 %v1584, 2147483648
      %v1915 = vxor.u32 %v1585, 2147483648
      %v1916 = vxor.u32 %v1586, 2147483648
      %v1917 = vxor.u32 %v1587, 2147483648
      %v1918 = vxor.u32 %v1588, 2147483648
      %v1919 = vxor.u32 %v1589, 2147483648
      %v1920 = vxor.u32 %v1590, 2147483648
      %v1921 = vxor.u32 %v1591, 2147483648
      %v1922 = vxor.u32 %v1592, 2147483648
      %v1923 = vxor.u32 %v1593, 2147483648
      %v1924 = vmul.f32 %v1911, 1.442695
      %v1925 = vpow.pop %v1924
      %v1926 = vmul.f32 %v1912, 1.442695
      %v1927 = vpow.pop %v1926
      %v1928 = vmul.f32 %v1913, 1.442695
      %v1929 = vpow.pop %v1928
      %v1930 = vmul.f32 %v1914, 1.442695
      %v1931 = vpow.pop %v1930
      %v1932 = vmul.f32 %v1915, 1.442695
      %v1933 = vpow.pop %v1932
      %v1934 = vmul.f32 %v1916, 1.442695
      %v1935 = vpow.pop %v1934
      %v1936 = vmul.f32 %v1917, 1.442695
      %v1937 = vpow.pop %v1936
      %v1938 = vmul.f32 %v1918, 1.442695
      %v1939 = vpow.pop %v1938
      %v1940 = vmul.f32 %v1919, 1.442695
      %v1941 = vpow.pop %v1940
      %v1942 = vmul.f32 %v1920, 1.442695
      %v1943 = vpow.pop %v1942
      %v1944 = vmul.f32 %v1921, 1.442695
      %v1945 = vpow.pop %v1944
      %v1946 = vmul.f32 %v1922, 1.442695
      %v1947 = vpow.pop %v1946
      %v1948 = vmul.f32 %v1923, 1.442695
      %v1949 = vpow.pop %v1948
      %v1950 = vadd.f32 %v1925, 1.0
      %v1951 = vadd.f32 %v1927, 1.0
      %v1952 = vadd.f32 %v1929, 1.0
      %v1953 = vadd.f32 %v1931, 1.0
      %v1954 = vadd.f32 %v1933, 1.0
      %v1955 = vadd.f32 %v1935, 1.0
      %v1956 = vadd.f32 %v1937, 1.0
      %v1957 = vadd.f32 %v1939, 1.0
      %v1958 = vadd.f32 %v1941, 1.0
      %v1959 = vadd.f32 %v1943, 1.0
      %v1960 = vadd.f32 %v1945, 1.0
      %v1961 = vadd.f32 %v1947, 1.0
      %v1962 = vadd.f32 %v1949, 1.0
      %v1963 = vrcp.pop %v1950
      %v1964 = vmul.f32 1.0, %v1963
      %v1965 = vrcp.pop %v1951
      %v1966 = vmul.f32 1.0, %v1965
      %v1967 = vrcp.pop %v1952
      %v1968 = vmul.f32 1.0, %v1967
      %v1969 = vrcp.pop %v1953
      %v1970 = vmul.f32 1.0, %v1969
      %v1971 = vrcp.pop %v1954
      %v1972 = vmul.f32 1.0, %v1971
      %v1973 = vrcp.pop %v1955
      %v1974 = vmul.f32 1.0, %v1973
      %v1975 = vrcp.pop %v1956
      %v1976 = vmul.f32 1.0, %v1975
      %v1977 = vrcp.pop %v1957
      %v1978 = vmul.f32 1.0, %v1977
      %v1979 = vrcp.pop %v1958
      %v1980 = vmul.f32 1.0, %v1979
      %v1981 = vrcp.pop %v1959
      %v1982 = vmul.f32 1.0, %v1981
      %v1983 = vrcp.pop %v1960
      %v1984 = vmul.f32 1.0, %v1983
      %v1985 = vrcp.pop %v1961
      %v1986 = vmul.f32 1.0, %v1985
      %v1987 = vrcp.pop %v1962
      %v1988 = vmul.f32 1.0, %v1987
      %v1989 = vxor.u32 %v1898, 2147483648
      %v1990 = vxor.u32 %v1899, 2147483648
      %v1991 = vxor.u32 %v1900, 2147483648
      %v1992 = vxor.u32 %v1901, 2147483648
      %v1993 = vxor.u32 %v1902, 2147483648
      %v1994 = vxor.u32 %v1903, 2147483648
      %v1995 = vxor.u32 %v1904, 2147483648
      %v1996 = vxor.u32 %v1905, 2147483648
      %v1997 = vxor.u32 %v1906, 2147483648
      %v1998 = vxor.u32 %v1907, 2147483648
      %v1999 = vxor.u32 %v1908, 2147483648
      %v2000 = vxor.u32 %v1909, 2147483648
      %v2001 = vxor.u32 %v1910, 2147483648
      %v2002 = vmul.f32 %v1989, 1.442695
      %v2003 = vpow.pop %v2002
      %v2004 = vmul.f32 %v1990, 1.442695
      %v2005 = vpow.pop %v2004
      %v2006 = vmul.f32 %v1991, 1.442695
      %v2007 = vpow.pop %v2006
      %v2008 = vmul.f32 %v1992, 1.442695
      %v2009 = vpow.pop %v2008
      %v2010 = vmul.f32 %v1993, 1.442695
      %v2011 = vpow.pop %v2010
      %v2012 = vmul.f32 %v1994, 1.442695
      %v2013 = vpow.pop %v2012
      %v2014 = vmul.f32 %v1995, 1.442695
      %v2015 = vpow.pop %v2014
      %v2016 = vmul.f32 %v1996, 1.442695
      %v2017 = vpow.pop %v2016
      %v2018 = vmul.f32 %v1997, 1.442695
      %v2019 = vpow.pop %v2018
      %v2020 = vmul.f32 %v1998, 1.442695
      %v2021 = vpow.pop %v2020
      %v2022 = vmul.f32 %v1999, 1.442695
      %v2023 = vpow.pop %v2022
      %v2024 = vmul.f32 %v2000, 1.442695
      %v2025 = vpow.pop %v2024
      %v2026 = vmul.f32 %v2001, 1.442695
      %v2027 = vpow.pop %v2026
      %v2028 = vadd.f32 %v2003, 1.0
      %v2029 = vadd.f32 %v2005, 1.0
      %v2030 = vadd.f32 %v2007, 1.0
      %v2031 = vadd.f32 %v2009, 1.0
      %v2032 = vadd.f32 %v2011, 1.0
      %v2033 = vadd.f32 %v2013, 1.0
      %v2034 = vadd.f32 %v2015, 1.0
      %v2035 = vadd.f32 %v2017, 1.0
      %v2036 = vadd.f32 %v2019, 1.0
      %v2037 = vadd.f32 %v2021, 1.0
      %v2038 = vadd.f32 %v2023, 1.0
      %v2039 = vadd.f32 %v2025, 1.0
      %v2040 = vadd.f32 %v2027, 1.0
      %v2041 = vrcp.pop %v2028
      %v2042 = vmul.f32 1.0, %v2041
      %v2043 = vrcp.pop %v2029
      %v2044 = vmul.f32 1.0, %v2043
      %v2045 = vrcp.pop %v2030
      %v2046 = vmul.f32 1.0, %v2045
      %v2047 = vrcp.pop %v2031
      %v2048 = vmul.f32 1.0, %v2047
      %v2049 = vrcp.pop %v2032
      %v2050 = vmul.f32 1.0, %v2049
      %v2051 = vrcp.pop %v2033
      %v2052 = vmul.f32 1.0, %v2051
      %v2053 = vrcp.pop %v2034
      %v2054 = vmul.f32 1.0, %v2053
      %v2055 = vrcp.pop %v2035
      %v2056 = vmul.f32 1.0, %v2055
      %v2057 = vrcp.pop %v2036
      %v2058 = vmul.f32 1.0, %v2057
      %v2059 = vrcp.pop %v2037
      %v2060 = vmul.f32 1.0, %v2059
      %v2061 = vrcp.pop %v2038
      %v2062 = vmul.f32 1.0, %v2061
      %v2063 = vrcp.pop %v2039
      %v2064 = vmul.f32 1.0, %v2063
      %v2065 = vrcp.pop %v2040
      %v2066 = vmul.f32 1.0, %v2065
      %v2067 = vld [vmem:[%s14] sm:$0x1]
      %v2068 = vld [vmem:[%s14 + $0x1] sm:$0x1]
      %v2069 = vsel %vm708, %v892, 0.0
      %2070 = vadd.xlane.f32.xlu0 %v2069
      %v2071 = vpop.xlane.xlu0 %2070
      %v2072 = vsel %vm708, %v895, 0.0
      %2073 = vadd.xlane.f32.xlu0 %v2072
      %v2074 = vpop.xlane.xlu0 %2073
      %v2075 = vsel %vm708, %v900, 0.0
      %2076 = vadd.xlane.f32.xlu0 %v2075
      %v2077 = vpop.xlane.xlu0 %2076
      %v2078 = vsel %vm708, %v903, 0.0
      %2079 = vadd.xlane.f32.xlu0 %v2078
      %v2080 = vpop.xlane.xlu0 %2079
      %v2081 = vsel %vm708, %v908, 0.0
      %2082 = vadd.xlane.f32.xlu0 %v2081
      %v2083 = vpop.xlane.xlu0 %2082
      %v2084 = vsel %vm708, %v911, 0.0
      %2085 = vadd.xlane.f32.xlu0 %v2084
      %v2086 = vpop.xlane.xlu0 %2085
      %v2087 = vsel %vm708, %v916, 0.0
      %2088 = vadd.xlane.f32.xlu0 %v2087
      %v2089 = vpop.xlane.xlu0 %2088
      %v2090 = vsel %vm708, %v919, 0.0
      %2091 = vadd.xlane.f32.xlu0 %v2090
      %v2092 = vpop.xlane.xlu0 %2091
      %v2093 = vsel %vm708, %v924, 0.0
      %2094 = vadd.xlane.f32.xlu0 %v2093
      %v2095 = vpop.xlane.xlu0 %2094
      %v2096 = vsel %vm708, %v927, 0.0
      %2097 = vadd.xlane.f32.xlu0 %v2096
      %v2098 = vpop.xlane.xlu0 %2097
      %v2099 = vsel %vm708, %v932, 0.0
      %2100 = vadd.xlane.f32.xlu0 %v2099
      %v2101 = vpop.xlane.xlu0 %2100
      %v2102 = vsel %vm708, %v935, 0.0
      %2103 = vadd.xlane.f32.xlu0 %v2102
      %v2104 = vpop.xlane.xlu0 %2103
      %v2105 = vsel %vm708, %v940, 0.0
      %2106 = vadd.xlane.f32.xlu0 %v2105
      %v2107 = vpop.xlane.xlu0 %2106
      %v2108 = vmul.f32 %v2071, %v1429
      %v2109 = vmul.f32 %v2074, %v1429
      %v2110 = vmul.f32 %v2077, %v1429
      %v2111 = vmul.f32 %v2080, %v1429
      %v2112 = vmul.f32 %v2083, %v1429
      %v2113 = vmul.f32 %v2086, %v1429
      %v2114 = vmul.f32 %v2089, %v1429
      %v2115 = vmul.f32 %v2092, %v1429
      %v2116 = vmul.f32 %v2095, %v1429
      %v2117 = vmul.f32 %v2098, %v1429
      %v2118 = vmul.f32 %v2101, %v1429
      %v2119 = vmul.f32 %v2104, %v1429
      %v2120 = vmul.f32 %v2107, %v1429
      %v2121 = vsub.f32 %v892, %v2108
      %v2122 = vsub.f32 %v895, %v2109
      %v2123 = vsub.f32 %v900, %v2110
      %v2124 = vsub.f32 %v903, %v2111
      %v2125 = vsub.f32 %v908, %v2112
      %v2126 = vsub.f32 %v911, %v2113
      %v2127 = vsub.f32 %v916, %v2114
      %v2128 = vsub.f32 %v919, %v2115
      %v2129 = vsub.f32 %v924, %v2116
      %v2130 = vsub.f32 %v927, %v2117
      %v2131 = vsub.f32 %v932, %v2118
      %v2132 = vsub.f32 %v935, %v2119
      %v2133 = vsub.f32 %v940, %v2120
      %v2134 = vmul.f32 %v2121, %v2121
      %v2135 = vmul.f32 %v2122, %v2122
      %v2136 = vmul.f32 %v2123, %v2123
      %v2137 = vmul.f32 %v2124, %v2124
      %v2138 = vmul.f32 %v2125, %v2125
      %v2139 = vmul.f32 %v2126, %v2126
      %v2140 = vmul.f32 %v2127, %v2127
      %v2141 = vmul.f32 %v2128, %v2128
      %v2142 = vmul.f32 %v2129, %v2129
      %v2143 = vmul.f32 %v2130, %v2130
      %v2144 = vmul.f32 %v2131, %v2131
      %v2145 = vmul.f32 %v2132, %v2132
      %v2146 = vmul.f32 %v2133, %v2133
      %v2147 = vsel %vm708, %v2134, 0.0
      %2148 = vadd.xlane.f32.xlu0 %v2147
      %v2149 = vpop.xlane.xlu0 %2148
      %v2150 = vsel %vm708, %v2135, 0.0
      %2151 = vadd.xlane.f32.xlu0 %v2150
      %v2152 = vpop.xlane.xlu0 %2151
      %v2153 = vsel %vm708, %v2136, 0.0
      %2154 = vadd.xlane.f32.xlu0 %v2153
      %v2155 = vpop.xlane.xlu0 %2154
      %v2156 = vsel %vm708, %v2137, 0.0
      %2157 = vadd.xlane.f32.xlu0 %v2156
      %v2158 = vpop.xlane.xlu0 %2157
      %v2159 = vsel %vm708, %v2138, 0.0
      %2160 = vadd.xlane.f32.xlu0 %v2159
      %v2161 = vpop.xlane.xlu0 %2160
      %v2162 = vsel %vm708, %v2139, 0.0
      %2163 = vadd.xlane.f32.xlu0 %v2162
      %v2164 = vpop.xlane.xlu0 %2163
      %v2165 = vsel %vm708, %v2140, 0.0
      %2166 = vadd.xlane.f32.xlu0 %v2165
      %v2167 = vpop.xlane.xlu0 %2166
      %v2168 = vsel %vm708, %v2141, 0.0
      %2169 = vadd.xlane.f32.xlu0 %v2168
      %v2170 = vpop.xlane.xlu0 %2169
      %v2171 = vsel %vm708, %v2142, 0.0
      %2172 = vadd.xlane.f32.xlu0 %v2171
      %v2173 = vpop.xlane.xlu0 %2172
      %v2174 = vsel %vm708, %v2143, 0.0
      %2175 = vadd.xlane.f32.xlu0 %v2174
      %v2176 = vpop.xlane.xlu0 %2175
      %v2177 = vsel %vm708, %v2144, 0.0
      %2178 = vadd.xlane.f32.xlu0 %v2177
      %v2179 = vpop.xlane.xlu0 %2178
      %v2180 = vsel %vm708, %v2145, 0.0
      %2181 = vadd.xlane.f32.xlu0 %v2180
      %v2182 = vpop.xlane.xlu0 %2181
      %v2183 = vsel %vm708, %v2146, 0.0
      %2184 = vadd.xlane.f32.xlu0 %v2183
      %v2185 = vpop.xlane.xlu0 %2184
      %v2186 = vmul.f32 %v2149, %v1429
      %v2187 = vmul.f32 %v2152, %v1429
      %v2188 = vmul.f32 %v2155, %v1429
      %v2189 = vmul.f32 %v2158, %v1429
      %v2190 = vmul.f32 %v2161, %v1429
      %v2191 = vmul.f32 %v2164, %v1429
      %v2192 = vmul.f32 %v2167, %v1429
      %v2193 = vmul.f32 %v2170, %v1429
      %v2194 = vmul.f32 %v2173, %v1429
      %v2195 = vmul.f32 %v2176, %v1429
      %v2196 = vmul.f32 %v2179, %v1429
      %v2197 = vmul.f32 %v2182, %v1429
      %v2198 = vmul.f32 %v2185, %v1429
      %v2199 = vadd.f32 %v2186, 1e-05
      %v2200 = vadd.f32 %v2187, 1e-05
      %v2201 = vadd.f32 %v2188, 1e-05
      %v2202 = vadd.f32 %v2189, 1e-05
      %v2203 = vadd.f32 %v2190, 1e-05
      %v2204 = vadd.f32 %v2191, 1e-05
      %v2205 = vadd.f32 %v2192, 1e-05
      %v2206 = vadd.f32 %v2193, 1e-05
      %v2207 = vadd.f32 %v2194, 1e-05
      %v2208 = vadd.f32 %v2195, 1e-05
      %v2209 = vadd.f32 %v2196, 1e-05
      %v2210 = vadd.f32 %v2197, 1e-05
      %v2211 = vadd.f32 %v2198, 1e-05
      %v2212 = vrsqrt.pop %v2199
      %v2213 = vrsqrt.pop %v2200
      %v2214 = vrsqrt.pop %v2201
      %v2215 = vrsqrt.pop %v2202
      %v2216 = vrsqrt.pop %v2203
      %v2217 = vrsqrt.pop %v2204
      %v2218 = vrsqrt.pop %v2205
      %v2219 = vrsqrt.pop %v2206
      %v2220 = vrsqrt.pop %v2207
      %v2221 = vrsqrt.pop %v2208
      %v2222 = vrsqrt.pop %v2209
      %v2223 = vrsqrt.pop %v2210
      %v2224 = vrsqrt.pop %v2211
      %v2225 = vmul.f32 %v2121, %v2212
      %v2226 = vmul.f32 %v2122, %v2213
      %v2227 = vmul.f32 %v2123, %v2214
      %v2228 = vmul.f32 %v2124, %v2215
      %v2229 = vmul.f32 %v2125, %v2216
      %v2230 = vmul.f32 %v2126, %v2217
      %v2231 = vmul.f32 %v2127, %v2218
      %v2232 = vmul.f32 %v2128, %v2219
      %v2233 = vmul.f32 %v2129, %v2220
      %v2234 = vmul.f32 %v2130, %v2221
      %v2235 = vmul.f32 %v2131, %v2222
      %v2236 = vmul.f32 %v2132, %v2223
      %v2237 = vmul.f32 %v2133, %v2224
      %v2238 = vlaneseq
      %v2239 = vshrl.u32 %v2238, 7
      %v2240 = vsub.s32 0, %v2239
      %v2241 = vrot.slane %v2067, %v2240
      %v2242 = vmul.f32 %v2225, %v2241
      %v2243 = vmul.f32 %v2226, %v2241
      %v2244 = vmul.f32 %v2227, %v2241
      %v2245 = vmul.f32 %v2228, %v2241
      %v2246 = vmul.f32 %v2229, %v2241
      %v2247 = vmul.f32 %v2230, %v2241
      %v2248 = vmul.f32 %v2231, %v2241
      %v2249 = vmul.f32 %v2232, %v2241
      %v2250 = vmul.f32 %v2233, %v2241
      %v2251 = vmul.f32 %v2234, %v2241
      %v2252 = vmul.f32 %v2235, %v2241
      %v2253 = vmul.f32 %v2236, %v2241
      %v2254 = vmul.f32 %v2237, %v2241
      %v2255 = vlaneseq
      %v2256 = vshrl.u32 %v2255, 7
      %v2257 = vsub.s32 0, %v2256
      %v2258 = vrot.slane %v2068, %v2257
      %v2259 = vadd.f32 %v2242, %v2258
      %v2260 = vadd.f32 %v2243, %v2258
      %v2261 = vadd.f32 %v2244, %v2258
      %v2262 = vadd.f32 %v2245, %v2258
      %v2263 = vadd.f32 %v2246, %v2258
      %v2264 = vadd.f32 %v2247, %v2258
      %v2265 = vadd.f32 %v2248, %v2258
      %v2266 = vadd.f32 %v2249, %v2258
      %v2267 = vadd.f32 %v2250, %v2258
      %v2268 = vadd.f32 %v2251, %v2258
      %v2269 = vadd.f32 %v2252, %v2258
      %v2270 = vadd.f32 %v2253, %v2258
      %v2271 = vadd.f32 %v2254, %v2258
      %v2272 = vld [vmem:[%s15] sm:$0x1]
      %v2273 = vld [vmem:[%s15 + $0x1] sm:$0x1]
      %v2274 = vsel %vm708, %v1167, 0.0
      %2275 = vadd.xlane.f32.xlu0 %v2274
      %v2276 = vpop.xlane.xlu0 %2275
      %v2277 = vsel %vm708, %v1170, 0.0
      %2278 = vadd.xlane.f32.xlu0 %v2277
      %v2279 = vpop.xlane.xlu0 %2278
      %v2280 = vsel %vm708, %v1175, 0.0
      %2281 = vadd.xlane.f32.xlu0 %v2280
      %v2282 = vpop.xlane.xlu0 %2281
      %v2283 = vsel %vm708, %v1178, 0.0
      %2284 = vadd.xlane.f32.xlu0 %v2283
      %v2285 = vpop.xlane.xlu0 %2284
      %v2286 = vsel %vm708, %v1183, 0.0
      %2287 = vadd.xlane.f32.xlu0 %v2286
      %v2288 = vpop.xlane.xlu0 %2287
      %v2289 = vsel %vm708, %v1186, 0.0
      %2290 = vadd.xlane.f32.xlu0 %v2289
      %v2291 = vpop.xlane.xlu0 %2290
      %v2292 = vsel %vm708, %v1191, 0.0
      %2293 = vadd.xlane.f32.xlu0 %v2292
      %v2294 = vpop.xlane.xlu0 %2293
      %v2295 = vsel %vm708, %v1194, 0.0
      %2296 = vadd.xlane.f32.xlu0 %v2295
      %v2297 = vpop.xlane.xlu0 %2296
      %v2298 = vsel %vm708, %v1199, 0.0
      %2299 = vadd.xlane.f32.xlu0 %v2298
      %v2300 = vpop.xlane.xlu0 %2299
      %v2301 = vsel %vm708, %v1202, 0.0
      %2302 = vadd.xlane.f32.xlu0 %v2301
      %v2303 = vpop.xlane.xlu0 %2302
      %v2304 = vsel %vm708, %v1207, 0.0
      %2305 = vadd.xlane.f32.xlu0 %v2304
      %v2306 = vpop.xlane.xlu0 %2305
      %v2307 = vsel %vm708, %v1210, 0.0
      %2308 = vadd.xlane.f32.xlu0 %v2307
      %v2309 = vpop.xlane.xlu0 %2308
      %v2310 = vsel %vm708, %v1215, 0.0
      %2311 = vadd.xlane.f32.xlu0 %v2310
      %v2312 = vpop.xlane.xlu0 %2311
      %v2313 = vmul.f32 %v2276, %v1429
      %v2314 = vmul.f32 %v2279, %v1429
      %v2315 = vmul.f32 %v2282, %v1429
      %v2316 = vmul.f32 %v2285, %v1429
      %v2317 = vmul.f32 %v2288, %v1429
      %v2318 = vmul.f32 %v2291, %v1429
      %v2319 = vmul.f32 %v2294, %v1429
      %v2320 = vmul.f32 %v2297, %v1429
      %v2321 = vmul.f32 %v2300, %v1429
      %v2322 = vmul.f32 %v2303, %v1429
      %v2323 = vmul.f32 %v2306, %v1429
      %v2324 = vmul.f32 %v2309, %v1429
      %v2325 = vmul.f32 %v2312, %v1429
      %v2326 = vsub.f32 %v1167, %v2313
      %v2327 = vsub.f32 %v1170, %v2314
      %v2328 = vsub.f32 %v1175, %v2315
      %v2329 = vsub.f32 %v1178, %v2316
      %v2330 = vsub.f32 %v1183, %v2317
      %v2331 = vsub.f32 %v1186, %v2318
      %v2332 = vsub.f32 %v1191, %v2319
      %v2333 = vsub.f32 %v1194, %v2320
      %v2334 = vsub.f32 %v1199, %v2321
      %v2335 = vsub.f32 %v1202, %v2322
      %v2336 = vsub.f32 %v1207, %v2323
      %v2337 = vsub.f32 %v1210, %v2324
      %v2338 = vsub.f32 %v1215, %v2325
      %v2339 = vmul.f32 %v2326, %v2326
      %v2340 = vmul.f32 %v2327, %v2327
      %v2341 = vmul.f32 %v2328, %v2328
      %v2342 = vmul.f32 %v2329, %v2329
      %v2343 = vmul.f32 %v2330, %v2330
      %v2344 = vmul.f32 %v2331, %v2331
      %v2345 = vmul.f32 %v2332, %v2332
      %v2346 = vmul.f32 %v2333, %v2333
      %v2347 = vmul.f32 %v2334, %v2334
      %v2348 = vmul.f32 %v2335, %v2335
      %v2349 = vmul.f32 %v2336, %v2336
      %v2350 = vmul.f32 %v2337, %v2337
      %v2351 = vmul.f32 %v2338, %v2338
      %v2352 = vsel %vm708, %v2339, 0.0
      %2353 = vadd.xlane.f32.xlu0 %v2352
      %v2354 = vpop.xlane.xlu0 %2353
      %v2355 = vsel %vm708, %v2340, 0.0
      %2356 = vadd.xlane.f32.xlu0 %v2355
      %v2357 = vpop.xlane.xlu0 %2356
      %v2358 = vsel %vm708, %v2341, 0.0
      %2359 = vadd.xlane.f32.xlu0 %v2358
      %v2360 = vpop.xlane.xlu0 %2359
      %v2361 = vsel %vm708, %v2342, 0.0
      %2362 = vadd.xlane.f32.xlu0 %v2361
      %v2363 = vpop.xlane.xlu0 %2362
      %v2364 = vsel %vm708, %v2343, 0.0
      %2365 = vadd.xlane.f32.xlu0 %v2364
      %v2366 = vpop.xlane.xlu0 %2365
      %v2367 = vsel %vm708, %v2344, 0.0
      %2368 = vadd.xlane.f32.xlu0 %v2367
      %v2369 = vpop.xlane.xlu0 %2368
      %v2370 = vsel %vm708, %v2345, 0.0
      %2371 = vadd.xlane.f32.xlu0 %v2370
      %v2372 = vpop.xlane.xlu0 %2371
      %v2373 = vsel %vm708, %v2346, 0.0
      %2374 = vadd.xlane.f32.xlu0 %v2373
      %v2375 = vpop.xlane.xlu0 %2374
      %v2376 = vsel %vm708, %v2347, 0.0
      %2377 = vadd.xlane.f32.xlu0 %v2376
      %v2378 = vpop.xlane.xlu0 %2377
      %v2379 = vsel %vm708, %v2348, 0.0
      %2380 = vadd.xlane.f32.xlu0 %v2379
      %v2381 = vpop.xlane.xlu0 %2380
      %v2382 = vsel %vm708, %v2349, 0.0
      %2383 = vadd.xlane.f32.xlu0 %v2382
      %v2384 = vpop.xlane.xlu0 %2383
      %v2385 = vsel %vm708, %v2350, 0.0
      %2386 = vadd.xlane.f32.xlu0 %v2385
      %v2387 = vpop.xlane.xlu0 %2386
      %v2388 = vsel %vm708, %v2351, 0.0
      %2389 = vadd.xlane.f32.xlu0 %v2388
      %v2390 = vpop.xlane.xlu0 %2389
      %v2391 = vmul.f32 %v2354, %v1429
      %v2392 = vmul.f32 %v2357, %v1429
      %v2393 = vmul.f32 %v2360, %v1429
      %v2394 = vmul.f32 %v2363, %v1429
      %v2395 = vmul.f32 %v2366, %v1429
      %v2396 = vmul.f32 %v2369, %v1429
      %v2397 = vmul.f32 %v2372, %v1429
      %v2398 = vmul.f32 %v2375, %v1429
      %v2399 = vmul.f32 %v2378, %v1429
      %v2400 = vmul.f32 %v2381, %v1429
      %v2401 = vmul.f32 %v2384, %v1429
      %v2402 = vmul.f32 %v2387, %v1429
      %v2403 = vmul.f32 %v2390, %v1429
      %v2404 = vadd.f32 %v2391, 1e-05
      %v2405 = vadd.f32 %v2392, 1e-05
      %v2406 = vadd.f32 %v2393, 1e-05
      %v2407 = vadd.f32 %v2394, 1e-05
      %v2408 = vadd.f32 %v2395, 1e-05
      %v2409 = vadd.f32 %v2396, 1e-05
      %v2410 = vadd.f32 %v2397, 1e-05
      %v2411 = vadd.f32 %v2398, 1e-05
      %v2412 = vadd.f32 %v2399, 1e-05
      %v2413 = vadd.f32 %v2400, 1e-05
      %v2414 = vadd.f32 %v2401, 1e-05
      %v2415 = vadd.f32 %v2402, 1e-05
      %v2416 = vadd.f32 %v2403, 1e-05
      %v2417 = vrsqrt.pop %v2404
      %v2418 = vrsqrt.pop %v2405
      %v2419 = vrsqrt.pop %v2406
      %v2420 = vrsqrt.pop %v2407
      %v2421 = vrsqrt.pop %v2408
      %v2422 = vrsqrt.pop %v2409
      %v2423 = vrsqrt.pop %v2410
      %v2424 = vrsqrt.pop %v2411
      %v2425 = vrsqrt.pop %v2412
      %v2426 = vrsqrt.pop %v2413
      %v2427 = vrsqrt.pop %v2414
      %v2428 = vrsqrt.pop %v2415
      %v2429 = vrsqrt.pop %v2416
      %v2430 = vmul.f32 %v2326, %v2417
      %v2431 = vmul.f32 %v2327, %v2418
      %v2432 = vmul.f32 %v2328, %v2419
      %v2433 = vmul.f32 %v2329, %v2420
      %v2434 = vmul.f32 %v2330, %v2421
      %v2435 = vmul.f32 %v2331, %v2422
      %v2436 = vmul.f32 %v2332, %v2423
      %v2437 = vmul.f32 %v2333, %v2424
      %v2438 = vmul.f32 %v2334, %v2425
      %v2439 = vmul.f32 %v2335, %v2426
      %v2440 = vmul.f32 %v2336, %v2427
      %v2441 = vmul.f32 %v2337, %v2428
      %v2442 = vmul.f32 %v2338, %v2429
      %v2443 = vlaneseq
      %v2444 = vshrl.u32 %v2443, 7
      %v2445 = vsub.s32 0, %v2444
      %v2446 = vrot.slane %v2272, %v2445
      %v2447 = vmul.f32 %v2430, %v2446
      %v2448 = vmul.f32 %v2431, %v2446
      %v2449 = vmul.f32 %v2432, %v2446
      %v2450 = vmul.f32 %v2433, %v2446
      %v2451 = vmul.f32 %v2434, %v2446
      %v2452 = vmul.f32 %v2435, %v2446
      %v2453 = vmul.f32 %v2436, %v2446
      %v2454 = vmul.f32 %v2437, %v2446
      %v2455 = vmul.f32 %v2438, %v2446
      %v2456 = vmul.f32 %v2439, %v2446
      %v2457 = vmul.f32 %v2440, %v2446
      %v2458 = vmul.f32 %v2441, %v2446
      %v2459 = vmul.f32 %v2442, %v2446
      %v2460 = vlaneseq
      %v2461 = vshrl.u32 %v2460, 7
      %v2462 = vsub.s32 0, %v2461
      %v2463 = vrot.slane %v2273, %v2462
      %v2464 = vadd.f32 %v2447, %v2463
      %v2465 = vadd.f32 %v2448, %v2463
      %v2466 = vadd.f32 %v2449, %v2463
      %v2467 = vadd.f32 %v2450, %v2463
      %v2468 = vadd.f32 %v2451, %v2463
      %v2469 = vadd.f32 %v2452, %v2463
      %v2470 = vadd.f32 %v2453, %v2463
      %v2471 = vadd.f32 %v2454, %v2463
      %v2472 = vadd.f32 %v2455, %v2463
      %v2473 = vadd.f32 %v2456, %v2463
      %v2474 = vadd.f32 %v2457, %v2463
      %v2475 = vadd.f32 %v2458, %v2463
      %v2476 = vadd.f32 %v2459, %v2463
      %2490 = vrot.lane.b32.xlu0 %v2259, 64
      %v2491 = vpop.permute.xlu0 %2490
      %2492 = vrot.lane.b32.xlu0 %v2260, 64
      %v2493 = vpop.permute.xlu0 %2492
      %2494 = vrot.lane.b32.xlu0 %v2261, 64
      %v2495 = vpop.permute.xlu0 %2494
      %2496 = vrot.lane.b32.xlu0 %v2262, 64
      %v2497 = vpop.permute.xlu0 %2496
      %2498 = vrot.lane.b32.xlu0 %v2263, 64
      %v2499 = vpop.permute.xlu0 %2498
      %2500 = vrot.lane.b32.xlu0 %v2264, 64
      %v2501 = vpop.permute.xlu0 %2500
      %2502 = vrot.lane.b32.xlu0 %v2265, 64
      %v2503 = vpop.permute.xlu0 %2502
      %2504 = vrot.lane.b32.xlu0 %v2266, 64
      %v2505 = vpop.permute.xlu0 %2504
      %2506 = vrot.lane.b32.xlu0 %v2267, 64
      %v2507 = vpop.permute.xlu0 %2506
      %2508 = vrot.lane.b32.xlu0 %v2268, 64
      %v2509 = vpop.permute.xlu0 %2508
      %2510 = vrot.lane.b32.xlu0 %v2269, 64
      %v2511 = vpop.permute.xlu0 %2510
      %2512 = vrot.lane.b32.xlu0 %v2270, 64
      %v2513 = vpop.permute.xlu0 %2512
      %2514 = vrot.lane.b32.xlu0 %v2271, 64
      %v2515 = vpop.permute.xlu0 %2514
      %v2529 = vmul.f32 %v2042, %v2491
      %v2530 = vmul.f32 %v2044, %v2493
      %v2531 = vmul.f32 %v2046, %v2495
      %v2532 = vmul.f32 %v2048, %v2497
      %v2533 = vmul.f32 %v2050, %v2499
      %v2534 = vmul.f32 %v2052, %v2501
      %v2535 = vmul.f32 %v2054, %v2503
      %v2536 = vmul.f32 %v2056, %v2505
      %v2537 = vmul.f32 %v2058, %v2507
      %v2538 = vmul.f32 %v2060, %v2509
      %v2539 = vmul.f32 %v2062, %v2511
      %v2540 = vmul.f32 %v2064, %v2513
      %v2541 = vmul.f32 %v2066, %v2515
      %v2542 = vmul.f32 %v1964, %v2464
      %v2543 = vmul.f32 %v1966, %v2465
      %v2544 = vmul.f32 %v1968, %v2466
      %v2545 = vmul.f32 %v1970, %v2467
      %v2546 = vmul.f32 %v1972, %v2468
      %v2547 = vmul.f32 %v1974, %v2469
      %v2548 = vmul.f32 %v1976, %v2470
      %v2549 = vmul.f32 %v1978, %v2471
      %v2550 = vmul.f32 %v1980, %v2472
      %v2551 = vmul.f32 %v1982, %v2473
      %v2552 = vmul.f32 %v1984, %v2474
      %v2553 = vmul.f32 %v1986, %v2475
      %v2554 = vmul.f32 %v1988, %v2476
      %2568 = vrot.lane.b32.xlu0 %v2542, 64
      %v2569 = vpop.permute.xlu0 %2568
      %2570 = vrot.lane.b32.xlu0 %v2543, 64
      %v2571 = vpop.permute.xlu0 %2570
      %2572 = vrot.lane.b32.xlu0 %v2544, 64
      %v2573 = vpop.permute.xlu0 %2572
      %2574 = vrot.lane.b32.xlu0 %v2545, 64
      %v2575 = vpop.permute.xlu0 %2574
      %2576 = vrot.lane.b32.xlu0 %v2546, 64
      %v2577 = vpop.permute.xlu0 %2576
      %2578 = vrot.lane.b32.xlu0 %v2547, 64
      %v2579 = vpop.permute.xlu0 %2578
      %2580 = vrot.lane.b32.xlu0 %v2548, 64
      %v2581 = vpop.permute.xlu0 %2580
      %2582 = vrot.lane.b32.xlu0 %v2549, 64
      %v2583 = vpop.permute.xlu0 %2582
      %2584 = vrot.lane.b32.xlu0 %v2550, 64
      %v2585 = vpop.permute.xlu0 %2584
      %2586 = vrot.lane.b32.xlu0 %v2551, 64
      %v2587 = vpop.permute.xlu0 %2586
      %2588 = vrot.lane.b32.xlu0 %v2552, 64
      %v2589 = vpop.permute.xlu0 %2588
      %2590 = vrot.lane.b32.xlu0 %v2553, 64
      %v2591 = vpop.permute.xlu0 %2590
      %2592 = vrot.lane.b32.xlu0 %v2554, 64
      %v2593 = vpop.permute.xlu0 %2592
      %v2607 = vadd.f32 %v2529, %v2569
      %v2608 = vadd.f32 %v2530, %v2571
      %v2609 = vadd.f32 %v2531, %v2573
      %v2610 = vadd.f32 %v2532, %v2575
      %v2611 = vadd.f32 %v2533, %v2577
      %v2612 = vadd.f32 %v2534, %v2579
      %v2613 = vadd.f32 %v2535, %v2581
      %v2614 = vadd.f32 %v2536, %v2583
      %v2615 = vadd.f32 %v2537, %v2585
      %v2616 = vadd.f32 %v2538, %v2587
      %v2617 = vadd.f32 %v2539, %v2589
      %v2618 = vadd.f32 %v2540, %v2591
      %v2619 = vadd.f32 %v2541, %v2593
      %v2620 = vpack.c.bf16 %v2608, %v2607
      %v2621 = vpack.c.bf16 %v2610, %v2609
      %v2622 = vpack.c.bf16 %v2612, %v2611
      %v2623 = vpack.c.bf16 %v2614, %v2613
      %v2624 = vpack.c.bf16 %v2616, %v2615
      %v2625 = vpack.c.bf16 %v2618, %v2617
      %v2626 = vpack.c.bf16 %v2619, %v2619
      %v2627 = vld [vmem:[%s16] sm:$0xf]
      %v2628 = vld [vmem:[%s16 + $0x4] sm:$0xf]
      %v2629 = vld [vmem:[%s16 + $0x8] sm:$0xf]
      %v2630 = vld [vmem:[%s16 + $0xc] sm:$0xf]
      %v2631 = vld [vmem:[%s16 + $0x10] sm:$0xf]
      %v2632 = vld [vmem:[%s16 + $0x14] sm:$0xf]
      %v2633 = vld [vmem:[%s16 + $0x18] sm:$0xf]
      %v2634 = vld [vmem:[%s16 + $0x1c] sm:$0xf]
      %v2635 = vld [vmem:[%s17] sm:$0x1]
      %v2637 = vlaneseq
      %v2638 = vshrl.u32 %v2637, 7
      %v2639 = vsub.s32 0, %v2638
      %v2640 = vrot.slane %v2635, %v2639
      %2649 = vrot.lane.b32.xlu0 %v2620, 64
      %v2650 = vpop.permute.xlu0 %2649
      %2651 = vrot.lane.b32.xlu0 %v2621, 64
      %v2652 = vpop.permute.xlu0 %2651
      %2653 = vrot.lane.b32.xlu0 %v2622, 64
      %v2654 = vpop.permute.xlu0 %2653
      %2655 = vrot.lane.b32.xlu0 %v2623, 64
      %v2656 = vpop.permute.xlu0 %2655
      %2657 = vrot.lane.b32.xlu0 %v2624, 64
      %v2658 = vpop.permute.xlu0 %2657
      %2659 = vrot.lane.b32.xlu0 %v2625, 64
      %v2660 = vpop.permute.xlu0 %2659
      %2661 = vrot.lane.b32.xlu0 %v2626, 64
      %v2662 = vpop.permute.xlu0 %2661
      %v2671 = vunpack.c.l.b16 %v2627
      %v2672 = vunpack.c.l.b16 %v2628
      %v2673 = vunpack.c.l.b16 %v2629
      %v2674 = vunpack.c.l.b16 %v2630
      %v2675 = vunpack.c.l.b16 %v2631
      %v2676 = vunpack.c.l.b16 %v2632
      %v2677 = vunpack.c.l.b16 %v2633
      %v2678 = vunpack.c.l.b16 %v2634
      %v2679 = vpack.c.b16 %v2672, %v2671
      %v2680 = vpack.c.b16 %v2674, %v2673
      %v2681 = vpack.c.b16 %v2676, %v2675
      %v2682 = vpack.c.b16 %v2678, %v2677
      %v2688 = vsel %vm708, %v2650, 0
      %v2691 = vsel %vm708, %v2652, 0
      %v2694 = vsel %vm708, %v2654, 0
      %v2697 = vsel %vm708, %v2656, 0
      %v2700 = vsel %vm708, %v2658, 0
      %v2703 = vsel %vm708, %v2660, 0
      %v2706 = vsel %vm708, %v2662, 0
      %2708 = vmatprep.subr.bf16.mxu0 0
      %2709 = vmatpush1.bf16.msra.mxu0 0
      %2710 = vmatprep.subr.bf16.mxu0 0
      %2711 = vmatpush1.bf16.msra.mxu0 0
      %2712 = vmatprep.subr.bf16.mxu0 0
      %2713 = vmatpush1.bf16.msra.mxu0 0
      %2714 = vmatprep.subr.bf16.mxu0 0
      %2715 = vmatpush1.bf16.msra.mxu0 0
      %2716 = vmatprep.subr.bf16.mxu0 0
      %2717 = vmatpush1.bf16.msra.mxu0 %v2682
      %2718 = vmatprep.subr.bf16.mxu0 0
      %2719 = vmatpush1.bf16.msra.mxu0 %v2681
      %2720 = vmatprep.subr.bf16.mxu0 0
      %2721 = vmatpush1.bf16.msra.mxu0 %v2680
      %2722 = vmatprep.subr.bf16.mxu0 0
      %2723 = vmatpush1.bf16.msra.mxu0 %v2679
      %2724 = vmatprep.subr.bf16.mxu0 0
      %2725 = vmatpush2.bf16.msra.mxu0 0
      %2726 = vmatprep.subr.bf16.mxu0 0
      %2727 = vmatpush2.bf16.msra.mxu0 0
      %2728 = vmatprep.subr.bf16.mxu0 0
      %2729 = vmatpush2.bf16.msra.mxu0 0
      %2730 = vmatprep.subr.bf16.mxu0 0
      %2731 = vmatpush2.bf16.msra.mxu0 0
      %2732 = vmatprep.subr.bf16.mxu0 0
      %2733 = vmatpush2.bf16.msra.mxu0 0
      %2734 = vmatprep.subr.bf16.mxu0 0
      %2735 = vmatpush2.bf16.msra.mxu0 0
      %2736 = vmatprep.subr.bf16.mxu0 0
      %2737 = vmatpush2.bf16.msra.mxu0 0
      %2738 = vmatprep.subr.bf16.mxu0 0
      %2739 = vmatpush2.bf16.msra.mxu0 0
      %2740 = vmatprep.mubr.bf16.mxu0 0
      %2741 = vmatmul.mubr.bf16.gmra.mxu0 %v2688
      %v2742 = vpop.f32.mrf.mxu0
      %v2743 = vadd.f32 %v2640, %v2742
      %v2744 = vpop.f32.mrf.mxu0
      %v2745 = vpop.f32.mrf.mxu0
      %v2746 = vadd.f32 %v2640, %v2745
      %v2747 = vpop.f32.mrf.mxu0
      %2748 = vmatprep.mubr.bf16.mxu0 0
      %2749 = vmatmul.mubr.bf16.gmra.mxu0 %v2691
      %v2750 = vpop.f32.mrf.mxu0
      %v2751 = vadd.f32 %v2640, %v2750
      %v2752 = vpop.f32.mrf.mxu0
      %v2753 = vpop.f32.mrf.mxu0
      %v2754 = vadd.f32 %v2640, %v2753
      %v2755 = vpop.f32.mrf.mxu0
      %2756 = vmatprep.mubr.bf16.mxu0 0
      %2757 = vmatmul.mubr.bf16.gmra.mxu0 %v2694
      %v2758 = vpop.f32.mrf.mxu0
      %v2759 = vadd.f32 %v2640, %v2758
      %v2760 = vpop.f32.mrf.mxu0
      %v2761 = vpop.f32.mrf.mxu0
      %v2762 = vadd.f32 %v2640, %v2761
      %v2763 = vpop.f32.mrf.mxu0
      %2764 = vmatprep.mubr.bf16.mxu0 0
      %2765 = vmatmul.mubr.bf16.gmra.mxu0 %v2697
      %v2766 = vpop.f32.mrf.mxu0
      %v2767 = vadd.f32 %v2640, %v2766
      %v2768 = vpop.f32.mrf.mxu0
      %v2769 = vpop.f32.mrf.mxu0
      %v2770 = vadd.f32 %v2640, %v2769
      %v2771 = vpop.f32.mrf.mxu0
      %2772 = vmatprep.mubr.bf16.mxu0 0
      %2773 = vmatmul.mubr.bf16.gmra.mxu0 %v2700
      %v2774 = vpop.f32.mrf.mxu0
      %v2775 = vadd.f32 %v2640, %v2774
      %v2776 = vpop.f32.mrf.mxu0
      %v2777 = vpop.f32.mrf.mxu0
      %v2778 = vadd.f32 %v2640, %v2777
      %v2779 = vpop.f32.mrf.mxu0
      %2780 = vmatprep.mubr.bf16.mxu0 0
      %2781 = vmatmul.mubr.bf16.gmra.mxu0 %v2703
      %v2782 = vpop.f32.mrf.mxu0
      %v2783 = vadd.f32 %v2640, %v2782
      %v2784 = vpop.f32.mrf.mxu0
      %v2785 = vpop.f32.mrf.mxu0
      %v2786 = vadd.f32 %v2640, %v2785
      %v2787 = vpop.f32.mrf.mxu0
      %2788 = vmatprep.mubr.bf16.mxu0 0
      %2789 = vmatmul.mubr.bf16.gmra.mxu0 %v2706
      %v2790 = vpop.f32.mrf.mxu0
      %v2791 = vadd.f32 %v2640, %v2790
      %v2792 = vpop.f32.mrf.mxu0
      %v2793 = vpop.f32.mrf.mxu0
      %v2794 = vpop.f32.mrf.mxu0
      %2795 = vdwg.mxu0
      %v2796 = vld [vmem:[%s18] sm:$0x1]
      %v2797 = vld [vmem:[%s18 + $0x1] sm:$0x1]
      %v2798 = vsel %vm708, %v2743, 0.0
      %2799 = vadd.xlane.f32.xlu0 %v2798
      %v2800 = vpop.xlane.xlu0 %2799
      %v2801 = vsel %vm708, %v2746, 0.0
      %2802 = vadd.xlane.f32.xlu0 %v2801
      %v2803 = vpop.xlane.xlu0 %2802
      %v2804 = vsel %vm708, %v2751, 0.0
      %2805 = vadd.xlane.f32.xlu0 %v2804
      %v2806 = vpop.xlane.xlu0 %2805
      %v2807 = vsel %vm708, %v2754, 0.0
      %2808 = vadd.xlane.f32.xlu0 %v2807
      %v2809 = vpop.xlane.xlu0 %2808
      %v2810 = vsel %vm708, %v2759, 0.0
      %2811 = vadd.xlane.f32.xlu0 %v2810
      %v2812 = vpop.xlane.xlu0 %2811
      %v2813 = vsel %vm708, %v2762, 0.0
      %2814 = vadd.xlane.f32.xlu0 %v2813
      %v2815 = vpop.xlane.xlu0 %2814
      %v2816 = vsel %vm708, %v2767, 0.0
      %2817 = vadd.xlane.f32.xlu0 %v2816
      %v2818 = vpop.xlane.xlu0 %2817
      %v2819 = vsel %vm708, %v2770, 0.0
      %2820 = vadd.xlane.f32.xlu0 %v2819
      %v2821 = vpop.xlane.xlu0 %2820
      %v2822 = vsel %vm708, %v2775, 0.0
      %2823 = vadd.xlane.f32.xlu0 %v2822
      %v2824 = vpop.xlane.xlu0 %2823
      %v2825 = vsel %vm708, %v2778, 0.0
      %2826 = vadd.xlane.f32.xlu0 %v2825
      %v2827 = vpop.xlane.xlu0 %2826
      %v2828 = vsel %vm708, %v2783, 0.0
      %2829 = vadd.xlane.f32.xlu0 %v2828
      %v2830 = vpop.xlane.xlu0 %2829
      %v2831 = vsel %vm708, %v2786, 0.0
      %2832 = vadd.xlane.f32.xlu0 %v2831
      %v2833 = vpop.xlane.xlu0 %2832
      %v2834 = vsel %vm708, %v2791, 0.0
      %2835 = vadd.xlane.f32.xlu0 %v2834
      %v2836 = vpop.xlane.xlu0 %2835
      %v2837 = vmul.f32 %v2800, %v1429
      %v2838 = vmul.f32 %v2803, %v1429
      %v2839 = vmul.f32 %v2806, %v1429
      %v2840 = vmul.f32 %v2809, %v1429
      %v2841 = vmul.f32 %v2812, %v1429
      %v2842 = vmul.f32 %v2815, %v1429
      %v2843 = vmul.f32 %v2818, %v1429
      %v2844 = vmul.f32 %v2821, %v1429
      %v2845 = vmul.f32 %v2824, %v1429
      %v2846 = vmul.f32 %v2827, %v1429
      %v2847 = vmul.f32 %v2830, %v1429
      %v2848 = vmul.f32 %v2833, %v1429
      %v2849 = vmul.f32 %v2836, %v1429
      %v2850 = vsub.f32 %v2743, %v2837
      %v2851 = vsub.f32 %v2746, %v2838
      %v2852 = vsub.f32 %v2751, %v2839
      %v2853 = vsub.f32 %v2754, %v2840
      %v2854 = vsub.f32 %v2759, %v2841
      %v2855 = vsub.f32 %v2762, %v2842
      %v2856 = vsub.f32 %v2767, %v2843
      %v2857 = vsub.f32 %v2770, %v2844
      %v2858 = vsub.f32 %v2775, %v2845
      %v2859 = vsub.f32 %v2778, %v2846
      %v2860 = vsub.f32 %v2783, %v2847
      %v2861 = vsub.f32 %v2786, %v2848
      %v2862 = vsub.f32 %v2791, %v2849
      %v2863 = vmul.f32 %v2850, %v2850
      %v2864 = vmul.f32 %v2851, %v2851
      %v2865 = vmul.f32 %v2852, %v2852
      %v2866 = vmul.f32 %v2853, %v2853
      %v2867 = vmul.f32 %v2854, %v2854
      %v2868 = vmul.f32 %v2855, %v2855
      %v2869 = vmul.f32 %v2856, %v2856
      %v2870 = vmul.f32 %v2857, %v2857
      %v2871 = vmul.f32 %v2858, %v2858
      %v2872 = vmul.f32 %v2859, %v2859
      %v2873 = vmul.f32 %v2860, %v2860
      %v2874 = vmul.f32 %v2861, %v2861
      %v2875 = vmul.f32 %v2862, %v2862
      %v2876 = vsel %vm708, %v2863, 0.0
      %2877 = vadd.xlane.f32.xlu0 %v2876
      %v2878 = vpop.xlane.xlu0 %2877
      %v2879 = vsel %vm708, %v2864, 0.0
      %2880 = vadd.xlane.f32.xlu0 %v2879
      %v2881 = vpop.xlane.xlu0 %2880
      %v2882 = vsel %vm708, %v2865, 0.0
      %2883 = vadd.xlane.f32.xlu0 %v2882
      %v2884 = vpop.xlane.xlu0 %2883
      %v2885 = vsel %vm708, %v2866, 0.0
      %2886 = vadd.xlane.f32.xlu0 %v2885
      %v2887 = vpop.xlane.xlu0 %2886
      %v2888 = vsel %vm708, %v2867, 0.0
      %2889 = vadd.xlane.f32.xlu0 %v2888
      %v2890 = vpop.xlane.xlu0 %2889
      %v2891 = vsel %vm708, %v2868, 0.0
      %2892 = vadd.xlane.f32.xlu0 %v2891
      %v2893 = vpop.xlane.xlu0 %2892
      %v2894 = vsel %vm708, %v2869, 0.0
      %2895 = vadd.xlane.f32.xlu0 %v2894
      %v2896 = vpop.xlane.xlu0 %2895
      %v2897 = vsel %vm708, %v2870, 0.0
      %2898 = vadd.xlane.f32.xlu0 %v2897
      %v2899 = vpop.xlane.xlu0 %2898
      %v2900 = vsel %vm708, %v2871, 0.0
      %2901 = vadd.xlane.f32.xlu0 %v2900
      %v2902 = vpop.xlane.xlu0 %2901
      %v2903 = vsel %vm708, %v2872, 0.0
      %2904 = vadd.xlane.f32.xlu0 %v2903
      %v2905 = vpop.xlane.xlu0 %2904
      %v2906 = vsel %vm708, %v2873, 0.0
      %2907 = vadd.xlane.f32.xlu0 %v2906
      %v2908 = vpop.xlane.xlu0 %2907
      %v2909 = vsel %vm708, %v2874, 0.0
      %2910 = vadd.xlane.f32.xlu0 %v2909
      %v2911 = vpop.xlane.xlu0 %2910
      %v2912 = vsel %vm708, %v2875, 0.0
      %2913 = vadd.xlane.f32.xlu0 %v2912
      %v2914 = vpop.xlane.xlu0 %2913
      %v2915 = vmul.f32 %v2878, %v1429
      %v2916 = vmul.f32 %v2881, %v1429
      %v2917 = vmul.f32 %v2884, %v1429
      %v2918 = vmul.f32 %v2887, %v1429
      %v2919 = vmul.f32 %v2890, %v1429
      %v2920 = vmul.f32 %v2893, %v1429
      %v2921 = vmul.f32 %v2896, %v1429
      %v2922 = vmul.f32 %v2899, %v1429
      %v2923 = vmul.f32 %v2902, %v1429
      %v2924 = vmul.f32 %v2905, %v1429
      %v2925 = vmul.f32 %v2908, %v1429
      %v2926 = vmul.f32 %v2911, %v1429
      %v2927 = vmul.f32 %v2914, %v1429
      %v2928 = vadd.f32 %v2915, 1e-05
      %v2929 = vadd.f32 %v2916, 1e-05
      %v2930 = vadd.f32 %v2917, 1e-05
      %v2931 = vadd.f32 %v2918, 1e-05
      %v2932 = vadd.f32 %v2919, 1e-05
      %v2933 = vadd.f32 %v2920, 1e-05
      %v2934 = vadd.f32 %v2921, 1e-05
      %v2935 = vadd.f32 %v2922, 1e-05
      %v2936 = vadd.f32 %v2923, 1e-05
      %v2937 = vadd.f32 %v2924, 1e-05
      %v2938 = vadd.f32 %v2925, 1e-05
      %v2939 = vadd.f32 %v2926, 1e-05
      %v2940 = vadd.f32 %v2927, 1e-05
      %v2941 = vrsqrt.pop %v2928
      %v2942 = vrsqrt.pop %v2929
      %v2943 = vrsqrt.pop %v2930
      %v2944 = vrsqrt.pop %v2931
      %v2945 = vrsqrt.pop %v2932
      %v2946 = vrsqrt.pop %v2933
      %v2947 = vrsqrt.pop %v2934
      %v2948 = vrsqrt.pop %v2935
      %v2949 = vrsqrt.pop %v2936
      %v2950 = vrsqrt.pop %v2937
      %v2951 = vrsqrt.pop %v2938
      %v2952 = vrsqrt.pop %v2939
      %v2953 = vrsqrt.pop %v2940
      %v2954 = vmul.f32 %v2850, %v2941
      %v2955 = vmul.f32 %v2851, %v2942
      %v2956 = vmul.f32 %v2852, %v2943
      %v2957 = vmul.f32 %v2853, %v2944
      %v2958 = vmul.f32 %v2854, %v2945
      %v2959 = vmul.f32 %v2855, %v2946
      %v2960 = vmul.f32 %v2856, %v2947
      %v2961 = vmul.f32 %v2857, %v2948
      %v2962 = vmul.f32 %v2858, %v2949
      %v2963 = vmul.f32 %v2859, %v2950
      %v2964 = vmul.f32 %v2860, %v2951
      %v2965 = vmul.f32 %v2861, %v2952
      %v2966 = vmul.f32 %v2862, %v2953
      %v2967 = vlaneseq
      %v2968 = vshrl.u32 %v2967, 7
      %v2969 = vsub.s32 0, %v2968
      %v2970 = vrot.slane %v2796, %v2969
      %v2971 = vmul.f32 %v2954, %v2970
      %v2972 = vmul.f32 %v2955, %v2970
      %v2973 = vmul.f32 %v2956, %v2970
      %v2974 = vmul.f32 %v2957, %v2970
      %v2975 = vmul.f32 %v2958, %v2970
      %v2976 = vmul.f32 %v2959, %v2970
      %v2977 = vmul.f32 %v2960, %v2970
      %v2978 = vmul.f32 %v2961, %v2970
      %v2979 = vmul.f32 %v2962, %v2970
      %v2980 = vmul.f32 %v2963, %v2970
      %v2981 = vmul.f32 %v2964, %v2970
      %v2982 = vmul.f32 %v2965, %v2970
      %v2983 = vmul.f32 %v2966, %v2970
      %v2984 = vlaneseq
      %v2985 = vshrl.u32 %v2984, 7
      %v2986 = vsub.s32 0, %v2985
      %v2987 = vrot.slane %v2797, %v2986
      %v2988 = vadd.f32 %v2971, %v2987
      %v2989 = vadd.f32 %v2972, %v2987
      %v2990 = vadd.f32 %v2973, %v2987
      %v2991 = vadd.f32 %v2974, %v2987
      %v2992 = vadd.f32 %v2975, %v2987
      %v2993 = vadd.f32 %v2976, %v2987
      %v2994 = vadd.f32 %v2977, %v2987
      %v2995 = vadd.f32 %v2978, %v2987
      %v2996 = vadd.f32 %v2979, %v2987
      %v2997 = vadd.f32 %v2980, %v2987
      %v2998 = vadd.f32 %v2981, %v2987
      %v2999 = vadd.f32 %v2982, %v2987
      %v3000 = vadd.f32 %v2983, %v2987
      %v3001 = vmax.f32 %v2988, 0.0
      %v3002 = vmax.f32 %v2989, 0.0
      %v3003 = vmax.f32 %v2990, 0.0
      %v3004 = vmax.f32 %v2991, 0.0
      %v3005 = vmax.f32 %v2992, 0.0
      %v3006 = vmax.f32 %v2993, 0.0
      %v3007 = vmax.f32 %v2994, 0.0
      %v3008 = vmax.f32 %v2995, 0.0
      %v3009 = vmax.f32 %v2996, 0.0
      %v3010 = vmax.f32 %v2997, 0.0
      %v3011 = vmax.f32 %v2998, 0.0
      %v3012 = vmax.f32 %v2999, 0.0
      %v3013 = vmax.f32 %v3000, 0.0
      %3014 = vst.msk [vmem:[%s626] sm:$0xff] %vm708, %v3001
      %3015 = vst.msk [vmem:[%s626 + $0x8] sm:$0xff] %vm708, %v3002
      %3016 = vst.msk [vmem:[%s626 + $0x10] sm:$0xff] %vm708, %v3003
      %3017 = vst.msk [vmem:[%s626 + $0x18] sm:$0xff] %vm708, %v3004
      %3018 = vst.msk [vmem:[%s626 + $0x20] sm:$0xff] %vm708, %v3005
      %3019 = vst.msk [vmem:[%s626 + $0x28] sm:$0xff] %vm708, %v3006
      %3020 = vst.msk [vmem:[%s626 + $0x30] sm:$0xff] %vm708, %v3007
      %3021 = vst.msk [vmem:[%s626 + $0x38] sm:$0xff] %vm708, %v3008
      %3022 = vst.msk [vmem:[%s626 + $0x40] sm:$0xff] %vm708, %v3009
      %3023 = vst.msk [vmem:[%s626 + $0x48] sm:$0xff] %vm708, %v3010
      %3024 = vst.msk [vmem:[%s626 + $0x50] sm:$0xff] %vm708, %v3011
      %3025 = vst.msk [vmem:[%s626 + $0x58] sm:$0xff] %vm708, %v3012
      %3026 = vst.msk [vmem:[%s626 + $0x60] sm:$0xff] %vm708, %v3013
      %s3027 = smul.u32 13, %s30
      %p3028 = scmp.lt.s32.totalorder %s3027, 25
      %s3029 = scalar_select %p3028, %s3027, 25
      %s3030 = smul.addr %s3029, 8
      %s3031 = scalar_lea.vmem %s19, %s3030
      // Predicated region
      $region97: #{tpu_custom_call.1} parent=95 // pred_check
        %p3032 = pneg %p457
      $region98: #{tpu_custom_call.1} parent=95 // pred_check_branch
        %3034 = sbr.rel (%p3032) target = $region100
      $region99: #{tpu_custom_call.1} parent=95 // pred_region
        %s3035 = smul.u32 13, %s30
      $region100: #{tpu_custom_call.1} parent=95 // pred_fallthru
        _
    $region96: #{tpu_custom_call.1} parent=5 // pred_fallthru
      _
    %p3036 = scmp.le.s32.totalorder 2, %s25
    // Predicated region
    $region101: #{tpu_custom_call.1} parent=5 // pred_check
      %p3037 = pneg %p3036
    $region102: #{tpu_custom_call.1} parent=5 // pred_check_branch
      %3039 = sbr.rel (%p3037) target = $region104
    $region103: #{tpu_custom_call.1} parent=5 // pred_region
      %s3040 = ssub.s32 %s25, 2
      // Predicated region
      $region105: #{tpu_custom_call.1} parent=103 // pred_check
        %p3041 = pneg %p463
      $region106: #{tpu_custom_call.1} parent=103 // pred_check_branch
        %3043 = sbr.rel (%p3041) target = $region108
      $region107: #{tpu_custom_call.1} parent=103 // pred_region
        %s3044 = smul.u32 13, %s31
        %p3045 = scmp.lt.s32.totalorder %s3044, 25
        %s3046 = scalar_select %p3045, %s3044, 25
        %s3047 = smul.addr %s3046, 8
        %s3048 = scalar_lea.vmem %s19, %s3047
      $region108: #{tpu_custom_call.1} parent=103 // pred_fallthru
        _
    $region104: #{tpu_custom_call.1} parent=5 // pred_fallthru
      _
  $region6: #{tpu_custom_call.1} parent=0 // loop_footer
    %s29 = sadd.s32 1, %s25
  $region7: #{tpu_custom_call.1} parent=0 // loop_footer_branch
    %24 = sbr.rel target = $region3
  $region8: #{tpu_custom_call.1} parent=0 // loop_exit
    _

</llo_original>
